<compile_context>
chip_gen: v6e
topology: v6e:2x2x1
jax: 0.10.0
libtpu: 0.0.40
codegen_flags: <defaults>
</compile_context>

<pallas_src>
import jax
import jax.numpy as jnp
from jax.experimental import pallas as pl
from jax.experimental.pallas import tpu as pltpu


def _round_up(x, m):
    return (x + m - 1) // m * m


# -----------------------------------------------------------------------------
# Pallas kernels
# -----------------------------------------------------------------------------
def conv_relu_pool_kernel(p_ref, w_ref, b_ref, o_ref):
    """Fused conv (im2col matmul) + 2x2 max-pool + bias + ReLU.

    p_ref : (4, TILE_R, K)  bf16 -- 4 = elements of every 2x2 pool window
    w_ref : (K, 128)        bf16 -- Cout zero-padded to 128 lanes
    b_ref : (1, 128)        f32
    o_ref : (TILE_R, 128)   bf16 -- pooled output rows (lane-dense store)
    """
    tr = p_ref.shape[1]
    k = p_ref.shape[2]

    # Single MXU call for all four pool-window element sets.
    # TILE_R is a multiple of 64, so this reshape is a pure tile relabel.
    p = p_ref[...].reshape(4 * tr, k)
    z = jnp.dot(p, w_ref[...], preferred_element_type=jnp.float32)  # (4*tr, 128)

    # 2x2 max-pool = elementwise max over the four row groups (tile-aligned slices).
    m = jnp.maximum(jnp.maximum(z[0:tr], z[tr:2 * tr]),
                    jnp.maximum(z[2 * tr:3 * tr], z[3 * tr:4 * tr]))

    # Hoisted bias + ReLU: relu(max_i z_i + b) == max_i relu(z_i + b).
    o_ref[...] = jnp.maximum(m + b_ref[...], 0.0).astype(o_ref.dtype)


def mlp_kernel(x_ref, w1_ref, b1_ref, w2_ref, b2_ref, o_ref):
    """linear1 -> ReLU -> (dropout, identity at eval) -> linear2.

    x_ref : (TILE_N, 120) bf16; w1: (120, 64) bf16; b1: (1, 64) f32
    w2    : (64, 128) bf16 (out_dim zero-padded); b2: (1, 128) f32
    o_ref : (TILE_N, 128) f32
    """
    h = jnp.dot(x_ref[...], w1_ref[...], preferred_element_type=jnp.float32)
    h = jnp.maximum(h + b1_ref[...], 0.0)
    # TODO(synk): nn.Dropout(0.1) is identity in eval mode; no RNG mask applied here.
    out = jnp.dot(h.astype(w2_ref.dtype), w2_ref[...],
                  preferred_element_type=jnp.float32)
    o_ref[...] = (out + b2_ref[...]).astype(o_ref.dtype)


# -----------------------------------------------------------------------------
# Wrappers (glue: im2col, pooling-window packing, padding, reshapes)
# -----------------------------------------------------------------------------
def conv_relu_pool(x, w, b):
    """x: (N, H, W, Cin); w: (KH, KW, Cin, Cout); b: (Cout,) -> (N, Hp, Wp, Cout) bf16

    Matches: F.max_pool2d(F.relu(conv2d(x, w, b, stride=1, padding=0)), 2)
    """
    N, H, W, Cin = x.shape
    KH, KW, _, Cout = w.shape
    Ho, Wo = H - KH + 1, W - KW + 1
    Hp, Wp = Ho // 2, Wo // 2          # floor mode, like F.max_pool2d default
    K = KH * KW * Cin

    x = x.astype(jnp.bfloat16)
    # im2col: patch feature order is (kh, kw, cin) to match w.reshape(K, Cout).
    cols = [x[:, kh:kh + Ho, kw:kw + Wo, :] for kh in range(KH) for kw in range(KW)]
    patches = jnp.concatenate(cols, axis=-1)                 # (N, Ho, Wo, K)
    patches = patches[:, : Hp * 2, : Wp * 2, :]              # crop odd edge
    patches = patches.reshape(N, Hp, 2, Wp, 2, K)
    patches = patches.transpose(2, 4, 0, 1, 3, 5)            # (2, 2, N, Hp, Wp, K)
    R = N * Hp * Wp
    patches = patches.reshape(4, R, K)

    # Row tiling: multiple of 64 (safe for bf16 sublane packing), <= 512 for
    # v7x's smaller VMEM; grid axis is marked "parallel" for megacore sharding.
    TILE_R = min(512, _round_up(R, 64))
    Rp = _round_up(R, TILE_R)
    if Rp != R:
        patches = jnp.pad(patches, ((0, 0), (0, Rp - R), (0, 0)))

    # Lane-dense weights/bias: pad Cout to 128 so the kernel store is unmasked.
    COUT_P = _round_up(Cout, 128)
    wmat = jnp.zeros((K, COUT_P), jnp.bfloat16)
    wmat = wmat.at[:, :Cout].set(w.reshape(K, Cout).astype(jnp.bfloat16))
    bias = jnp.zeros((1, COUT_P), jnp.float32)
    bias = bias.at[:, :Cout].set(b.reshape(1, Cout).astype(jnp.float32))

    grid = (Rp // TILE_R,)
    out = pl.pallas_call(
        conv_relu_pool_kernel,
        out_shape=jax.ShapeDtypeStruct((Rp, COUT_P), jnp.bfloat16),
        grid_spec=pltpu.PrefetchScalarGridSpec(
            num_scalar_prefetch=0,
            grid=grid,
            in_specs=[
                pl.BlockSpec((4, TILE_R, K), lambda i: (0, i, 0)),
                pl.BlockSpec((K, COUT_P), lambda i: (0, 0)),     # resident weights
                pl.BlockSpec((1, COUT_P), lambda i: (0, 0)),
            ],
            out_specs=pl.BlockSpec((TILE_R, COUT_P), lambda i: (i, 0)),
        ),
        compiler_params=pltpu.CompilerParams(
            dimension_semantics=("parallel",)),
    )(patches, wmat, bias)

    return out[:R, :Cout].reshape(N, Hp, Wp, Cout)


def mlp(x, w1, b1, w2, b2):
    """x: (N, 120); w1: (120, 64); w2: (64, out)  ->  (N, out) f32"""
    N, Din = x.shape
    Hd = w1.shape[1]
    out_dim = w2.shape[1]
    OUT_P = _round_up(out_dim, 128)

    x = x.astype(jnp.bfloat16)
    TILE_N = min(512, _round_up(N, 64))
    Np = _round_up(N, TILE_N)
    if Np != N:
        x = jnp.pad(x, ((0, Np - N), (0, 0)))

    w1b = w1.astype(jnp.bfloat16)
    b1r = b1.reshape(1, Hd).astype(jnp.float32)
    w2p = jnp.zeros((Hd, OUT_P), jnp.bfloat16).at[:, :out_dim].set(
        w2.astype(jnp.bfloat16))
    b2p = jnp.zeros((1, OUT_P), jnp.float32).at[:, :out_dim].set(
        b2.reshape(1, out_dim).astype(jnp.float32))

    grid = (Np // TILE_N,)
    out = pl.pallas_call(
        mlp_kernel,
        out_shape=jax.ShapeDtypeStruct((Np, OUT_P), jnp.float32),
        grid_spec=pltpu.PrefetchScalarGridSpec(
            num_scalar_prefetch=0,
            grid=grid,
            in_specs=[
                pl.BlockSpec((TILE_N, Din), lambda i: (i, 0)),
                pl.BlockSpec((Din, Hd), lambda i: (0, 0)),
                pl.BlockSpec((1, Hd), lambda i: (0, 0)),
                pl.BlockSpec((Hd, OUT_P), lambda i: (0, 0)),
                pl.BlockSpec((1, OUT_P), lambda i: (0, 0)),
            ],
            out_specs=pl.BlockSpec((TILE_N, OUT_P), lambda i: (i, 0)),
        ),
        compiler_params=pltpu.CompilerParams(
            dimension_semantics=("parallel",)),
    )(x, w1b, b1r, w2p, b2p)

    return out[:N, :out_dim]


def init_params(key, output_size=10):
    ks = jax.random.split(key, 10)
    scale = 0.05
    params = {
        # conv weights stored (KH, KW, Cin, Cout) == PyTorch (Cout, Cin, KH, KW).transpose(2,3,1,0)
        "w1": jax.random.normal(ks[0], (3, 3, 1, 20), jnp.float32) * scale,
        "b1": jax.random.normal(ks[1], (20,), jnp.float32) * scale,
        "w2": jax.random.normal(ks[2], (3, 3, 20, 40), jnp.float32) * scale,
        "b2": jax.random.normal(ks[3], (40,), jnp.float32) * scale,
        "w3": jax.random.normal(ks[4], (3, 3, 40, 30), jnp.float32) * scale,
        "b3": jax.random.normal(ks[5], (30,), jnp.float32) * scale,
        # linear weights stored pre-transposed: (in, out) == PyTorch (out, in).T
        "lw1": jax.random.normal(ks[6], (120, 64), jnp.float32) * scale,
        "lb1": jax.random.normal(ks[7], (64,), jnp.float32) * scale,
        "lw2": jax.random.normal(ks[8], (64, output_size), jnp.float32) * scale,
        "lb2": jax.random.normal(ks[9], (output_size,), jnp.float32) * scale,
    }
    return params


@jax.jit
def my_cnn_network_forward(x_nchw, params):
    """x_nchw: (N, 1, 32, 32) float32, like the PyTorch module (MNIST padded to 32)."""
    x = jnp.transpose(x_nchw, (0, 2, 3, 1))                  # NCHW -> NHWC
    x = conv_relu_pool(x, params["w1"], params["b1"])        # (N, 15, 15, 20)
    x = conv_relu_pool(x, params["w2"], params["b2"])        # (N, 6, 6, 40)
    x = conv_relu_pool(x, params["w3"], params["b3"])        # (N, 2, 2, 30)
    # torch.flatten(x, 1) on NCHW flattens in (C, H, W) order.
    x = jnp.transpose(x, (0, 3, 1, 2)).reshape(x.shape[0], -1)   # (N, 120)
    out = mlp(x, params["lw1"], params["lb1"], params["lw2"], params["lb2"])
    return out


if __name__ == "__main__":
    key = jax.random.PRNGKey(0)
    k_x, k_p = jax.random.split(key)

    # Input implied by the module: 1 channel, 32x32 spatial (so flatten -> 120 features).
    batch, output_size = 2, 10
    x = jax.random.normal(k_x, (batch, 1, 32, 32), jnp.float32)
    params = init_params(k_p, output_size=output_size)

    out = my_cnn_network_forward(x, params)
    out = jax.block_until_ready(out)
    assert out.shape == (batch, output_size), out.shape
    assert bool(jnp.all(jnp.isfinite(out)))
    print("KERNEL_OK")
</pallas_src>

<mosaic_0001>
module attributes {stable_mosaic.version = 11 : i64} {
  func.func @conv_relu_pool_kernel(%arg0: i32, %arg1: memref<4x512x9xbf16, #tpu.memory_space<vmem>>, %arg2: memref<9x128xbf16, #tpu.memory_space<vmem>>, %arg3: memref<1x128xf32, #tpu.memory_space<vmem>>, %arg4: memref<512x128xbf16, #tpu.memory_space<vmem>>) attributes {dimension_semantics = [#tpu.dimension_semantics<parallel>], iteration_bounds = array<i64: 1>, scalar_prefetch = 0 : i64, scratch_operands = 0 : i64, tpu.core_type = #tpu.core_type<tc>, window_params = [{transform_indices = @transform_0, window_bounds = array<i64: 4, 512, 9>}, {pipeline_mode = #tpu.pipeline_mode<synchronous>, transform_indices = @transform_1, window_bounds = array<i64: 9, 128>}, {pipeline_mode = #tpu.pipeline_mode<synchronous>, transform_indices = @transform_2, window_bounds = array<i64: 1, 128>}, {transform_indices = @transform_3, window_bounds = array<i64: 512, 128>}]} {
    %c0 = arith.constant 0 : index
    %c0_0 = arith.constant 0 : index
    %c0_1 = arith.constant 0 : index
    %0 = vector.load %arg1[%c0, %c0_0, %c0_1] : memref<4x512x9xbf16, #tpu.memory_space<vmem>>, vector<4x512x9xbf16>
    %1 = vector.shape_cast %0 : vector<4x512x9xbf16> to vector<2048x9xbf16>
    %c0_2 = arith.constant 0 : index
    %c0_3 = arith.constant 0 : index
    %2 = vector.load %arg2[%c0_2, %c0_3] : memref<9x128xbf16, #tpu.memory_space<vmem>>, vector<9x128xbf16>
    %cst = arith.constant dense<0.000000e+00> : vector<2048x128xf32>
    %3 = tpu.matmul %1, %2, %cst {dimension_numbers = #tpu.dot_dimension_numbers<[1], [0], [0], [1], [0, 0, 1, 1], [], []>} : vector<2048x9xbf16>, vector<9x128xbf16>, vector<2048x128xf32> -> vector<2048x128xf32>
    %4 = vector.extract_strided_slice %3 {offsets = [0, 0], sizes = [512, 128], strides = [1, 1]} : vector<2048x128xf32> to vector<512x128xf32>
    %5 = vector.extract_strided_slice %3 {offsets = [512, 0], sizes = [512, 128], strides = [1, 1]} : vector<2048x128xf32> to vector<512x128xf32>
    %6 = arith.maximumf %4, %5 : vector<512x128xf32>
    %7 = vector.extract_strided_slice %3 {offsets = [1024, 0], sizes = [512, 128], strides = [1, 1]} : vector<2048x128xf32> to vector<512x128xf32>
    %8 = vector.extract_strided_slice %3 {offsets = [1536, 0], sizes = [512, 128], strides = [1, 1]} : vector<2048x128xf32> to vector<512x128xf32>
    %9 = arith.maximumf %7, %8 : vector<512x128xf32>
    %10 = arith.maximumf %6, %9 : vector<512x128xf32>
    %c0_4 = arith.constant 0 : index
    %c0_5 = arith.constant 0 : index
    %11 = vector.load %arg3[%c0_4, %c0_5] : memref<1x128xf32, #tpu.memory_space<vmem>>, vector<1x128xf32>
    %12 = vector.broadcast %11 : vector<1x128xf32> to vector<512x128xf32>
    %13 = arith.addf %10, %12 : vector<512x128xf32>
    %cst_6 = arith.constant 0.000000e+00 : f32
    %14 = vector.broadcast %cst_6 : f32 to vector<512x128xf32>
    %15 = arith.maximumf %13, %14 : vector<512x128xf32>
    %16 = arith.truncf %15 : vector<512x128xf32> to vector<512x128xbf16>
    %c0_7 = arith.constant 0 : index
    %c0_8 = arith.constant 0 : index
    %17 = vector.load %arg4[%c0_7, %c0_8] : memref<512x128xbf16, #tpu.memory_space<vmem>>, vector<512x128xbf16>
    tpu.vector_store %arg4[%c0_7, %c0_8], %16 {strides = array<i32>} : memref<512x128xbf16, #tpu.memory_space<vmem>>, vector<512x128xbf16>,
    return
  }
  func.func @transform_0(%arg0: i32) -> (i32, i32, i32) {
    %c0_i32 = arith.constant 0 : i32
    %c0_i32_0 = arith.constant 0 : i32
    %c0_i32_1 = arith.constant 0 : i32
    return %c0_i32, %arg0, %c0_i32_0 : i32, i32, i32
  }
  func.func @transform_1(%arg0: i32) -> (i32, i32) {
    %c0_i32 = arith.constant 0 : i32
    %c0_i32_0 = arith.constant 0 : i32
    %c0_i32_1 = arith.constant 0 : i32
    return %c0_i32, %c0_i32_0 : i32, i32
  }
  func.func @transform_2(%arg0: i32) -> (i32, i32) {
    %c0_i32 = arith.constant 0 : i32
    %c0_i32_0 = arith.constant 0 : i32
    %c0_i32_1 = arith.constant 0 : i32
    return %c0_i32, %c0_i32_0 : i32, i32
  }
  func.func @transform_3(%arg0: i32) -> (i32, i32) {
    %c0_i32 = arith.constant 0 : i32
    %c0_i32_0 = arith.constant 0 : i32
    return %arg0, %c0_i32 : i32, i32
  }
}

module attributes {stable_mosaic.version = 11 : i64} {
  func.func @conv_relu_pool_kernel(%arg0: i32, %arg1: memref<4x128x180xbf16, #tpu.memory_space<vmem>>, %arg2: memref<180x128xbf16, #tpu.memory_space<vmem>>, %arg3: memref<1x128xf32, #tpu.memory_space<vmem>>, %arg4: memref<128x128xbf16, #tpu.memory_space<vmem>>) attributes {dimension_semantics = [#tpu.dimension_semantics<parallel>], iteration_bounds = array<i64: 1>, scalar_prefetch = 0 : i64, scratch_operands = 0 : i64, tpu.core_type = #tpu.core_type<tc>, window_params = [{transform_indices = @transform_0, window_bounds = array<i64: 4, 128, 180>}, {pipeline_mode = #tpu.pipeline_mode<synchronous>, transform_indices = @transform_1, window_bounds = array<i64: 180, 128>}, {pipeline_mode = #tpu.pipeline_mode<synchronous>, transform_indices = @transform_2, window_bounds = array<i64: 1, 128>}, {transform_indices = @transform_3, window_bounds = array<i64: 128, 128>}]} {
    %c0 = arith.constant 0 : index
    %c0_0 = arith.constant 0 : index
    %c0_1 = arith.constant 0 : index
    %0 = vector.load %arg1[%c0, %c0_0, %c0_1] : memref<4x128x180xbf16, #tpu.memory_space<vmem>>, vector<4x128x180xbf16>
    %1 = vector.shape_cast %0 : vector<4x128x180xbf16> to vector<512x180xbf16>
    %c0_2 = arith.constant 0 : index
    %c0_3 = arith.constant 0 : index
    %2 = vector.load %arg2[%c0_2, %c0_3] : memref<180x128xbf16, #tpu.memory_space<vmem>>, vector<180x128xbf16>
    %cst = arith.constant dense<0.000000e+00> : vector<512x128xf32>
    %3 = tpu.matmul %1, %2, %cst {dimension_numbers = #tpu.dot_dimension_numbers<[1], [0], [0], [1], [0, 0, 1, 1], [], []>} : vector<512x180xbf16>, vector<180x128xbf16>, vector<512x128xf32> -> vector<512x128xf32>
    %4 = vector.extract_strided_slice %3 {offsets = [0, 0], sizes = [128, 128], strides = [1, 1]} : vector<512x128xf32> to vector<128x128xf32>
    %5 = vector.extract_strided_slice %3 {offsets = [128, 0], sizes = [128, 128], strides = [1, 1]} : vector<512x128xf32> to vector<128x128xf32>
    %6 = arith.maximumf %4, %5 : vector<128x128xf32>
    %7 = vector.extract_strided_slice %3 {offsets = [256, 0], sizes = [128, 128], strides = [1, 1]} : vector<512x128xf32> to vector<128x128xf32>
    %8 = vector.extract_strided_slice %3 {offsets = [384, 0], sizes = [128, 128], strides = [1, 1]} : vector<512x128xf32> to vector<128x128xf32>
    %9 = arith.maximumf %7, %8 : vector<128x128xf32>
    %10 = arith.maximumf %6, %9 : vector<128x128xf32>
    %c0_4 = arith.constant 0 : index
    %c0_5 = arith.constant 0 : index
    %11 = vector.load %arg3[%c0_4, %c0_5] : memref<1x128xf32, #tpu.memory_space<vmem>>, vector<1x128xf32>
    %12 = vector.broadcast %11 : vector<1x128xf32> to vector<128x128xf32>
    %13 = arith.addf %10, %12 : vector<128x128xf32>
    %cst_6 = arith.constant 0.000000e+00 : f32
    %14 = vector.broadcast %cst_6 : f32 to vector<128x128xf32>
    %15 = arith.maximumf %13, %14 : vector<128x128xf32>
    %16 = arith.truncf %15 : vector<128x128xf32> to vector<128x128xbf16>
    %c0_7 = arith.constant 0 : index
    %c0_8 = arith.constant 0 : index
    %17 = vector.load %arg4[%c0_7, %c0_8] : memref<128x128xbf16, #tpu.memory_space<vmem>>, vector<128x128xbf16>
    tpu.vector_store %arg4[%c0_7, %c0_8], %16 {strides = array<i32>} : memref<128x128xbf16, #tpu.memory_space<vmem>>, vector<128x128xbf16>,
    return
  }
  func.func @transform_0(%arg0: i32) -> (i32, i32, i32) {
    %c0_i32 = arith.constant 0 : i32
    %c0_i32_0 = arith.constant 0 : i32
    %c0_i32_1 = arith.constant 0 : i32
    return %c0_i32, %arg0, %c0_i32_0 : i32, i32, i32
  }
  func.func @transform_1(%arg0: i32) -> (i32, i32) {
    %c0_i32 = arith.constant 0 : i32
    %c0_i32_0 = arith.constant 0 : i32
    %c0_i32_1 = arith.constant 0 : i32
    return %c0_i32, %c0_i32_0 : i32, i32
  }
  func.func @transform_2(%arg0: i32) -> (i32, i32) {
    %c0_i32 = arith.constant 0 : i32
    %c0_i32_0 = arith.constant 0 : i32
    %c0_i32_1 = arith.constant 0 : i32
    return %c0_i32, %c0_i32_0 : i32, i32
  }
  func.func @transform_3(%arg0: i32) -> (i32, i32) {
    %c0_i32 = arith.constant 0 : i32
    %c0_i32_0 = arith.constant 0 : i32
    return %arg0, %c0_i32 : i32, i32
  }
}

module attributes {stable_mosaic.version = 11 : i64} {
  func.func @conv_relu_pool_kernel(%arg0: i32, %arg1: memref<4x64x360xbf16, #tpu.memory_space<vmem>>, %arg2: memref<360x128xbf16, #tpu.memory_space<vmem>>, %arg3: memref<1x128xf32, #tpu.memory_space<vmem>>, %arg4: memref<64x128xbf16, #tpu.memory_space<vmem>>) attributes {dimension_semantics = [#tpu.dimension_semantics<parallel>], iteration_bounds = array<i64: 1>, scalar_prefetch = 0 : i64, scratch_operands = 0 : i64, tpu.core_type = #tpu.core_type<tc>, window_params = [{transform_indices = @transform_0, window_bounds = array<i64: 4, 64, 360>}, {pipeline_mode = #tpu.pipeline_mode<synchronous>, transform_indices = @transform_1, window_bounds = array<i64: 360, 128>}, {pipeline_mode = #tpu.pipeline_mode<synchronous>, transform_indices = @transform_2, window_bounds = array<i64: 1, 128>}, {transform_indices = @transform_3, window_bounds = array<i64: 64, 128>}]} {
    %c0 = arith.constant 0 : index
    %c0_0 = arith.constant 0 : index
    %c0_1 = arith.constant 0 : index
    %0 = vector.load %arg1[%c0, %c0_0, %c0_1] : memref<4x64x360xbf16, #tpu.memory_space<vmem>>, vector<4x64x360xbf16>
    %1 = vector.shape_cast %0 : vector<4x64x360xbf16> to vector<256x360xbf16>
    %c0_2 = arith.constant 0 : index
    %c0_3 = arith.constant 0 : index
    %2 = vector.load %arg2[%c0_2, %c0_3] : memref<360x128xbf16, #tpu.memory_space<vmem>>, vector<360x128xbf16>
    %cst = arith.constant dense<0.000000e+00> : vector<256x128xf32>
    %3 = tpu.matmul %1, %2, %cst {dimension_numbers = #tpu.dot_dimension_numbers<[1], [0], [0], [1], [0, 0, 1, 1], [], []>} : vector<256x360xbf16>, vector<360x128xbf16>, vector<256x128xf32> -> vector<256x128xf32>
    %4 = vector.extract_strided_slice %3 {offsets = [0, 0], sizes = [64, 128], strides = [1, 1]} : vector<256x128xf32> to vector<64x128xf32>
    %5 = vector.extract_strided_slice %3 {offsets = [64, 0], sizes = [64, 128], strides = [1, 1]} : vector<256x128xf32> to vector<64x128xf32>
    %6 = arith.maximumf %4, %5 : vector<64x128xf32>
    %7 = vector.extract_strided_slice %3 {offsets = [128, 0], sizes = [64, 128], strides = [1, 1]} : vector<256x128xf32> to vector<64x128xf32>
    %8 = vector.extract_strided_slice %3 {offsets = [192, 0], sizes = [64, 128], strides = [1, 1]} : vector<256x128xf32> to vector<64x128xf32>
    %9 = arith.maximumf %7, %8 : vector<64x128xf32>
    %10 = arith.maximumf %6, %9 : vector<64x128xf32>
    %c0_4 = arith.constant 0 : index
    %c0_5 = arith.constant 0 : index
    %11 = vector.load %arg3[%c0_4, %c0_5] : memref<1x128xf32, #tpu.memory_space<vmem>>, vector<1x128xf32>
    %12 = vector.broadcast %11 : vector<1x128xf32> to vector<64x128xf32>
    %13 = arith.addf %10, %12 : vector<64x128xf32>
    %cst_6 = arith.constant 0.000000e+00 : f32
    %14 = vector.broadcast %cst_6 : f32 to vector<64x128xf32>
    %15 = arith.maximumf %13, %14 : vector<64x128xf32>
    %16 = arith.truncf %15 : vector<64x128xf32> to vector<64x128xbf16>
    %c0_7 = arith.constant 0 : index
    %c0_8 = arith.constant 0 : index
    %17 = vector.load %arg4[%c0_7, %c0_8] : memref<64x128xbf16, #tpu.memory_space<vmem>>, vector<64x128xbf16>
    tpu.vector_store %arg4[%c0_7, %c0_8], %16 {strides = array<i32>} : memref<64x128xbf16, #tpu.memory_space<vmem>>, vector<64x128xbf16>,
    return
  }
  func.func @transform_0(%arg0: i32) -> (i32, i32, i32) {
    %c0_i32 = arith.constant 0 : i32
    %c0_i32_0 = arith.constant 0 : i32
    %c0_i32_1 = arith.constant 0 : i32
    return %c0_i32, %arg0, %c0_i32_0 : i32, i32, i32
  }
  func.func @transform_1(%arg0: i32) -> (i32, i32) {
    %c0_i32 = arith.constant 0 : i32
    %c0_i32_0 = arith.constant 0 : i32
    %c0_i32_1 = arith.constant 0 : i32
    return %c0_i32, %c0_i32_0 : i32, i32
  }
  func.func @transform_2(%arg0: i32) -> (i32, i32) {
    %c0_i32 = arith.constant 0 : i32
    %c0_i32_0 = arith.constant 0 : i32
    %c0_i32_1 = arith.constant 0 : i32
    return %c0_i32, %c0_i32_0 : i32, i32
  }
  func.func @transform_3(%arg0: i32) -> (i32, i32) {
    %c0_i32 = arith.constant 0 : i32
    %c0_i32_0 = arith.constant 0 : i32
    return %arg0, %c0_i32 : i32, i32
  }
}

module attributes {stable_mosaic.version = 11 : i64} {
  func.func @mlp_kernel(%arg0: i32, %arg1: memref<64x120xbf16, #tpu.memory_space<vmem>>, %arg2: memref<120x64xbf16, #tpu.memory_space<vmem>>, %arg3: memref<1x64xf32, #tpu.memory_space<vmem>>, %arg4: memref<64x128xbf16, #tpu.memory_space<vmem>>, %arg5: memref<1x128xf32, #tpu.memory_space<vmem>>, %arg6: memref<64x128xf32, #tpu.memory_space<vmem>>) attributes {dimension_semantics = [#tpu.dimension_semantics<parallel>], iteration_bounds = array<i64: 1>, scalar_prefetch = 0 : i64, scratch_operands = 0 : i64, tpu.core_type = #tpu.core_type<tc>, window_params = [{transform_indices = @transform_0, window_bounds = array<i64: 64, 120>}, {pipeline_mode = #tpu.pipeline_mode<synchronous>, transform_indices = @transform_1, window_bounds = array<i64: 120, 64>}, {pipeline_mode = #tpu.pipeline_mode<synchronous>, transform_indices = @transform_2, window_bounds = array<i64: 1, 64>}, {pipeline_mode = #tpu.pipeline_mode<synchronous>, transform_indices = @transform_3, window_bounds = array<i64: 64, 128>}, {pipeline_mode = #tpu.pipeline_mode<synchronous>, transform_indices = @transform_4, window_bounds = array<i64: 1, 128>}, {transform_indices = @transform_5, window_bounds = array<i64: 64, 128>}]} {
    %c0 = arith.constant 0 : index
    %c0_0 = arith.constant 0 : index
    %0 = vector.load %arg1[%c0, %c0_0] : memref<64x120xbf16, #tpu.memory_space<vmem>>, vector<64x120xbf16>
    %c0_1 = arith.constant 0 : index
    %c0_2 = arith.constant 0 : index
    %1 = vector.load %arg2[%c0_1, %c0_2] : memref<120x64xbf16, #tpu.memory_space<vmem>>, vector<120x64xbf16>
    %cst = arith.constant dense<0.000000e+00> : vector<64x64xf32>
    %2 = tpu.matmul %0, %1, %cst {dimension_numbers = #tpu.dot_dimension_numbers<[1], [0], [0], [1], [0, 0, 1, 1], [], []>} : vector<64x120xbf16>, vector<120x64xbf16>, vector<64x64xf32> -> vector<64x64xf32>
    %c0_3 = arith.constant 0 : index
    %c0_4 = arith.constant 0 : index
    %3 = vector.load %arg3[%c0_3, %c0_4] : memref<1x64xf32, #tpu.memory_space<vmem>>, vector<1x64xf32>
    %4 = vector.broadcast %3 : vector<1x64xf32> to vector<64x64xf32>
    %5 = arith.addf %2, %4 : vector<64x64xf32>
    %cst_5 = arith.constant 0.000000e+00 : f32
    %6 = vector.broadcast %cst_5 : f32 to vector<64x64xf32>
    %7 = arith.maximumf %5, %6 : vector<64x64xf32>
    %8 = arith.truncf %7 : vector<64x64xf32> to vector<64x64xbf16>
    %c0_6 = arith.constant 0 : index
    %c0_7 = arith.constant 0 : index
    %9 = vector.load %arg4[%c0_6, %c0_7] : memref<64x128xbf16, #tpu.memory_space<vmem>>, vector<64x128xbf16>
    %cst_8 = arith.constant dense<0.000000e+00> : vector<64x128xf32>
    %10 = tpu.matmul %8, %9, %cst_8 {dimension_numbers = #tpu.dot_dimension_numbers<[1], [0], [0], [1], [0, 0, 1, 1], [], []>} : vector<64x64xbf16>, vector<64x128xbf16>, vector<64x128xf32> -> vector<64x128xf32>
    %c0_9 = arith.constant 0 : index
    %c0_10 = arith.constant 0 : index
    %11 = vector.load %arg5[%c0_9, %c0_10] : memref<1x128xf32, #tpu.memory_space<vmem>>, vector<1x128xf32>
    %12 = vector.broadcast %11 : vector<1x128xf32> to vector<64x128xf32>
    %13 = arith.addf %10, %12 : vector<64x128xf32>
    %c0_11 = arith.constant 0 : index
    %c0_12 = arith.constant 0 : index
    %14 = vector.load %arg6[%c0_11, %c0_12] : memref<64x128xf32, #tpu.memory_space<vmem>>, vector<64x128xf32>
    tpu.vector_store %arg6[%c0_11, %c0_12], %13 {strides = array<i32>} : memref<64x128xf32, #tpu.memory_space<vmem>>, vector<64x128xf32>,
    return
  }
  func.func @transform_0(%arg0: i32) -> (i32, i32) {
    %c0_i32 = arith.constant 0 : i32
    %c0_i32_0 = arith.constant 0 : i32
    return %arg0, %c0_i32 : i32, i32
  }
  func.func @transform_1(%arg0: i32) -> (i32, i32) {
    %c0_i32 = arith.constant 0 : i32
    %c0_i32_0 = arith.constant 0 : i32
    %c0_i32_1 = arith.constant 0 : i32
    return %c0_i32, %c0_i32_0 : i32, i32
  }
  func.func @transform_2(%arg0: i32) -> (i32, i32) {
    %c0_i32 = arith.constant 0 : i32
    %c0_i32_0 = arith.constant 0 : i32
    %c0_i32_1 = arith.constant 0 : i32
    return %c0_i32, %c0_i32_0 : i32, i32
  }
  func.func @transform_3(%arg0: i32) -> (i32, i32) {
    %c0_i32 = arith.constant 0 : i32
    %c0_i32_0 = arith.constant 0 : i32
    %c0_i32_1 = arith.constant 0 : i32
    return %c0_i32, %c0_i32_0 : i32, i32
  }
  func.func @transform_4(%arg0: i32) -> (i32, i32) {
    %c0_i32 = arith.constant 0 : i32
    %c0_i32_0 = arith.constant 0 : i32
    %c0_i32_1 = arith.constant 0 : i32
    return %c0_i32, %c0_i32_0 : i32, i32
  }
  func.func @transform_5(%arg0: i32) -> (i32, i32) {
    %c0_i32 = arith.constant 0 : i32
    %c0_i32_0 = arith.constant 0 : i32
    return %arg0, %c0_i32 : i32, i32
  }
}

</mosaic_0001>

<llo_original>
// kernel: my_cnn_network_forward.4
$region0: #{my_cnn_network_forward.4}
  #allocation0 [shape = 'u32[]', space=smem, size = 0x4, offset = 0x4, fixed_abs, tag = 'smem constant byte address 0x4 - core index']
  #allocation1 [shape = 'u32[144,128]{1,0:T(1,128)}', space=vmem, size = 0x12000, scoped, tag = 'internal scratch']
  %s0 = inlined_call_operand.vmem [shape: bf16[4,512,9], index: 0, kind: input, shape index: {}]
  %s1 = inlined_call_operand.vmem [shape: bf16[9,128], index: 1, kind: input, shape index: {}]
  %s2 = inlined_call_operand.vmem [shape: f32[1,128], index: 2, kind: input, shape index: {}]
  %s3 = inlined_call_operand.vmem [shape: bf16[512,128], index: 3, kind: output, shape index: {}]
  %s4 = sld [smem:[#allocation0]]
  $region22: #{my_cnn_network_forward.4} parent=0
    _
  %s6 = ssub.s32 1, %s4
  %s7 = scalar_select 0, %s6, %s4
  // Predicated region
  $region2: #{my_cnn_network_forward.4} parent=0 // pred_check
    _
  $region3: #{my_cnn_network_forward.4} parent=0 // pred_check_branch
    %9 = sbr.rel (0) target = $region5
  $region4: #{my_cnn_network_forward.4} parent=0 // pred_region
    _
  $region5: #{my_cnn_network_forward.4} parent=0 // pred_fallthru
    _
  // Predicated region
  $region6: #{my_cnn_network_forward.4} parent=0 // pred_check
    _
  $region7: #{my_cnn_network_forward.4} parent=0 // pred_check_branch
    %11 = sbr.rel (0) target = $region9
  $region8: #{my_cnn_network_forward.4} parent=0 // pred_region
    _
  $region9: #{my_cnn_network_forward.4} parent=0 // pred_fallthru
    _
  // Predicated region
  $region10: #{my_cnn_network_forward.4} parent=0 // pred_check
    _
  $region11: #{my_cnn_network_forward.4} parent=0 // pred_check_branch
    %13 = sbr.rel (0) target = $region13
  $region12: #{my_cnn_network_forward.4} parent=0 // pred_region
    _
  $region13: #{my_cnn_network_forward.4} parent=0 // pred_fallthru
    _
  %v15 = vld [vmem:[%s0] sm:$0xf]
  %v16 = vld [vmem:[%s0 + $0x4] sm:$0xf]
  %v17 = vld [vmem:[%s0 + $0x8] sm:$0xf]
  %v18 = vld [vmem:[%s0 + $0xc] sm:$0xf]
  %v19 = vld [vmem:[%s0 + $0x10] sm:$0xf]
  %v20 = vld [vmem:[%s0 + $0x14] sm:$0xf]
  %v21 = vld [vmem:[%s0 + $0x18] sm:$0xf]
  %v22 = vld [vmem:[%s0 + $0x1c] sm:$0xf]
  %v23 = vld [vmem:[%s0 + $0x20] sm:$0xf]
  %v24 = vld [vmem:[%s0 + $0x24] sm:$0xf]
  %v25 = vld [vmem:[%s0 + $0x28] sm:$0xf]
  %v26 = vld [vmem:[%s0 + $0x2c] sm:$0xf]
  %v27 = vld [vmem:[%s0 + $0x30] sm:$0xf]
  %v28 = vld [vmem:[%s0 + $0x34] sm:$0xf]
  %v29 = vld [vmem:[%s0 + $0x38] sm:$0xf]
  %v30 = vld [vmem:[%s0 + $0x3c] sm:$0xf]
  %v31 = vld [vmem:[%s0 + $0x40] sm:$0xf]
  %v32 = vld [vmem:[%s0 + $0x44] sm:$0xf]
  %v33 = vld [vmem:[%s0 + $0x48] sm:$0xf]
  %v34 = vld [vmem:[%s0 + $0x4c] sm:$0xf]
  %v35 = vld [vmem:[%s0 + $0x50] sm:$0xf]
  %v36 = vld [vmem:[%s0 + $0x54] sm:$0xf]
  %v37 = vld [vmem:[%s0 + $0x58] sm:$0xf]
  %v38 = vld [vmem:[%s0 + $0x5c] sm:$0xf]
  %v39 = vld [vmem:[%s0 + $0x60] sm:$0xf]
  %v40 = vld [vmem:[%s0 + $0x64] sm:$0xf]
  %v41 = vld [vmem:[%s0 + $0x68] sm:$0xf]
  %v42 = vld [vmem:[%s0 + $0x6c] sm:$0xf]
  %v43 = vld [vmem:[%s0 + $0x70] sm:$0xf]
  %v44 = vld [vmem:[%s0 + $0x74] sm:$0xf]
  %v45 = vld [vmem:[%s0 + $0x78] sm:$0xf]
  %v46 = vld [vmem:[%s0 + $0x7c] sm:$0xf]
  %v47 = vld [vmem:[%s0 + $0x80] sm:$0xf]
  %v48 = vld [vmem:[%s0 + $0x84] sm:$0xf]
  %v49 = vld [vmem:[%s0 + $0x88] sm:$0xf]
  %v50 = vld [vmem:[%s0 + $0x8c] sm:$0xf]
  %v51 = vld [vmem:[%s0 + $0x90] sm:$0xf]
  %v52 = vld [vmem:[%s0 + $0x94] sm:$0xf]
  %v53 = vld [vmem:[%s0 + $0x98] sm:$0xf]
  %v54 = vld [vmem:[%s0 + $0x9c] sm:$0xf]
  %v55 = vld [vmem:[%s0 + $0xa0] sm:$0xf]
  %v56 = vld [vmem:[%s0 + $0xa4] sm:$0xf]
  %v57 = vld [vmem:[%s0 + $0xa8] sm:$0xf]
  %v58 = vld [vmem:[%s0 + $0xac] sm:$0xf]
  %v59 = vld [vmem:[%s0 + $0xb0] sm:$0xf]
  %v60 = vld [vmem:[%s0 + $0xb4] sm:$0xf]
  %v61 = vld [vmem:[%s0 + $0xb8] sm:$0xf]
  %v62 = vld [vmem:[%s0 + $0xbc] sm:$0xf]
  %v63 = vld [vmem:[%s0 + $0xc0] sm:$0xf]
  %v64 = vld [vmem:[%s0 + $0xc4] sm:$0xf]
  %v65 = vld [vmem:[%s0 + $0xc8] sm:$0xf]
  %v66 = vld [vmem:[%s0 + $0xcc] sm:$0xf]
  %v67 = vld [vmem:[%s0 + $0xd0] sm:$0xf]
  %v68 = vld [vmem:[%s0 + $0xd4] sm:$0xf]
  %v69 = vld [vmem:[%s0 + $0xd8] sm:$0xf]
  %v70 = vld [vmem:[%s0 + $0xdc] sm:$0xf]
  %v71 = vld [vmem:[%s0 + $0xe0] sm:$0xf]
  %v72 = vld [vmem:[%s0 + $0xe4] sm:$0xf]
  %v73 = vld [vmem:[%s0 + $0xe8] sm:$0xf]
  %v74 = vld [vmem:[%s0 + $0xec] sm:$0xf]
  %v75 = vld [vmem:[%s0 + $0xf0] sm:$0xf]
  %v76 = vld [vmem:[%s0 + $0xf4] sm:$0xf]
  %v77 = vld [vmem:[%s0 + $0xf8] sm:$0xf]
  %v78 = vld [vmem:[%s0 + $0xfc] sm:$0xf]
  %v79 = vld [vmem:[%s0 + $0x100] sm:$0xf]
  %v80 = vld [vmem:[%s0 + $0x104] sm:$0xf]
  %v81 = vld [vmem:[%s0 + $0x108] sm:$0xf]
  %v82 = vld [vmem:[%s0 + $0x10c] sm:$0xf]
  %v83 = vld [vmem:[%s0 + $0x110] sm:$0xf]
  %v84 = vld [vmem:[%s0 + $0x114] sm:$0xf]
  %v85 = vld [vmem:[%s0 + $0x118] sm:$0xf]
  %v86 = vld [vmem:[%s0 + $0x11c] sm:$0xf]
  %v87 = vld [vmem:[%s0 + $0x120] sm:$0xf]
  %v88 = vld [vmem:[%s0 + $0x124] sm:$0xf]
  %v89 = vld [vmem:[%s0 + $0x128] sm:$0xf]
  %v90 = vld [vmem:[%s0 + $0x12c] sm:$0xf]
  %v91 = vld [vmem:[%s0 + $0x130] sm:$0xf]
  %v92 = vld [vmem:[%s0 + $0x134] sm:$0xf]
  %v93 = vld [vmem:[%s0 + $0x138] sm:$0xf]
  %v94 = vld [vmem:[%s0 + $0x13c] sm:$0xf]
  %v95 = vld [vmem:[%s0 + $0x140] sm:$0xf]
  %v96 = vld [vmem:[%s0 + $0x144] sm:$0xf]
  %v97 = vld [vmem:[%s0 + $0x148] sm:$0xf]
  %v98 = vld [vmem:[%s0 + $0x14c] sm:$0xf]
  %v99 = vld [vmem:[%s0 + $0x150] sm:$0xf]
  %v100 = vld [vmem:[%s0 + $0x154] sm:$0xf]
  %v101 = vld [vmem:[%s0 + $0x158] sm:$0xf]
  %v102 = vld [vmem:[%s0 + $0x15c] sm:$0xf]
  %v103 = vld [vmem:[%s0 + $0x160] sm:$0xf]
  %v104 = vld [vmem:[%s0 + $0x164] sm:$0xf]
  %v105 = vld [vmem:[%s0 + $0x168] sm:$0xf]
  %v106 = vld [vmem:[%s0 + $0x16c] sm:$0xf]
  %v107 = vld [vmem:[%s0 + $0x170] sm:$0xf]
  %v108 = vld [vmem:[%s0 + $0x174] sm:$0xf]
  %v109 = vld [vmem:[%s0 + $0x178] sm:$0xf]
  %v110 = vld [vmem:[%s0 + $0x17c] sm:$0xf]
  %v111 = vld [vmem:[%s0 + $0x180] sm:$0xf]
  %v112 = vld [vmem:[%s0 + $0x184] sm:$0xf]
  %v113 = vld [vmem:[%s0 + $0x188] sm:$0xf]
  %v114 = vld [vmem:[%s0 + $0x18c] sm:$0xf]
  %v115 = vld [vmem:[%s0 + $0x190] sm:$0xf]
  %v116 = vld [vmem:[%s0 + $0x194] sm:$0xf]
  %v117 = vld [vmem:[%s0 + $0x198] sm:$0xf]
  %v118 = vld [vmem:[%s0 + $0x19c] sm:$0xf]
  %v119 = vld [vmem:[%s0 + $0x1a0] sm:$0xf]
  %v120 = vld [vmem:[%s0 + $0x1a4] sm:$0xf]
  %v121 = vld [vmem:[%s0 + $0x1a8] sm:$0xf]
  %v122 = vld [vmem:[%s0 + $0x1ac] sm:$0xf]
  %v123 = vld [vmem:[%s0 + $0x1b0] sm:$0xf]
  %v124 = vld [vmem:[%s0 + $0x1b4] sm:$0xf]
  %v125 = vld [vmem:[%s0 + $0x1b8] sm:$0xf]
  %v126 = vld [vmem:[%s0 + $0x1bc] sm:$0xf]
  %v127 = vld [vmem:[%s0 + $0x1c0] sm:$0xf]
  %v128 = vld [vmem:[%s0 + $0x1c4] sm:$0xf]
  %v129 = vld [vmem:[%s0 + $0x1c8] sm:$0xf]
  %v130 = vld [vmem:[%s0 + $0x1cc] sm:$0xf]
  %v131 = vld [vmem:[%s0 + $0x1d0] sm:$0xf]
  %v132 = vld [vmem:[%s0 + $0x1d4] sm:$0xf]
  %v133 = vld [vmem:[%s0 + $0x1d8] sm:$0xf]
  %v134 = vld [vmem:[%s0 + $0x1dc] sm:$0xf]
  %v135 = vld [vmem:[%s0 + $0x1e0] sm:$0xf]
  %v136 = vld [vmem:[%s0 + $0x1e4] sm:$0xf]
  %v137 = vld [vmem:[%s0 + $0x1e8] sm:$0xf]
  %v138 = vld [vmem:[%s0 + $0x1ec] sm:$0xf]
  %v139 = vld [vmem:[%s0 + $0x1f0] sm:$0xf]
  %v140 = vld [vmem:[%s0 + $0x1f4] sm:$0xf]
  %v141 = vld [vmem:[%s0 + $0x1f8] sm:$0xf]
  %v142 = vld [vmem:[%s0 + $0x1fc] sm:$0xf]
  %v143 = vld [vmem:[%s0 + $0x200] sm:$0xf]
  %v144 = vld [vmem:[%s0 + $0x204] sm:$0xf]
  %v145 = vld [vmem:[%s0 + $0x208] sm:$0xf]
  %v146 = vld [vmem:[%s0 + $0x20c] sm:$0xf]
  %v147 = vld [vmem:[%s0 + $0x210] sm:$0xf]
  %v148 = vld [vmem:[%s0 + $0x214] sm:$0xf]
  %v149 = vld [vmem:[%s0 + $0x218] sm:$0xf]
  %v150 = vld [vmem:[%s0 + $0x21c] sm:$0xf]
  %v151 = vld [vmem:[%s0 + $0x220] sm:$0xf]
  %v152 = vld [vmem:[%s0 + $0x224] sm:$0xf]
  %v153 = vld [vmem:[%s0 + $0x228] sm:$0xf]
  %v154 = vld [vmem:[%s0 + $0x22c] sm:$0xf]
  %v155 = vld [vmem:[%s0 + $0x230] sm:$0xf]
  %v156 = vld [vmem:[%s0 + $0x234] sm:$0xf]
  %v157 = vld [vmem:[%s0 + $0x238] sm:$0xf]
  %v158 = vld [vmem:[%s0 + $0x23c] sm:$0xf]
  %v159 = vld [vmem:[%s0 + $0x240] sm:$0xf]
  %v160 = vld [vmem:[%s0 + $0x244] sm:$0xf]
  %v161 = vld [vmem:[%s0 + $0x248] sm:$0xf]
  %v162 = vld [vmem:[%s0 + $0x24c] sm:$0xf]
  %v163 = vld [vmem:[%s0 + $0x250] sm:$0xf]
  %v164 = vld [vmem:[%s0 + $0x254] sm:$0xf]
  %v165 = vld [vmem:[%s0 + $0x258] sm:$0xf]
  %v166 = vld [vmem:[%s0 + $0x25c] sm:$0xf]
  %v167 = vld [vmem:[%s0 + $0x260] sm:$0xf]
  %v168 = vld [vmem:[%s0 + $0x264] sm:$0xf]
  %v169 = vld [vmem:[%s0 + $0x268] sm:$0xf]
  %v170 = vld [vmem:[%s0 + $0x26c] sm:$0xf]
  %v171 = vld [vmem:[%s0 + $0x270] sm:$0xf]
  %v172 = vld [vmem:[%s0 + $0x274] sm:$0xf]
  %v173 = vld [vmem:[%s0 + $0x278] sm:$0xf]
  %v174 = vld [vmem:[%s0 + $0x27c] sm:$0xf]
  %v175 = vld [vmem:[%s0 + $0x280] sm:$0xf]
  %v176 = vld [vmem:[%s0 + $0x284] sm:$0xf]
  %v177 = vld [vmem:[%s0 + $0x288] sm:$0xf]
  %v178 = vld [vmem:[%s0 + $0x28c] sm:$0xf]
  %v179 = vld [vmem:[%s0 + $0x290] sm:$0xf]
  %v180 = vld [vmem:[%s0 + $0x294] sm:$0xf]
  %v181 = vld [vmem:[%s0 + $0x298] sm:$0xf]
  %v182 = vld [vmem:[%s0 + $0x29c] sm:$0xf]
  %v183 = vld [vmem:[%s0 + $0x2a0] sm:$0xf]
  %v184 = vld [vmem:[%s0 + $0x2a4] sm:$0xf]
  %v185 = vld [vmem:[%s0 + $0x2a8] sm:$0xf]
  %v186 = vld [vmem:[%s0 + $0x2ac] sm:$0xf]
  %v187 = vld [vmem:[%s0 + $0x2b0] sm:$0xf]
  %v188 = vld [vmem:[%s0 + $0x2b4] sm:$0xf]
  %v189 = vld [vmem:[%s0 + $0x2b8] sm:$0xf]
  %v190 = vld [vmem:[%s0 + $0x2bc] sm:$0xf]
  %v191 = vld [vmem:[%s0 + $0x2c0] sm:$0xf]
  %v192 = vld [vmem:[%s0 + $0x2c4] sm:$0xf]
  %v193 = vld [vmem:[%s0 + $0x2c8] sm:$0xf]
  %v194 = vld [vmem:[%s0 + $0x2cc] sm:$0xf]
  %v195 = vld [vmem:[%s0 + $0x2d0] sm:$0xf]
  %v196 = vld [vmem:[%s0 + $0x2d4] sm:$0xf]
  %v197 = vld [vmem:[%s0 + $0x2d8] sm:$0xf]
  %v198 = vld [vmem:[%s0 + $0x2dc] sm:$0xf]
  %v199 = vld [vmem:[%s0 + $0x2e0] sm:$0xf]
  %v200 = vld [vmem:[%s0 + $0x2e4] sm:$0xf]
  %v201 = vld [vmem:[%s0 + $0x2e8] sm:$0xf]
  %v202 = vld [vmem:[%s0 + $0x2ec] sm:$0xf]
  %v203 = vld [vmem:[%s0 + $0x2f0] sm:$0xf]
  %v204 = vld [vmem:[%s0 + $0x2f4] sm:$0xf]
  %v205 = vld [vmem:[%s0 + $0x2f8] sm:$0xf]
  %v206 = vld [vmem:[%s0 + $0x2fc] sm:$0xf]
  %v207 = vld [vmem:[%s0 + $0x300] sm:$0xf]
  %v208 = vld [vmem:[%s0 + $0x304] sm:$0xf]
  %v209 = vld [vmem:[%s0 + $0x308] sm:$0xf]
  %v210 = vld [vmem:[%s0 + $0x30c] sm:$0xf]
  %v211 = vld [vmem:[%s0 + $0x310] sm:$0xf]
  %v212 = vld [vmem:[%s0 + $0x314] sm:$0xf]
  %v213 = vld [vmem:[%s0 + $0x318] sm:$0xf]
  %v214 = vld [vmem:[%s0 + $0x31c] sm:$0xf]
  %v215 = vld [vmem:[%s0 + $0x320] sm:$0xf]
  %v216 = vld [vmem:[%s0 + $0x324] sm:$0xf]
  %v217 = vld [vmem:[%s0 + $0x328] sm:$0xf]
  %v218 = vld [vmem:[%s0 + $0x32c] sm:$0xf]
  %v219 = vld [vmem:[%s0 + $0x330] sm:$0xf]
  %v220 = vld [vmem:[%s0 + $0x334] sm:$0xf]
  %v221 = vld [vmem:[%s0 + $0x338] sm:$0xf]
  %v222 = vld [vmem:[%s0 + $0x33c] sm:$0xf]
  %v223 = vld [vmem:[%s0 + $0x340] sm:$0xf]
  %v224 = vld [vmem:[%s0 + $0x344] sm:$0xf]
  %v225 = vld [vmem:[%s0 + $0x348] sm:$0xf]
  %v226 = vld [vmem:[%s0 + $0x34c] sm:$0xf]
  %v227 = vld [vmem:[%s0 + $0x350] sm:$0xf]
  %v228 = vld [vmem:[%s0 + $0x354] sm:$0xf]
  %v229 = vld [vmem:[%s0 + $0x358] sm:$0xf]
  %v230 = vld [vmem:[%s0 + $0x35c] sm:$0xf]
  %v231 = vld [vmem:[%s0 + $0x360] sm:$0xf]
  %v232 = vld [vmem:[%s0 + $0x364] sm:$0xf]
  %v233 = vld [vmem:[%s0 + $0x368] sm:$0xf]
  %v234 = vld [vmem:[%s0 + $0x36c] sm:$0xf]
  %v235 = vld [vmem:[%s0 + $0x370] sm:$0xf]
  %v236 = vld [vmem:[%s0 + $0x374] sm:$0xf]
  %v237 = vld [vmem:[%s0 + $0x378] sm:$0xf]
  %v238 = vld [vmem:[%s0 + $0x37c] sm:$0xf]
  %v239 = vld [vmem:[%s0 + $0x380] sm:$0xf]
  %v240 = vld [vmem:[%s0 + $0x384] sm:$0xf]
  %v241 = vld [vmem:[%s0 + $0x388] sm:$0xf]
  %v242 = vld [vmem:[%s0 + $0x38c] sm:$0xf]
  %v243 = vld [vmem:[%s0 + $0x390] sm:$0xf]
  %v244 = vld [vmem:[%s0 + $0x394] sm:$0xf]
  %v245 = vld [vmem:[%s0 + $0x398] sm:$0xf]
  %v246 = vld [vmem:[%s0 + $0x39c] sm:$0xf]
  %v247 = vld [vmem:[%s0 + $0x3a0] sm:$0xf]
  %v248 = vld [vmem:[%s0 + $0x3a4] sm:$0xf]
  %v249 = vld [vmem:[%s0 + $0x3a8] sm:$0xf]
  %v250 = vld [vmem:[%s0 + $0x3ac] sm:$0xf]
  %v251 = vld [vmem:[%s0 + $0x3b0] sm:$0xf]
  %v252 = vld [vmem:[%s0 + $0x3b4] sm:$0xf]
  %v253 = vld [vmem:[%s0 + $0x3b8] sm:$0xf]
  %v254 = vld [vmem:[%s0 + $0x3bc] sm:$0xf]
  %v255 = vld [vmem:[%s0 + $0x3c0] sm:$0xf]
  %v256 = vld [vmem:[%s0 + $0x3c4] sm:$0xf]
  %v257 = vld [vmem:[%s0 + $0x3c8] sm:$0xf]
  %v258 = vld [vmem:[%s0 + $0x3cc] sm:$0xf]
  %v259 = vld [vmem:[%s0 + $0x3d0] sm:$0xf]
  %v260 = vld [vmem:[%s0 + $0x3d4] sm:$0xf]
  %v261 = vld [vmem:[%s0 + $0x3d8] sm:$0xf]
  %v262 = vld [vmem:[%s0 + $0x3dc] sm:$0xf]
  %v263 = vld [vmem:[%s0 + $0x3e0] sm:$0xf]
  %v264 = vld [vmem:[%s0 + $0x3e4] sm:$0xf]
  %v265 = vld [vmem:[%s0 + $0x3e8] sm:$0xf]
  %v266 = vld [vmem:[%s0 + $0x3ec] sm:$0xf]
  %v267 = vld [vmem:[%s0 + $0x3f0] sm:$0xf]
  %v268 = vld [vmem:[%s0 + $0x3f4] sm:$0xf]
  %v269 = vld [vmem:[%s0 + $0x3f8] sm:$0xf]
  %v270 = vld [vmem:[%s0 + $0x3fc] sm:$0xf]
  %v271 = vld [vmem:[%s1] sm:$0xf]
  %v272 = vld [vmem:[%s1 + $0x4] sm:$0x1]
  %v529 = vunpack.c.l.b16 %v15
  %v530 = vunpack.c.l.b16 %v16
  %v531 = vunpack.c.l.b16 %v17
  %v532 = vunpack.c.l.b16 %v18
  %v533 = vunpack.c.l.b16 %v19
  %v534 = vunpack.c.l.b16 %v20
  %v535 = vunpack.c.l.b16 %v21
  %v536 = vunpack.c.l.b16 %v22
  %v537 = vunpack.c.l.b16 %v23
  %v538 = vunpack.c.l.b16 %v24
  %v539 = vunpack.c.l.b16 %v25
  %v540 = vunpack.c.l.b16 %v26
  %v541 = vunpack.c.l.b16 %v27
  %v542 = vunpack.c.l.b16 %v28
  %v543 = vunpack.c.l.b16 %v29
  %v544 = vunpack.c.l.b16 %v30
  %v545 = vunpack.c.l.b16 %v31
  %v546 = vunpack.c.l.b16 %v32
  %v547 = vunpack.c.l.b16 %v33
  %v548 = vunpack.c.l.b16 %v34
  %v549 = vunpack.c.l.b16 %v35
  %v550 = vunpack.c.l.b16 %v36
  %v551 = vunpack.c.l.b16 %v37
  %v552 = vunpack.c.l.b16 %v38
  %v553 = vunpack.c.l.b16 %v39
  %v554 = vunpack.c.l.b16 %v40
  %v555 = vunpack.c.l.b16 %v41
  %v556 = vunpack.c.l.b16 %v42
  %v557 = vunpack.c.l.b16 %v43
  %v558 = vunpack.c.l.b16 %v44
  %v559 = vunpack.c.l.b16 %v45
  %v560 = vunpack.c.l.b16 %v46
  %v561 = vunpack.c.l.b16 %v47
  %v562 = vunpack.c.l.b16 %v48
  %v563 = vunpack.c.l.b16 %v49
  %v564 = vunpack.c.l.b16 %v50
  %v565 = vunpack.c.l.b16 %v51
  %v566 = vunpack.c.l.b16 %v52
  %v567 = vunpack.c.l.b16 %v53
  %v568 = vunpack.c.l.b16 %v54
  %v569 = vunpack.c.l.b16 %v55
  %v570 = vunpack.c.l.b16 %v56
  %v571 = vunpack.c.l.b16 %v57
  %v572 = vunpack.c.l.b16 %v58
  %v573 = vunpack.c.l.b16 %v59
  %v574 = vunpack.c.l.b16 %v60
  %v575 = vunpack.c.l.b16 %v61
  %v576 = vunpack.c.l.b16 %v62
  %v577 = vunpack.c.l.b16 %v63
  %v578 = vunpack.c.l.b16 %v64
  %v579 = vunpack.c.l.b16 %v65
  %v580 = vunpack.c.l.b16 %v66
  %v581 = vunpack.c.l.b16 %v67
  %v582 = vunpack.c.l.b16 %v68
  %v583 = vunpack.c.l.b16 %v69
  %v584 = vunpack.c.l.b16 %v70
  %v585 = vunpack.c.l.b16 %v71
  %v586 = vunpack.c.l.b16 %v72
  %v587 = vunpack.c.l.b16 %v73
  %v588 = vunpack.c.l.b16 %v74
  %v589 = vunpack.c.l.b16 %v75
  %v590 = vunpack.c.l.b16 %v76
  %v591 = vunpack.c.l.b16 %v77
  %v592 = vunpack.c.l.b16 %v78
  %v593 = vunpack.c.l.b16 %v79
  %v594 = vunpack.c.l.b16 %v80
  %v595 = vunpack.c.l.b16 %v81
  %v596 = vunpack.c.l.b16 %v82
  %v597 = vunpack.c.l.b16 %v83
  %v598 = vunpack.c.l.b16 %v84
  %v599 = vunpack.c.l.b16 %v85
  %v600 = vunpack.c.l.b16 %v86
  %v601 = vunpack.c.l.b16 %v87
  %v602 = vunpack.c.l.b16 %v88
  %v603 = vunpack.c.l.b16 %v89
  %v604 = vunpack.c.l.b16 %v90
  %v605 = vunpack.c.l.b16 %v91
  %v606 = vunpack.c.l.b16 %v92
  %v607 = vunpack.c.l.b16 %v93
  %v608 = vunpack.c.l.b16 %v94
  %v609 = vunpack.c.l.b16 %v95
  %v610 = vunpack.c.l.b16 %v96
  %v611 = vunpack.c.l.b16 %v97
  %v612 = vunpack.c.l.b16 %v98
  %v613 = vunpack.c.l.b16 %v99
  %v614 = vunpack.c.l.b16 %v100
  %v615 = vunpack.c.l.b16 %v101
  %v616 = vunpack.c.l.b16 %v102
  %v617 = vunpack.c.l.b16 %v103
  %v618 = vunpack.c.l.b16 %v104
  %v619 = vunpack.c.l.b16 %v105
  %v620 = vunpack.c.l.b16 %v106
  %v621 = vunpack.c.l.b16 %v107
  %v622 = vunpack.c.l.b16 %v108
  %v623 = vunpack.c.l.b16 %v109
  %v624 = vunpack.c.l.b16 %v110
  %v625 = vunpack.c.l.b16 %v111
  %v626 = vunpack.c.l.b16 %v112
  %v627 = vunpack.c.l.b16 %v113
  %v628 = vunpack.c.l.b16 %v114
  %v629 = vunpack.c.l.b16 %v115
  %v630 = vunpack.c.l.b16 %v116
  %v631 = vunpack.c.l.b16 %v117
  %v632 = vunpack.c.l.b16 %v118
  %v633 = vunpack.c.l.b16 %v119
  %v634 = vunpack.c.l.b16 %v120
  %v635 = vunpack.c.l.b16 %v121
  %v636 = vunpack.c.l.b16 %v122
  %v637 = vunpack.c.l.b16 %v123
  %v638 = vunpack.c.l.b16 %v124
  %v639 = vunpack.c.l.b16 %v125
  %v640 = vunpack.c.l.b16 %v126
  %v641 = vunpack.c.l.b16 %v127
  %v642 = vunpack.c.l.b16 %v128
  %v643 = vunpack.c.l.b16 %v129
  %v644 = vunpack.c.l.b16 %v130
  %v645 = vunpack.c.l.b16 %v131
  %v646 = vunpack.c.l.b16 %v132
  %v647 = vunpack.c.l.b16 %v133
  %v648 = vunpack.c.l.b16 %v134
  %v649 = vunpack.c.l.b16 %v135
  %v650 = vunpack.c.l.b16 %v136
  %v651 = vunpack.c.l.b16 %v137
  %v652 = vunpack.c.l.b16 %v138
  %v653 = vunpack.c.l.b16 %v139
  %v654 = vunpack.c.l.b16 %v140
  %v655 = vunpack.c.l.b16 %v141
  %v656 = vunpack.c.l.b16 %v142
  %v657 = vunpack.c.l.b16 %v143
  %v658 = vunpack.c.l.b16 %v144
  %v659 = vunpack.c.l.b16 %v145
  %v660 = vunpack.c.l.b16 %v146
  %v661 = vunpack.c.l.b16 %v147
  %v662 = vunpack.c.l.b16 %v148
  %v663 = vunpack.c.l.b16 %v149
  %v664 = vunpack.c.l.b16 %v150
  %v665 = vunpack.c.l.b16 %v151
  %v666 = vunpack.c.l.b16 %v152
  %v667 = vunpack.c.l.b16 %v153
  %v668 = vunpack.c.l.b16 %v154
  %v669 = vunpack.c.l.b16 %v155
  %v670 = vunpack.c.l.b16 %v156
  %v671 = vunpack.c.l.b16 %v157
  %v672 = vunpack.c.l.b16 %v158
  %v673 = vunpack.c.l.b16 %v159
  %v674 = vunpack.c.l.b16 %v160
  %v675 = vunpack.c.l.b16 %v161
  %v676 = vunpack.c.l.b16 %v162
  %v677 = vunpack.c.l.b16 %v163
  %v678 = vunpack.c.l.b16 %v164
  %v679 = vunpack.c.l.b16 %v165
  %v680 = vunpack.c.l.b16 %v166
  %v681 = vunpack.c.l.b16 %v167
  %v682 = vunpack.c.l.b16 %v168
  %v683 = vunpack.c.l.b16 %v169
  %v684 = vunpack.c.l.b16 %v170
  %v685 = vunpack.c.l.b16 %v171
  %v686 = vunpack.c.l.b16 %v172
  %v687 = vunpack.c.l.b16 %v173
  %v688 = vunpack.c.l.b16 %v174
  %v689 = vunpack.c.l.b16 %v175
  %v690 = vunpack.c.l.b16 %v176
  %v691 = vunpack.c.l.b16 %v177
  %v692 = vunpack.c.l.b16 %v178
  %v693 = vunpack.c.l.b16 %v179
  %v694 = vunpack.c.l.b16 %v180
  %v695 = vunpack.c.l.b16 %v181
  %v696 = vunpack.c.l.b16 %v182
  %v697 = vunpack.c.l.b16 %v183
  %v698 = vunpack.c.l.b16 %v184
  %v699 = vunpack.c.l.b16 %v185
  %v700 = vunpack.c.l.b16 %v186
  %v701 = vunpack.c.l.b16 %v187
  %v702 = vunpack.c.l.b16 %v188
  %v703 = vunpack.c.l.b16 %v189
  %v704 = vunpack.c.l.b16 %v190
  %v705 = vunpack.c.l.b16 %v191
  %v706 = vunpack.c.l.b16 %v192
  %v707 = vunpack.c.l.b16 %v193
  %v708 = vunpack.c.l.b16 %v194
  %v709 = vunpack.c.l.b16 %v195
  %v710 = vunpack.c.l.b16 %v196
  %v711 = vunpack.c.l.b16 %v197
  %v712 = vunpack.c.l.b16 %v198
  %v713 = vunpack.c.l.b16 %v199
  %v714 = vunpack.c.l.b16 %v200
  %v715 = vunpack.c.l.b16 %v201
  %v716 = vunpack.c.l.b16 %v202
  %v717 = vunpack.c.l.b16 %v203
  %v718 = vunpack.c.l.b16 %v204
  %v719 = vunpack.c.l.b16 %v205
  %v720 = vunpack.c.l.b16 %v206
  %v721 = vunpack.c.l.b16 %v207
  %v722 = vunpack.c.l.b16 %v208
  %v723 = vunpack.c.l.b16 %v209
  %v724 = vunpack.c.l.b16 %v210
  %v725 = vunpack.c.l.b16 %v211
  %v726 = vunpack.c.l.b16 %v212
  %v727 = vunpack.c.l.b16 %v213
  %v728 = vunpack.c.l.b16 %v214
  %v729 = vunpack.c.l.b16 %v215
  %v730 = vunpack.c.l.b16 %v216
  %v731 = vunpack.c.l.b16 %v217
  %v732 = vunpack.c.l.b16 %v218
  %v733 = vunpack.c.l.b16 %v219
  %v734 = vunpack.c.l.b16 %v220
  %v735 = vunpack.c.l.b16 %v221
  %v736 = vunpack.c.l.b16 %v222
  %v737 = vunpack.c.l.b16 %v223
  %v738 = vunpack.c.l.b16 %v224
  %v739 = vunpack.c.l.b16 %v225
  %v740 = vunpack.c.l.b16 %v226
  %v741 = vunpack.c.l.b16 %v227
  %v742 = vunpack.c.l.b16 %v228
  %v743 = vunpack.c.l.b16 %v229
  %v744 = vunpack.c.l.b16 %v230
  %v745 = vunpack.c.l.b16 %v231
  %v746 = vunpack.c.l.b16 %v232
  %v747 = vunpack.c.l.b16 %v233
  %v748 = vunpack.c.l.b16 %v234
  %v749 = vunpack.c.l.b16 %v235
  %v750 = vunpack.c.l.b16 %v236
  %v751 = vunpack.c.l.b16 %v237
  %v752 = vunpack.c.l.b16 %v238
  %v753 = vunpack.c.l.b16 %v239
  %v754 = vunpack.c.l.b16 %v240
  %v755 = vunpack.c.l.b16 %v241
  %v756 = vunpack.c.l.b16 %v242
  %v757 = vunpack.c.l.b16 %v243
  %v758 = vunpack.c.l.b16 %v244
  %v759 = vunpack.c.l.b16 %v245
  %v760 = vunpack.c.l.b16 %v246
  %v761 = vunpack.c.l.b16 %v247
  %v762 = vunpack.c.l.b16 %v248
  %v763 = vunpack.c.l.b16 %v249
  %v764 = vunpack.c.l.b16 %v250
  %v765 = vunpack.c.l.b16 %v251
  %v766 = vunpack.c.l.b16 %v252
  %v767 = vunpack.c.l.b16 %v253
  %v768 = vunpack.c.l.b16 %v254
  %v769 = vunpack.c.l.b16 %v255
  %v770 = vunpack.c.l.b16 %v256
  %v771 = vunpack.c.l.b16 %v257
  %v772 = vunpack.c.l.b16 %v258
  %v773 = vunpack.c.l.b16 %v259
  %v774 = vunpack.c.l.b16 %v260
  %v775 = vunpack.c.l.b16 %v261
  %v776 = vunpack.c.l.b16 %v262
  %v777 = vunpack.c.l.b16 %v263
  %v778 = vunpack.c.l.b16 %v264
  %v779 = vunpack.c.l.b16 %v265
  %v780 = vunpack.c.l.b16 %v266
  %v781 = vunpack.c.l.b16 %v267
  %v782 = vunpack.c.l.b16 %v268
  %v783 = vunpack.c.l.b16 %v269
  %v784 = vunpack.c.l.b16 %v270
  %v785 = vpack.c.b16 %v530, %v529
  %v786 = vpack.c.b16 %v532, %v531
  %v787 = vpack.c.b16 %v534, %v533
  %v788 = vpack.c.b16 %v536, %v535
  %v789 = vpack.c.b16 %v538, %v537
  %v790 = vpack.c.b16 %v540, %v539
  %v791 = vpack.c.b16 %v542, %v541
  %v792 = vpack.c.b16 %v544, %v543
  %v793 = vpack.c.b16 %v546, %v545
  %v794 = vpack.c.b16 %v548, %v547
  %v795 = vpack.c.b16 %v550, %v549
  %v796 = vpack.c.b16 %v552, %v551
  %v797 = vpack.c.b16 %v554, %v553
  %v798 = vpack.c.b16 %v556, %v555
  %v799 = vpack.c.b16 %v558, %v557
  %v800 = vpack.c.b16 %v560, %v559
  %v801 = vpack.c.b16 %v562, %v561
  %v802 = vpack.c.b16 %v564, %v563
  %v803 = vpack.c.b16 %v566, %v565
  %v804 = vpack.c.b16 %v568, %v567
  %v805 = vpack.c.b16 %v570, %v569
  %v806 = vpack.c.b16 %v572, %v571
  %v807 = vpack.c.b16 %v574, %v573
  %v808 = vpack.c.b16 %v576, %v575
  %v809 = vpack.c.b16 %v578, %v577
  %v810 = vpack.c.b16 %v580, %v579
  %v811 = vpack.c.b16 %v582, %v581
  %v812 = vpack.c.b16 %v584, %v583
  %v813 = vpack.c.b16 %v586, %v585
  %v814 = vpack.c.b16 %v588, %v587
  %v815 = vpack.c.b16 %v590, %v589
  %v816 = vpack.c.b16 %v592, %v591
  %v817 = vpack.c.b16 %v594, %v593
  %v818 = vpack.c.b16 %v596, %v595
  %v819 = vpack.c.b16 %v598, %v597
  %v820 = vpack.c.b16 %v600, %v599
  %v821 = vpack.c.b16 %v602, %v601
  %v822 = vpack.c.b16 %v604, %v603
  %v823 = vpack.c.b16 %v606, %v605
  %v824 = vpack.c.b16 %v608, %v607
  %v825 = vpack.c.b16 %v610, %v609
  %v826 = vpack.c.b16 %v612, %v611
  %v827 = vpack.c.b16 %v614, %v613
  %v828 = vpack.c.b16 %v616, %v615
  %v829 = vpack.c.b16 %v618, %v617
  %v830 = vpack.c.b16 %v620, %v619
  %v831 = vpack.c.b16 %v622, %v621
  %v832 = vpack.c.b16 %v624, %v623
  %v833 = vpack.c.b16 %v626, %v625
  %v834 = vpack.c.b16 %v628, %v627
  %v835 = vpack.c.b16 %v630, %v629
  %v836 = vpack.c.b16 %v632, %v631
  %v837 = vpack.c.b16 %v634, %v633
  %v838 = vpack.c.b16 %v636, %v635
  %v839 = vpack.c.b16 %v638, %v637
  %v840 = vpack.c.b16 %v640, %v639
  %v841 = vpack.c.b16 %v642, %v641
  %v842 = vpack.c.b16 %v644, %v643
  %v843 = vpack.c.b16 %v646, %v645
  %v844 = vpack.c.b16 %v648, %v647
  %v845 = vpack.c.b16 %v650, %v649
  %v846 = vpack.c.b16 %v652, %v651
  %v847 = vpack.c.b16 %v654, %v653
  %v848 = vpack.c.b16 %v656, %v655
  %v849 = vpack.c.b16 %v658, %v657
  %v850 = vpack.c.b16 %v660, %v659
  %v851 = vpack.c.b16 %v662, %v661
  %v852 = vpack.c.b16 %v664, %v663
  %v853 = vpack.c.b16 %v666, %v665
  %v854 = vpack.c.b16 %v668, %v667
  %v855 = vpack.c.b16 %v670, %v669
  %v856 = vpack.c.b16 %v672, %v671
  %v857 = vpack.c.b16 %v674, %v673
  %v858 = vpack.c.b16 %v676, %v675
  %v859 = vpack.c.b16 %v678, %v677
  %v860 = vpack.c.b16 %v680, %v679
  %v861 = vpack.c.b16 %v682, %v681
  %v862 = vpack.c.b16 %v684, %v683
  %v863 = vpack.c.b16 %v686, %v685
  %v864 = vpack.c.b16 %v688, %v687
  %v865 = vpack.c.b16 %v690, %v689
  %v866 = vpack.c.b16 %v692, %v691
  %v867 = vpack.c.b16 %v694, %v693
  %v868 = vpack.c.b16 %v696, %v695
  %v869 = vpack.c.b16 %v698, %v697
  %v870 = vpack.c.b16 %v700, %v699
  %v871 = vpack.c.b16 %v702, %v701
  %v872 = vpack.c.b16 %v704, %v703
  %v873 = vpack.c.b16 %v706, %v705
  %v874 = vpack.c.b16 %v708, %v707
  %v875 = vpack.c.b16 %v710, %v709
  %v876 = vpack.c.b16 %v712, %v711
  %v877 = vpack.c.b16 %v714, %v713
  %v878 = vpack.c.b16 %v716, %v715
  %v879 = vpack.c.b16 %v718, %v717
  %v880 = vpack.c.b16 %v720, %v719
  %v881 = vpack.c.b16 %v722, %v721
  %v882 = vpack.c.b16 %v724, %v723
  %v883 = vpack.c.b16 %v726, %v725
  %v884 = vpack.c.b16 %v728, %v727
  %v885 = vpack.c.b16 %v730, %v729
  %v886 = vpack.c.b16 %v732, %v731
  %v887 = vpack.c.b16 %v734, %v733
  %v888 = vpack.c.b16 %v736, %v735
  %v889 = vpack.c.b16 %v738, %v737
  %v890 = vpack.c.b16 %v740, %v739
  %v891 = vpack.c.b16 %v742, %v741
  %v892 = vpack.c.b16 %v744, %v743
  %v893 = vpack.c.b16 %v746, %v745
  %v894 = vpack.c.b16 %v748, %v747
  %v895 = vpack.c.b16 %v750, %v749
  %v896 = vpack.c.b16 %v752, %v751
  %v897 = vpack.c.b16 %v754, %v753
  %v898 = vpack.c.b16 %v756, %v755
  %v899 = vpack.c.b16 %v758, %v757
  %v900 = vpack.c.b16 %v760, %v759
  %v901 = vpack.c.b16 %v762, %v761
  %v902 = vpack.c.b16 %v764, %v763
  %v903 = vpack.c.b16 %v766, %v765
  %v904 = vpack.c.b16 %v768, %v767
  %v905 = vpack.c.b16 %v770, %v769
  %v906 = vpack.c.b16 %v772, %v771
  %v907 = vpack.c.b16 %v774, %v773
  %v908 = vpack.c.b16 %v776, %v775
  %v909 = vpack.c.b16 %v778, %v777
  %v910 = vpack.c.b16 %v780, %v779
  %v911 = vpack.c.b16 %v782, %v781
  %v912 = vpack.c.b16 %v784, %v783
  %v915 = vunpack.c.l.b16 %v271
  %v916 = vunpack.c.l.b16 %v272
  %v917 = vpack.c.b16 %v916, %v915
  %vm918 = vcmask 72704
  %v920 = vsel %vm918, %v785, 0
  %v923 = vsel %vm918, %v786, 0
  %v926 = vsel %vm918, %v787, 0
  %v929 = vsel %vm918, %v788, 0
  %v932 = vsel %vm918, %v789, 0
  %v935 = vsel %vm918, %v790, 0
  %v938 = vsel %vm918, %v791, 0
  %v941 = vsel %vm918, %v792, 0
  %v944 = vsel %vm918, %v793, 0
  %v947 = vsel %vm918, %v794, 0
  %v950 = vsel %vm918, %v795, 0
  %v953 = vsel %vm918, %v796, 0
  %v956 = vsel %vm918, %v797, 0
  %v959 = vsel %vm918, %v798, 0
  %v962 = vsel %vm918, %v799, 0
  %v965 = vsel %vm918, %v800, 0
  %v968 = vsel %vm918, %v801, 0
  %v971 = vsel %vm918, %v802, 0
  %v974 = vsel %vm918, %v803, 0
  %v977 = vsel %vm918, %v804, 0
  %v980 = vsel %vm918, %v805, 0
  %v983 = vsel %vm918, %v806, 0
  %v986 = vsel %vm918, %v807, 0
  %v989 = vsel %vm918, %v808, 0
  %v992 = vsel %vm918, %v809, 0
  %v995 = vsel %vm918, %v810, 0
  %v998 = vsel %vm918, %v811, 0
  %v1001 = vsel %vm918, %v812, 0
  %v1004 = vsel %vm918, %v813, 0
  %v1007 = vsel %vm918, %v814, 0
  %v1010 = vsel %vm918, %v815, 0
  %v1013 = vsel %vm918, %v816, 0
  %v1016 = vsel %vm918, %v817, 0
  %v1019 = vsel %vm918, %v818, 0
  %v1022 = vsel %vm918, %v819, 0
  %v1025 = vsel %vm918, %v820, 0
  %v1028 = vsel %vm918, %v821, 0
  %v1031 = vsel %vm918, %v822, 0
  %v1034 = vsel %vm918, %v823, 0
  %v1037 = vsel %vm918, %v824, 0
  %v1040 = vsel %vm918, %v825, 0
  %v1043 = vsel %vm918, %v826, 0
  %v1046 = vsel %vm918, %v827, 0
  %v1049 = vsel %vm918, %v828, 0
  %v1052 = vsel %vm918, %v829, 0
  %v1055 = vsel %vm918, %v830, 0
  %v1058 = vsel %vm918, %v831, 0
  %v1061 = vsel %vm918, %v832, 0
  %v1064 = vsel %vm918, %v833, 0
  %v1067 = vsel %vm918, %v834, 0
  %v1070 = vsel %vm918, %v835, 0
  %v1073 = vsel %vm918, %v836, 0
  %v1076 = vsel %vm918, %v837, 0
  %v1079 = vsel %vm918, %v838, 0
  %v1082 = vsel %vm918, %v839, 0
  %v1085 = vsel %vm918, %v840, 0
  %v1088 = vsel %vm918, %v841, 0
  %v1091 = vsel %vm918, %v842, 0
  %v1094 = vsel %vm918, %v843, 0
  %v1097 = vsel %vm918, %v844, 0
  %v1100 = vsel %vm918, %v845, 0
  %v1103 = vsel %vm918, %v846, 0
  %v1106 = vsel %vm918, %v847, 0
  %v1109 = vsel %vm918, %v848, 0
  %v1112 = vsel %vm918, %v849, 0
  %v1115 = vsel %vm918, %v850, 0
  %v1118 = vsel %vm918, %v851, 0
  %v1121 = vsel %vm918, %v852, 0
  %v1124 = vsel %vm918, %v853, 0
  %v1127 = vsel %vm918, %v854, 0
  %v1130 = vsel %vm918, %v855, 0
  %v1133 = vsel %vm918, %v856, 0
  %v1136 = vsel %vm918, %v857, 0
  %v1139 = vsel %vm918, %v858, 0
  %v1142 = vsel %vm918, %v859, 0
  %v1145 = vsel %vm918, %v860, 0
  %v1148 = vsel %vm918, %v861, 0
  %v1151 = vsel %vm918, %v862, 0
  %v1154 = vsel %vm918, %v863, 0
  %v1157 = vsel %vm918, %v864, 0
  %v1160 = vsel %vm918, %v865, 0
  %v1163 = vsel %vm918, %v866, 0
  %v1166 = vsel %vm918, %v867, 0
  %v1169 = vsel %vm918, %v868, 0
  %v1172 = vsel %vm918, %v869, 0
  %v1175 = vsel %vm918, %v870, 0
  %v1178 = vsel %vm918, %v871, 0
  %v1181 = vsel %vm918, %v872, 0
  %v1184 = vsel %vm918, %v873, 0
  %v1187 = vsel %vm918, %v874, 0
  %v1190 = vsel %vm918, %v875, 0
  %v1193 = vsel %vm918, %v876, 0
  %v1196 = vsel %vm918, %v877, 0
  %v1199 = vsel %vm918, %v878, 0
  %v1202 = vsel %vm918, %v879, 0
  %v1205 = vsel %vm918, %v880, 0
  %v1208 = vsel %vm918, %v881, 0
  %v1211 = vsel %vm918, %v882, 0
  %v1214 = vsel %vm918, %v883, 0
  %v1217 = vsel %vm918, %v884, 0
  %v1220 = vsel %vm918, %v885, 0
  %v1223 = vsel %vm918, %v886, 0
  %v1226 = vsel %vm918, %v887, 0
  %v1229 = vsel %vm918, %v888, 0
  %v1232 = vsel %vm918, %v889, 0
  %v1235 = vsel %vm918, %v890, 0
  %v1238 = vsel %vm918, %v891, 0
  %v1241 = vsel %vm918, %v892, 0
  %v1244 = vsel %vm918, %v893, 0
  %v1247 = vsel %vm918, %v894, 0
  %v1250 = vsel %vm918, %v895, 0
  %v1253 = vsel %vm918, %v896, 0
  %v1256 = vsel %vm918, %v897, 0
  %v1259 = vsel %vm918, %v898, 0
  %v1262 = vsel %vm918, %v899, 0
  %v1265 = vsel %vm918, %v900, 0
  %v1268 = vsel %vm918, %v901, 0
  %v1271 = vsel %vm918, %v902, 0
  %v1274 = vsel %vm918, %v903, 0
  %v1277 = vsel %vm918, %v904, 0
  %v1280 = vsel %vm918, %v905, 0
  %v1283 = vsel %vm918, %v906, 0
  %v1286 = vsel %vm918, %v907, 0
  %v1289 = vsel %vm918, %v908, 0
  %v1292 = vsel %vm918, %v909, 0
  %v1295 = vsel %vm918, %v910, 0
  %v1298 = vsel %vm918, %v911, 0
  %v1301 = vsel %vm918, %v912, 0
  %vm1303 = vcmask 1043456
  %vm1304 = vcmask 1044480
  %v1305 = vsel %vm1303, 4294967295, 65535
  %v1306 = vsel %vm1304, %v1305, 0
  %v1308 = vand.u32 %v917, %v1306
  %1310 = vmatprep.subr.bf16.mxu0 0
  %1311 = vmatpush1.bf16.msra.mxu0 0
  %1312 = vmatprep.subr.bf16.mxu0 0
  %1313 = vmatpush1.bf16.msra.mxu0 0
  %1314 = vmatprep.subr.bf16.mxu0 0
  %1315 = vmatpush1.bf16.msra.mxu0 0
  %1316 = vmatprep.subr.bf16.mxu0 0
  %1317 = vmatpush1.bf16.msra.mxu0 0
  %1318 = vmatprep.subr.bf16.mxu0 0
  %1319 = vmatpush1.bf16.msra.mxu0 0
  %1320 = vmatprep.subr.bf16.mxu0 0
  %1321 = vmatpush1.bf16.msra.mxu0 0
  %1322 = vmatprep.subr.bf16.mxu0 0
  %1323 = vmatpush1.bf16.msra.mxu0 0
  %1324 = vmatprep.subr.bf16.mxu0 0
  %1325 = vmatpush1.bf16.msra.mxu0 %v1308
  %1326 = vmatprep.subr.bf16.mxu0 0
  %1327 = vmatpush2.bf16.msra.mxu0 0
  %1328 = vmatprep.subr.bf16.mxu0 0
  %1329 = vmatpush2.bf16.msra.mxu0 0
  %1330 = vmatprep.subr.bf16.mxu0 0
  %1331 = vmatpush2.bf16.msra.mxu0 0
  %1332 = vmatprep.subr.bf16.mxu0 0
  %1333 = vmatpush2.bf16.msra.mxu0 0
  %1334 = vmatprep.subr.bf16.mxu0 0
  %1335 = vmatpush2.bf16.msra.mxu0 0
  %1336 = vmatprep.subr.bf16.mxu0 0
  %1337 = vmatpush2.bf16.msra.mxu0 0
  %1338 = vmatprep.subr.bf16.mxu0 0
  %1339 = vmatpush2.bf16.msra.mxu0 0
  %1340 = vmatprep.subr.bf16.mxu0 0
  %1341 = vmatpush2.bf16.msra.mxu0 0
  %1342 = vmatprep.mubr.bf16.mxu0 0
  %1343 = vmatmul.mubr.bf16.gmra.mxu0 %v920
  %v1344 = vpop.f32.mrf.mxu0
  %v1345 = vadd.f32 0.0, %v1344
  %v1346 = vpop.f32.mrf.mxu0
  %v1347 = vpop.f32.mrf.mxu0
  %v1348 = vadd.f32 0.0, %v1347
  %v1349 = vpop.f32.mrf.mxu0
  %1350 = vmatprep.mubr.bf16.mxu0 0
  %1351 = vmatmul.mubr.bf16.gmra.mxu0 %v923
  %v1352 = vpop.f32.mrf.mxu0
  %v1353 = vadd.f32 0.0, %v1352
  %v1354 = vpop.f32.mrf.mxu0
  %v1355 = vpop.f32.mrf.mxu0
  %v1356 = vadd.f32 0.0, %v1355
  %v1357 = vpop.f32.mrf.mxu0
  %1358 = vmatprep.mubr.bf16.mxu0 0
  %1359 = vmatmul.mubr.bf16.gmra.mxu0 %v926
  %v1360 = vpop.f32.mrf.mxu0
  %v1361 = vadd.f32 0.0, %v1360
  %v1362 = vpop.f32.mrf.mxu0
  %v1363 = vpop.f32.mrf.mxu0
  %v1364 = vadd.f32 0.0, %v1363
  %v1365 = vpop.f32.mrf.mxu0
  %1366 = vmatprep.mubr.bf16.mxu0 0
  %1367 = vmatmul.mubr.bf16.gmra.mxu0 %v929
  %v1368 = vpop.f32.mrf.mxu0
  %v1369 = vadd.f32 0.0, %v1368
  %v1370 = vpop.f32.mrf.mxu0
  %v1371 = vpop.f32.mrf.mxu0
  %v1372 = vadd.f32 0.0, %v1371
  %v1373 = vpop.f32.mrf.mxu0
  %1374 = vmatprep.mubr.bf16.mxu0 0
  %1375 = vmatmul.mubr.bf16.gmra.mxu0 %v932
  %v1376 = vpop.f32.mrf.mxu0
  %v1377 = vadd.f32 0.0, %v1376
  %v1378 = vpop.f32.mrf.mxu0
  %v1379 = vpop.f32.mrf.mxu0
  %v1380 = vadd.f32 0.0, %v1379
  %v1381 = vpop.f32.mrf.mxu0
  %1382 = vmatprep.mubr.bf16.mxu0 0
  %1383 = vmatmul.mubr.bf16.gmra.mxu0 %v935
  %v1384 = vpop.f32.mrf.mxu0
  %v1385 = vadd.f32 0.0, %v1384
  %v1386 = vpop.f32.mrf.mxu0
  %v1387 = vpop.f32.mrf.mxu0
  %v1388 = vadd.f32 0.0, %v1387
  %v1389 = vpop.f32.mrf.mxu0
  %1390 = vmatprep.mubr.bf16.mxu0 0
  %1391 = vmatmul.mubr.bf16.gmra.mxu0 %v938
  %v1392 = vpop.f32.mrf.mxu0
  %v1393 = vadd.f32 0.0, %v1392
  %v1394 = vpop.f32.mrf.mxu0
  %v1395 = vpop.f32.mrf.mxu0
  %v1396 = vadd.f32 0.0, %v1395
  %v1397 = vpop.f32.mrf.mxu0
  %1398 = vmatprep.mubr.bf16.mxu0 0
  %1399 = vmatmul.mubr.bf16.gmra.mxu0 %v941
  %v1400 = vpop.f32.mrf.mxu0
  %v1401 = vadd.f32 0.0, %v1400
  %v1402 = vpop.f32.mrf.mxu0
  %v1403 = vpop.f32.mrf.mxu0
  %v1404 = vadd.f32 0.0, %v1403
  %v1405 = vpop.f32.mrf.mxu0
  %1406 = vmatprep.mubr.bf16.mxu0 0
  %1407 = vmatmul.mubr.bf16.gmra.mxu0 %v944
  %v1408 = vpop.f32.mrf.mxu0
  %v1409 = vadd.f32 0.0, %v1408
  %v1410 = vpop.f32.mrf.mxu0
  %v1411 = vpop.f32.mrf.mxu0
  %v1412 = vadd.f32 0.0, %v1411
  %v1413 = vpop.f32.mrf.mxu0
  %1414 = vmatprep.mubr.bf16.mxu0 0
  %1415 = vmatmul.mubr.bf16.gmra.mxu0 %v947
  %v1416 = vpop.f32.mrf.mxu0
  %v1417 = vadd.f32 0.0, %v1416
  %v1418 = vpop.f32.mrf.mxu0
  %v1419 = vpop.f32.mrf.mxu0
  %v1420 = vadd.f32 0.0, %v1419
  %v1421 = vpop.f32.mrf.mxu0
  %1422 = vmatprep.mubr.bf16.mxu0 0
  %1423 = vmatmul.mubr.bf16.gmra.mxu0 %v950
  %v1424 = vpop.f32.mrf.mxu0
  %v1425 = vadd.f32 0.0, %v1424
  %v1426 = vpop.f32.mrf.mxu0
  %v1427 = vpop.f32.mrf.mxu0
  %v1428 = vadd.f32 0.0, %v1427
  %v1429 = vpop.f32.mrf.mxu0
  %1430 = vmatprep.mubr.bf16.mxu0 0
  %1431 = vmatmul.mubr.bf16.gmra.mxu0 %v953
  %v1432 = vpop.f32.mrf.mxu0
  %v1433 = vadd.f32 0.0, %v1432
  %v1434 = vpop.f32.mrf.mxu0
  %v1435 = vpop.f32.mrf.mxu0
  %v1436 = vadd.f32 0.0, %v1435
  %v1437 = vpop.f32.mrf.mxu0
  %1438 = vmatprep.mubr.bf16.mxu0 0
  %1439 = vmatmul.mubr.bf16.gmra.mxu0 %v956
  %v1440 = vpop.f32.mrf.mxu0
  %v1441 = vadd.f32 0.0, %v1440
  %v1442 = vpop.f32.mrf.mxu0
  %v1443 = vpop.f32.mrf.mxu0
  %v1444 = vadd.f32 0.0, %v1443
  %v1445 = vpop.f32.mrf.mxu0
  %1446 = vmatprep.mubr.bf16.mxu0 0
  %1447 = vmatmul.mubr.bf16.gmra.mxu0 %v959
  %v1448 = vpop.f32.mrf.mxu0
  %v1449 = vadd.f32 0.0, %v1448
  %v1450 = vpop.f32.mrf.mxu0
  %v1451 = vpop.f32.mrf.mxu0
  %v1452 = vadd.f32 0.0, %v1451
  %v1453 = vpop.f32.mrf.mxu0
  %1454 = vmatprep.mubr.bf16.mxu0 0
  %1455 = vmatmul.mubr.bf16.gmra.mxu0 %v962
  %v1456 = vpop.f32.mrf.mxu0
  %v1457 = vadd.f32 0.0, %v1456
  %v1458 = vpop.f32.mrf.mxu0
  %v1459 = vpop.f32.mrf.mxu0
  %v1460 = vadd.f32 0.0, %v1459
  %v1461 = vpop.f32.mrf.mxu0
  %1462 = vmatprep.mubr.bf16.mxu0 0
  %1463 = vmatmul.mubr.bf16.gmra.mxu0 %v965
  %v1464 = vpop.f32.mrf.mxu0
  %v1465 = vadd.f32 0.0, %v1464
  %v1466 = vpop.f32.mrf.mxu0
  %v1467 = vpop.f32.mrf.mxu0
  %v1468 = vadd.f32 0.0, %v1467
  %v1469 = vpop.f32.mrf.mxu0
  %1470 = vmatprep.mubr.bf16.mxu0 0
  %1471 = vmatmul.mubr.bf16.gmra.mxu0 %v968
  %v1472 = vpop.f32.mrf.mxu0
  %v1473 = vadd.f32 0.0, %v1472
  %v1474 = vpop.f32.mrf.mxu0
  %v1475 = vpop.f32.mrf.mxu0
  %v1476 = vadd.f32 0.0, %v1475
  %v1477 = vpop.f32.mrf.mxu0
  %1478 = vmatprep.mubr.bf16.mxu0 0
  %1479 = vmatmul.mubr.bf16.gmra.mxu0 %v971
  %v1480 = vpop.f32.mrf.mxu0
  %v1481 = vadd.f32 0.0, %v1480
  %v1482 = vpop.f32.mrf.mxu0
  %v1483 = vpop.f32.mrf.mxu0
  %v1484 = vadd.f32 0.0, %v1483
  %v1485 = vpop.f32.mrf.mxu0
  %1486 = vmatprep.mubr.bf16.mxu0 0
  %1487 = vmatmul.mubr.bf16.gmra.mxu0 %v974
  %v1488 = vpop.f32.mrf.mxu0
  %v1489 = vadd.f32 0.0, %v1488
  %v1490 = vpop.f32.mrf.mxu0
  %v1491 = vpop.f32.mrf.mxu0
  %v1492 = vadd.f32 0.0, %v1491
  %v1493 = vpop.f32.mrf.mxu0
  %1494 = vmatprep.mubr.bf16.mxu0 0
  %1495 = vmatmul.mubr.bf16.gmra.mxu0 %v977
  %v1496 = vpop.f32.mrf.mxu0
  %v1497 = vadd.f32 0.0, %v1496
  %v1498 = vpop.f32.mrf.mxu0
  %v1499 = vpop.f32.mrf.mxu0
  %v1500 = vadd.f32 0.0, %v1499
  %v1501 = vpop.f32.mrf.mxu0
  %1502 = vmatprep.mubr.bf16.mxu0 0
  %1503 = vmatmul.mubr.bf16.gmra.mxu0 %v980
  %v1504 = vpop.f32.mrf.mxu0
  %v1505 = vadd.f32 0.0, %v1504
  %v1506 = vpop.f32.mrf.mxu0
  %v1507 = vpop.f32.mrf.mxu0
  %v1508 = vadd.f32 0.0, %v1507
  %v1509 = vpop.f32.mrf.mxu0
  %1510 = vmatprep.mubr.bf16.mxu0 0
  %1511 = vmatmul.mubr.bf16.gmra.mxu0 %v983
  %v1512 = vpop.f32.mrf.mxu0
  %v1513 = vadd.f32 0.0, %v1512
  %v1514 = vpop.f32.mrf.mxu0
  %v1515 = vpop.f32.mrf.mxu0
  %v1516 = vadd.f32 0.0, %v1515
  %v1517 = vpop.f32.mrf.mxu0
  %1518 = vmatprep.mubr.bf16.mxu0 0
  %1519 = vmatmul.mubr.bf16.gmra.mxu0 %v986
  %v1520 = vpop.f32.mrf.mxu0
  %v1521 = vadd.f32 0.0, %v1520
  %v1522 = vpop.f32.mrf.mxu0
  %v1523 = vpop.f32.mrf.mxu0
  %v1524 = vadd.f32 0.0, %v1523
  %v1525 = vpop.f32.mrf.mxu0
  %1526 = vmatprep.mubr.bf16.mxu0 0
  %1527 = vmatmul.mubr.bf16.gmra.mxu0 %v989
  %v1528 = vpop.f32.mrf.mxu0
  %v1529 = vadd.f32 0.0, %v1528
  %v1530 = vpop.f32.mrf.mxu0
  %v1531 = vpop.f32.mrf.mxu0
  %v1532 = vadd.f32 0.0, %v1531
  %v1533 = vpop.f32.mrf.mxu0
  %1534 = vmatprep.mubr.bf16.mxu0 0
  %1535 = vmatmul.mubr.bf16.gmra.mxu0 %v992
  %v1536 = vpop.f32.mrf.mxu0
  %v1537 = vadd.f32 0.0, %v1536
  %v1538 = vpop.f32.mrf.mxu0
  %v1539 = vpop.f32.mrf.mxu0
  %v1540 = vadd.f32 0.0, %v1539
  %v1541 = vpop.f32.mrf.mxu0
  %1542 = vmatprep.mubr.bf16.mxu0 0
  %1543 = vmatmul.mubr.bf16.gmra.mxu0 %v995
  %v1544 = vpop.f32.mrf.mxu0
  %v1545 = vadd.f32 0.0, %v1544
  %v1546 = vpop.f32.mrf.mxu0
  %v1547 = vpop.f32.mrf.mxu0
  %v1548 = vadd.f32 0.0, %v1547
  %v1549 = vpop.f32.mrf.mxu0
  %1550 = vmatprep.mubr.bf16.mxu0 0
  %1551 = vmatmul.mubr.bf16.gmra.mxu0 %v998
  %v1552 = vpop.f32.mrf.mxu0
  %v1553 = vadd.f32 0.0, %v1552
  %v1554 = vpop.f32.mrf.mxu0
  %v1555 = vpop.f32.mrf.mxu0
  %v1556 = vadd.f32 0.0, %v1555
  %v1557 = vpop.f32.mrf.mxu0
  %1558 = vmatprep.mubr.bf16.mxu0 0
  %1559 = vmatmul.mubr.bf16.gmra.mxu0 %v1001
  %v1560 = vpop.f32.mrf.mxu0
  %v1561 = vadd.f32 0.0, %v1560
  %v1562 = vpop.f32.mrf.mxu0
  %v1563 = vpop.f32.mrf.mxu0
  %v1564 = vadd.f32 0.0, %v1563
  %v1565 = vpop.f32.mrf.mxu0
  %1566 = vmatprep.mubr.bf16.mxu0 0
  %1567 = vmatmul.mubr.bf16.gmra.mxu0 %v1004
  %v1568 = vpop.f32.mrf.mxu0
  %v1569 = vadd.f32 0.0, %v1568
  %v1570 = vpop.f32.mrf.mxu0
  %v1571 = vpop.f32.mrf.mxu0
  %v1572 = vadd.f32 0.0, %v1571
  %v1573 = vpop.f32.mrf.mxu0
  %1574 = vmatprep.mubr.bf16.mxu0 0
  %1575 = vmatmul.mubr.bf16.gmra.mxu0 %v1007
  %v1576 = vpop.f32.mrf.mxu0
  %v1577 = vadd.f32 0.0, %v1576
  %v1578 = vpop.f32.mrf.mxu0
  %v1579 = vpop.f32.mrf.mxu0
  %v1580 = vadd.f32 0.0, %v1579
  %v1581 = vpop.f32.mrf.mxu0
  %1582 = vmatprep.mubr.bf16.mxu0 0
  %1583 = vmatmul.mubr.bf16.gmra.mxu0 %v1010
  %v1584 = vpop.f32.mrf.mxu0
  %v1585 = vadd.f32 0.0, %v1584
  %v1586 = vpop.f32.mrf.mxu0
  %v1587 = vpop.f32.mrf.mxu0
  %v1588 = vadd.f32 0.0, %v1587
  %v1589 = vpop.f32.mrf.mxu0
  %1590 = vmatprep.mubr.bf16.mxu0 0
  %1591 = vmatmul.mubr.bf16.gmra.mxu0 %v1013
  %v1592 = vpop.f32.mrf.mxu0
  %v1593 = vadd.f32 0.0, %v1592
  %v1594 = vpop.f32.mrf.mxu0
  %v1595 = vpop.f32.mrf.mxu0
  %v1596 = vadd.f32 0.0, %v1595
  %v1597 = vpop.f32.mrf.mxu0
  %1598 = vmatprep.mubr.bf16.mxu0 0
  %1599 = vmatmul.mubr.bf16.gmra.mxu0 %v1016
  %v1600 = vpop.f32.mrf.mxu0
  %v1601 = vadd.f32 0.0, %v1600
  %v1602 = vpop.f32.mrf.mxu0
  %v1603 = vpop.f32.mrf.mxu0
  %v1604 = vadd.f32 0.0, %v1603
  %v1605 = vpop.f32.mrf.mxu0
  %1606 = vmatprep.mubr.bf16.mxu0 0
  %1607 = vmatmul.mubr.bf16.gmra.mxu0 %v1019
  %v1608 = vpop.f32.mrf.mxu0
  %v1609 = vadd.f32 0.0, %v1608
  %v1610 = vpop.f32.mrf.mxu0
  %v1611 = vpop.f32.mrf.mxu0
  %v1612 = vadd.f32 0.0, %v1611
  %v1613 = vpop.f32.mrf.mxu0
  %1614 = vmatprep.mubr.bf16.mxu0 0
  %1615 = vmatmul.mubr.bf16.gmra.mxu0 %v1022
  %v1616 = vpop.f32.mrf.mxu0
  %v1617 = vadd.f32 0.0, %v1616
  %v1618 = vpop.f32.mrf.mxu0
  %v1619 = vpop.f32.mrf.mxu0
  %v1620 = vadd.f32 0.0, %v1619
  %v1621 = vpop.f32.mrf.mxu0
  %1622 = vmatprep.mubr.bf16.mxu0 0
  %1623 = vmatmul.mubr.bf16.gmra.mxu0 %v1025
  %v1624 = vpop.f32.mrf.mxu0
  %v1625 = vadd.f32 0.0, %v1624
  %v1626 = vpop.f32.mrf.mxu0
  %v1627 = vpop.f32.mrf.mxu0
  %v1628 = vadd.f32 0.0, %v1627
  %v1629 = vpop.f32.mrf.mxu0
  %1630 = vmatprep.mubr.bf16.mxu0 0
  %1631 = vmatmul.mubr.bf16.gmra.mxu0 %v1028
  %v1632 = vpop.f32.mrf.mxu0
  %v1633 = vadd.f32 0.0, %v1632
  %v1634 = vpop.f32.mrf.mxu0
  %v1635 = vpop.f32.mrf.mxu0
  %v1636 = vadd.f32 0.0, %v1635
  %v1637 = vpop.f32.mrf.mxu0
  %1638 = vmatprep.mubr.bf16.mxu0 0
  %1639 = vmatmul.mubr.bf16.gmra.mxu0 %v1031
  %v1640 = vpop.f32.mrf.mxu0
  %v1641 = vadd.f32 0.0, %v1640
  %v1642 = vpop.f32.mrf.mxu0
  %v1643 = vpop.f32.mrf.mxu0
  %v1644 = vadd.f32 0.0, %v1643
  %v1645 = vpop.f32.mrf.mxu0
  %1646 = vmatprep.mubr.bf16.mxu0 0
  %1647 = vmatmul.mubr.bf16.gmra.mxu0 %v1034
  %v1648 = vpop.f32.mrf.mxu0
  %v1649 = vadd.f32 0.0, %v1648
  %v1650 = vpop.f32.mrf.mxu0
  %v1651 = vpop.f32.mrf.mxu0
  %v1652 = vadd.f32 0.0, %v1651
  %v1653 = vpop.f32.mrf.mxu0
  %1654 = vmatprep.mubr.bf16.mxu0 0
  %1655 = vmatmul.mubr.bf16.gmra.mxu0 %v1037
  %v1656 = vpop.f32.mrf.mxu0
  %v1657 = vadd.f32 0.0, %v1656
  %v1658 = vpop.f32.mrf.mxu0
  %v1659 = vpop.f32.mrf.mxu0
  %v1660 = vadd.f32 0.0, %v1659
  %v1661 = vpop.f32.mrf.mxu0
  %1662 = vmatprep.mubr.bf16.mxu0 0
  %1663 = vmatmul.mubr.bf16.gmra.mxu0 %v1040
  %v1664 = vpop.f32.mrf.mxu0
  %v1665 = vadd.f32 0.0, %v1664
  %v1666 = vpop.f32.mrf.mxu0
  %v1667 = vpop.f32.mrf.mxu0
  %v1668 = vadd.f32 0.0, %v1667
  %v1669 = vpop.f32.mrf.mxu0
  %1670 = vmatprep.mubr.bf16.mxu0 0
  %1671 = vmatmul.mubr.bf16.gmra.mxu0 %v1043
  %v1672 = vpop.f32.mrf.mxu0
  %v1673 = vadd.f32 0.0, %v1672
  %v1674 = vpop.f32.mrf.mxu0
  %v1675 = vpop.f32.mrf.mxu0
  %v1676 = vadd.f32 0.0, %v1675
  %v1677 = vpop.f32.mrf.mxu0
  %1678 = vmatprep.mubr.bf16.mxu0 0
  %1679 = vmatmul.mubr.bf16.gmra.mxu0 %v1046
  %v1680 = vpop.f32.mrf.mxu0
  %v1681 = vadd.f32 0.0, %v1680
  %v1682 = vpop.f32.mrf.mxu0
  %v1683 = vpop.f32.mrf.mxu0
  %v1684 = vadd.f32 0.0, %v1683
  %v1685 = vpop.f32.mrf.mxu0
  %1686 = vmatprep.mubr.bf16.mxu0 0
  %1687 = vmatmul.mubr.bf16.gmra.mxu0 %v1049
  %v1688 = vpop.f32.mrf.mxu0
  %v1689 = vadd.f32 0.0, %v1688
  %v1690 = vpop.f32.mrf.mxu0
  %v1691 = vpop.f32.mrf.mxu0
  %v1692 = vadd.f32 0.0, %v1691
  %v1693 = vpop.f32.mrf.mxu0
  %1694 = vmatprep.mubr.bf16.mxu0 0
  %1695 = vmatmul.mubr.bf16.gmra.mxu0 %v1052
  %v1696 = vpop.f32.mrf.mxu0
  %v1697 = vadd.f32 0.0, %v1696
  %v1698 = vpop.f32.mrf.mxu0
  %v1699 = vpop.f32.mrf.mxu0
  %v1700 = vadd.f32 0.0, %v1699
  %v1701 = vpop.f32.mrf.mxu0
  %1702 = vmatprep.mubr.bf16.mxu0 0
  %1703 = vmatmul.mubr.bf16.gmra.mxu0 %v1055
  %v1704 = vpop.f32.mrf.mxu0
  %v1705 = vadd.f32 0.0, %v1704
  %v1706 = vpop.f32.mrf.mxu0
  %v1707 = vpop.f32.mrf.mxu0
  %v1708 = vadd.f32 0.0, %v1707
  %v1709 = vpop.f32.mrf.mxu0
  %1710 = vmatprep.mubr.bf16.mxu0 0
  %1711 = vmatmul.mubr.bf16.gmra.mxu0 %v1058
  %v1712 = vpop.f32.mrf.mxu0
  %v1713 = vadd.f32 0.0, %v1712
  %v1714 = vpop.f32.mrf.mxu0
  %v1715 = vpop.f32.mrf.mxu0
  %v1716 = vadd.f32 0.0, %v1715
  %v1717 = vpop.f32.mrf.mxu0
  %1718 = vmatprep.mubr.bf16.mxu0 0
  %1719 = vmatmul.mubr.bf16.gmra.mxu0 %v1061
  %v1720 = vpop.f32.mrf.mxu0
  %v1721 = vadd.f32 0.0, %v1720
  %v1722 = vpop.f32.mrf.mxu0
  %v1723 = vpop.f32.mrf.mxu0
  %v1724 = vadd.f32 0.0, %v1723
  %v1725 = vpop.f32.mrf.mxu0
  %1726 = vmatprep.mubr.bf16.mxu0 0
  %1727 = vmatmul.mubr.bf16.gmra.mxu0 %v1064
  %v1728 = vpop.f32.mrf.mxu0
  %v1729 = vadd.f32 0.0, %v1728
  %v1730 = vpop.f32.mrf.mxu0
  %v1731 = vpop.f32.mrf.mxu0
  %v1732 = vadd.f32 0.0, %v1731
  %v1733 = vpop.f32.mrf.mxu0
  %1734 = vmatprep.mubr.bf16.mxu0 0
  %1735 = vmatmul.mubr.bf16.gmra.mxu0 %v1067
  %v1736 = vpop.f32.mrf.mxu0
  %v1737 = vadd.f32 0.0, %v1736
  %v1738 = vpop.f32.mrf.mxu0
  %v1739 = vpop.f32.mrf.mxu0
  %v1740 = vadd.f32 0.0, %v1739
  %v1741 = vpop.f32.mrf.mxu0
  %1742 = vmatprep.mubr.bf16.mxu0 0
  %1743 = vmatmul.mubr.bf16.gmra.mxu0 %v1070
  %v1744 = vpop.f32.mrf.mxu0
  %v1745 = vadd.f32 0.0, %v1744
  %v1746 = vpop.f32.mrf.mxu0
  %v1747 = vpop.f32.mrf.mxu0
  %v1748 = vadd.f32 0.0, %v1747
  %v1749 = vpop.f32.mrf.mxu0
  %1750 = vmatprep.mubr.bf16.mxu0 0
  %1751 = vmatmul.mubr.bf16.gmra.mxu0 %v1073
  %v1752 = vpop.f32.mrf.mxu0
  %v1753 = vadd.f32 0.0, %v1752
  %v1754 = vpop.f32.mrf.mxu0
  %v1755 = vpop.f32.mrf.mxu0
  %v1756 = vadd.f32 0.0, %v1755
  %v1757 = vpop.f32.mrf.mxu0
  %1758 = vmatprep.mubr.bf16.mxu0 0
  %1759 = vmatmul.mubr.bf16.gmra.mxu0 %v1076
  %v1760 = vpop.f32.mrf.mxu0
  %v1761 = vadd.f32 0.0, %v1760
  %v1762 = vpop.f32.mrf.mxu0
  %v1763 = vpop.f32.mrf.mxu0
  %v1764 = vadd.f32 0.0, %v1763
  %v1765 = vpop.f32.mrf.mxu0
  %1766 = vmatprep.mubr.bf16.mxu0 0
  %1767 = vmatmul.mubr.bf16.gmra.mxu0 %v1079
  %v1768 = vpop.f32.mrf.mxu0
  %v1769 = vadd.f32 0.0, %v1768
  %v1770 = vpop.f32.mrf.mxu0
  %v1771 = vpop.f32.mrf.mxu0
  %v1772 = vadd.f32 0.0, %v1771
  %v1773 = vpop.f32.mrf.mxu0
  %1774 = vmatprep.mubr.bf16.mxu0 0
  %1775 = vmatmul.mubr.bf16.gmra.mxu0 %v1082
  %v1776 = vpop.f32.mrf.mxu0
  %v1777 = vadd.f32 0.0, %v1776
  %v1778 = vpop.f32.mrf.mxu0
  %v1779 = vpop.f32.mrf.mxu0
  %v1780 = vadd.f32 0.0, %v1779
  %v1781 = vpop.f32.mrf.mxu0
  %1782 = vmatprep.mubr.bf16.mxu0 0
  %1783 = vmatmul.mubr.bf16.gmra.mxu0 %v1085
  %v1784 = vpop.f32.mrf.mxu0
  %v1785 = vadd.f32 0.0, %v1784
  %v1786 = vpop.f32.mrf.mxu0
  %v1787 = vpop.f32.mrf.mxu0
  %v1788 = vadd.f32 0.0, %v1787
  %v1789 = vpop.f32.mrf.mxu0
  %1790 = vmatprep.mubr.bf16.mxu0 0
  %1791 = vmatmul.mubr.bf16.gmra.mxu0 %v1088
  %v1792 = vpop.f32.mrf.mxu0
  %v1793 = vadd.f32 0.0, %v1792
  %v1794 = vpop.f32.mrf.mxu0
  %v1795 = vpop.f32.mrf.mxu0
  %v1796 = vadd.f32 0.0, %v1795
  %v1797 = vpop.f32.mrf.mxu0
  %1798 = vmatprep.mubr.bf16.mxu0 0
  %1799 = vmatmul.mubr.bf16.gmra.mxu0 %v1091
  %v1800 = vpop.f32.mrf.mxu0
  %v1801 = vadd.f32 0.0, %v1800
  %v1802 = vpop.f32.mrf.mxu0
  %v1803 = vpop.f32.mrf.mxu0
  %v1804 = vadd.f32 0.0, %v1803
  %v1805 = vpop.f32.mrf.mxu0
  %1806 = vmatprep.mubr.bf16.mxu0 0
  %1807 = vmatmul.mubr.bf16.gmra.mxu0 %v1094
  %v1808 = vpop.f32.mrf.mxu0
  %v1809 = vadd.f32 0.0, %v1808
  %v1810 = vpop.f32.mrf.mxu0
  %v1811 = vpop.f32.mrf.mxu0
  %v1812 = vadd.f32 0.0, %v1811
  %v1813 = vpop.f32.mrf.mxu0
  %1814 = vmatprep.mubr.bf16.mxu0 0
  %1815 = vmatmul.mubr.bf16.gmra.mxu0 %v1097
  %v1816 = vpop.f32.mrf.mxu0
  %v1817 = vadd.f32 0.0, %v1816
  %v1818 = vpop.f32.mrf.mxu0
  %v1819 = vpop.f32.mrf.mxu0
  %v1820 = vadd.f32 0.0, %v1819
  %v1821 = vpop.f32.mrf.mxu0
  %1822 = vmatprep.mubr.bf16.mxu0 0
  %1823 = vmatmul.mubr.bf16.gmra.mxu0 %v1100
  %v1824 = vpop.f32.mrf.mxu0
  %v1825 = vadd.f32 0.0, %v1824
  %v1826 = vpop.f32.mrf.mxu0
  %v1827 = vpop.f32.mrf.mxu0
  %v1828 = vadd.f32 0.0, %v1827
  %v1829 = vpop.f32.mrf.mxu0
  %1830 = vmatprep.mubr.bf16.mxu0 0
  %1831 = vmatmul.mubr.bf16.gmra.mxu0 %v1103
  %v1832 = vpop.f32.mrf.mxu0
  %v1833 = vadd.f32 0.0, %v1832
  %v1834 = vpop.f32.mrf.mxu0
  %v1835 = vpop.f32.mrf.mxu0
  %v1836 = vadd.f32 0.0, %v1835
  %v1837 = vpop.f32.mrf.mxu0
  %1838 = vmatprep.mubr.bf16.mxu0 0
  %1839 = vmatmul.mubr.bf16.gmra.mxu0 %v1106
  %v1840 = vpop.f32.mrf.mxu0
  %v1841 = vadd.f32 0.0, %v1840
  %v1842 = vpop.f32.mrf.mxu0
  %v1843 = vpop.f32.mrf.mxu0
  %v1844 = vadd.f32 0.0, %v1843
  %v1845 = vpop.f32.mrf.mxu0
  %1846 = vmatprep.mubr.bf16.mxu0 0
  %1847 = vmatmul.mubr.bf16.gmra.mxu0 %v1109
  %v1848 = vpop.f32.mrf.mxu0
  %v1849 = vadd.f32 0.0, %v1848
  %v1850 = vpop.f32.mrf.mxu0
  %v1851 = vpop.f32.mrf.mxu0
  %v1852 = vadd.f32 0.0, %v1851
  %v1853 = vpop.f32.mrf.mxu0
  %1854 = vmatprep.mubr.bf16.mxu0 0
  %1855 = vmatmul.mubr.bf16.gmra.mxu0 %v1112
  %v1856 = vpop.f32.mrf.mxu0
  %v1857 = vadd.f32 0.0, %v1856
  %v1858 = vpop.f32.mrf.mxu0
  %v1859 = vpop.f32.mrf.mxu0
  %v1860 = vadd.f32 0.0, %v1859
  %v1861 = vpop.f32.mrf.mxu0
  %1862 = vmatprep.mubr.bf16.mxu0 0
  %1863 = vmatmul.mubr.bf16.gmra.mxu0 %v1115
  %v1864 = vpop.f32.mrf.mxu0
  %v1865 = vadd.f32 0.0, %v1864
  %v1866 = vpop.f32.mrf.mxu0
  %v1867 = vpop.f32.mrf.mxu0
  %v1868 = vadd.f32 0.0, %v1867
  %v1869 = vpop.f32.mrf.mxu0
  %1870 = vmatprep.mubr.bf16.mxu0 0
  %1871 = vmatmul.mubr.bf16.gmra.mxu0 %v1118
  %v1872 = vpop.f32.mrf.mxu0
  %v1873 = vadd.f32 0.0, %v1872
  %v1874 = vpop.f32.mrf.mxu0
  %v1875 = vpop.f32.mrf.mxu0
  %v1876 = vadd.f32 0.0, %v1875
  %v1877 = vpop.f32.mrf.mxu0
  %1878 = vmatprep.mubr.bf16.mxu0 0
  %1879 = vmatmul.mubr.bf16.gmra.mxu0 %v1121
  %v1880 = vpop.f32.mrf.mxu0
  %v1881 = vadd.f32 0.0, %v1880
  %v1882 = vpop.f32.mrf.mxu0
  %v1883 = vpop.f32.mrf.mxu0
  %v1884 = vadd.f32 0.0, %v1883
  %v1885 = vpop.f32.mrf.mxu0
  %1886 = vmatprep.mubr.bf16.mxu0 0
  %1887 = vmatmul.mubr.bf16.gmra.mxu0 %v1124
  %v1888 = vpop.f32.mrf.mxu0
  %v1889 = vadd.f32 0.0, %v1888
  %v1890 = vpop.f32.mrf.mxu0
  %v1891 = vpop.f32.mrf.mxu0
  %v1892 = vadd.f32 0.0, %v1891
  %v1893 = vpop.f32.mrf.mxu0
  %1894 = vmatprep.mubr.bf16.mxu0 0
  %1895 = vmatmul.mubr.bf16.gmra.mxu0 %v1127
  %v1896 = vpop.f32.mrf.mxu0
  %v1897 = vadd.f32 0.0, %v1896
  %v1898 = vpop.f32.mrf.mxu0
  %v1899 = vpop.f32.mrf.mxu0
  %v1900 = vadd.f32 0.0, %v1899
  %v1901 = vpop.f32.mrf.mxu0
  %1902 = vmatprep.mubr.bf16.mxu0 0
  %1903 = vmatmul.mubr.bf16.gmra.mxu0 %v1130
  %v1904 = vpop.f32.mrf.mxu0
  %v1905 = vadd.f32 0.0, %v1904
  %v1906 = vpop.f32.mrf.mxu0
  %v1907 = vpop.f32.mrf.mxu0
  %v1908 = vadd.f32 0.0, %v1907
  %v1909 = vpop.f32.mrf.mxu0
  %1910 = vmatprep.mubr.bf16.mxu0 0
  %1911 = vmatmul.mubr.bf16.gmra.mxu0 %v1133
  %v1912 = vpop.f32.mrf.mxu0
  %v1913 = vadd.f32 0.0, %v1912
  %v1914 = vpop.f32.mrf.mxu0
  %v1915 = vpop.f32.mrf.mxu0
  %v1916 = vadd.f32 0.0, %v1915
  %v1917 = vpop.f32.mrf.mxu0
  %1918 = vmatprep.mubr.bf16.mxu0 0
  %1919 = vmatmul.mubr.bf16.gmra.mxu0 %v1136
  %v1920 = vpop.f32.mrf.mxu0
  %v1921 = vadd.f32 0.0, %v1920
  %v1922 = vpop.f32.mrf.mxu0
  %v1923 = vpop.f32.mrf.mxu0
  %v1924 = vadd.f32 0.0, %v1923
  %v1925 = vpop.f32.mrf.mxu0
  %1926 = vmatprep.mubr.bf16.mxu0 0
  %1927 = vmatmul.mubr.bf16.gmra.mxu0 %v1139
  %v1928 = vpop.f32.mrf.mxu0
  %v1929 = vadd.f32 0.0, %v1928
  %v1930 = vpop.f32.mrf.mxu0
  %v1931 = vpop.f32.mrf.mxu0
  %v1932 = vadd.f32 0.0, %v1931
  %v1933 = vpop.f32.mrf.mxu0
  %1934 = vmatprep.mubr.bf16.mxu0 0
  %1935 = vmatmul.mubr.bf16.gmra.mxu0 %v1142
  %v1936 = vpop.f32.mrf.mxu0
  %v1937 = vadd.f32 0.0, %v1936
  %v1938 = vpop.f32.mrf.mxu0
  %v1939 = vpop.f32.mrf.mxu0
  %v1940 = vadd.f32 0.0, %v1939
  %v1941 = vpop.f32.mrf.mxu0
  %1942 = vmatprep.mubr.bf16.mxu0 0
  %1943 = vmatmul.mubr.bf16.gmra.mxu0 %v1145
  %v1944 = vpop.f32.mrf.mxu0
  %v1945 = vadd.f32 0.0, %v1944
  %v1946 = vpop.f32.mrf.mxu0
  %v1947 = vpop.f32.mrf.mxu0
  %v1948 = vadd.f32 0.0, %v1947
  %v1949 = vpop.f32.mrf.mxu0
  %1950 = vmatprep.mubr.bf16.mxu0 0
  %1951 = vmatmul.mubr.bf16.gmra.mxu0 %v1148
  %v1952 = vpop.f32.mrf.mxu0
  %v1953 = vadd.f32 0.0, %v1952
  %v1954 = vpop.f32.mrf.mxu0
  %v1955 = vpop.f32.mrf.mxu0
  %v1956 = vadd.f32 0.0, %v1955
  %v1957 = vpop.f32.mrf.mxu0
  %1958 = vmatprep.mubr.bf16.mxu0 0
  %1959 = vmatmul.mubr.bf16.gmra.mxu0 %v1151
  %v1960 = vpop.f32.mrf.mxu0
  %v1961 = vadd.f32 0.0, %v1960
  %v1962 = vpop.f32.mrf.mxu0
  %v1963 = vpop.f32.mrf.mxu0
  %v1964 = vadd.f32 0.0, %v1963
  %v1965 = vpop.f32.mrf.mxu0
  %1966 = vmatprep.mubr.bf16.mxu0 0
  %1967 = vmatmul.mubr.bf16.gmra.mxu0 %v1154
  %v1968 = vpop.f32.mrf.mxu0
  %v1969 = vadd.f32 0.0, %v1968
  %v1970 = vpop.f32.mrf.mxu0
  %v1971 = vpop.f32.mrf.mxu0
  %v1972 = vadd.f32 0.0, %v1971
  %v1973 = vpop.f32.mrf.mxu0
  %1974 = vmatprep.mubr.bf16.mxu0 0
  %1975 = vmatmul.mubr.bf16.gmra.mxu0 %v1157
  %v1976 = vpop.f32.mrf.mxu0
  %v1977 = vadd.f32 0.0, %v1976
  %v1978 = vpop.f32.mrf.mxu0
  %v1979 = vpop.f32.mrf.mxu0
  %v1980 = vadd.f32 0.0, %v1979
  %v1981 = vpop.f32.mrf.mxu0
  %1982 = vmatprep.mubr.bf16.mxu0 0
  %1983 = vmatmul.mubr.bf16.gmra.mxu0 %v1160
  %v1984 = vpop.f32.mrf.mxu0
  %v1985 = vadd.f32 0.0, %v1984
  %v1986 = vpop.f32.mrf.mxu0
  %v1987 = vpop.f32.mrf.mxu0
  %v1988 = vadd.f32 0.0, %v1987
  %v1989 = vpop.f32.mrf.mxu0
  %1990 = vmatprep.mubr.bf16.mxu0 0
  %1991 = vmatmul.mubr.bf16.gmra.mxu0 %v1163
  %v1992 = vpop.f32.mrf.mxu0
  %v1993 = vadd.f32 0.0, %v1992
  %v1994 = vpop.f32.mrf.mxu0
  %v1995 = vpop.f32.mrf.mxu0
  %v1996 = vadd.f32 0.0, %v1995
  %v1997 = vpop.f32.mrf.mxu0
  %1998 = vmatprep.mubr.bf16.mxu0 0
  %1999 = vmatmul.mubr.bf16.gmra.mxu0 %v1166
  %v2000 = vpop.f32.mrf.mxu0
  %v2001 = vadd.f32 0.0, %v2000
  %v2002 = vpop.f32.mrf.mxu0
  %v2003 = vpop.f32.mrf.mxu0
  %v2004 = vadd.f32 0.0, %v2003
  %v2005 = vpop.f32.mrf.mxu0
  %2006 = vmatprep.mubr.bf16.mxu0 0
  %2007 = vmatmul.mubr.bf16.gmra.mxu0 %v1169
  %v2008 = vpop.f32.mrf.mxu0
  %v2009 = vadd.f32 0.0, %v2008
  %v2010 = vpop.f32.mrf.mxu0
  %v2011 = vpop.f32.mrf.mxu0
  %v2012 = vadd.f32 0.0, %v2011
  %v2013 = vpop.f32.mrf.mxu0
  %2014 = vmatprep.mubr.bf16.mxu0 0
  %2015 = vmatmul.mubr.bf16.gmra.mxu0 %v1172
  %v2016 = vpop.f32.mrf.mxu0
  %v2017 = vadd.f32 0.0, %v2016
  %v2018 = vpop.f32.mrf.mxu0
  %v2019 = vpop.f32.mrf.mxu0
  %v2020 = vadd.f32 0.0, %v2019
  %v2021 = vpop.f32.mrf.mxu0
  %2022 = vmatprep.mubr.bf16.mxu0 0
  %2023 = vmatmul.mubr.bf16.gmra.mxu0 %v1175
  %v2024 = vpop.f32.mrf.mxu0
  %v2025 = vadd.f32 0.0, %v2024
  %v2026 = vpop.f32.mrf.mxu0
  %v2027 = vpop.f32.mrf.mxu0
  %v2028 = vadd.f32 0.0, %v2027
  %v2029 = vpop.f32.mrf.mxu0
  %2030 = vmatprep.mubr.bf16.mxu0 0
  %2031 = vmatmul.mubr.bf16.gmra.mxu0 %v1178
  %v2032 = vpop.f32.mrf.mxu0
  %v2033 = vadd.f32 0.0, %v2032
  %v2034 = vpop.f32.mrf.mxu0
  %v2035 = vpop.f32.mrf.mxu0
  %v2036 = vadd.f32 0.0, %v2035
  %v2037 = vpop.f32.mrf.mxu0
  %2038 = vmatprep.mubr.bf16.mxu0 0
  %2039 = vmatmul.mubr.bf16.gmra.mxu0 %v1181
  %v2040 = vpop.f32.mrf.mxu0
  %v2041 = vadd.f32 0.0, %v2040
  %v2042 = vpop.f32.mrf.mxu0
  %v2043 = vpop.f32.mrf.mxu0
  %v2044 = vadd.f32 0.0, %v2043
  %v2045 = vpop.f32.mrf.mxu0
  %2046 = vmatprep.mubr.bf16.mxu0 0
  %2047 = vmatmul.mubr.bf16.gmra.mxu0 %v1184
  %v2048 = vpop.f32.mrf.mxu0
  %v2049 = vadd.f32 0.0, %v2048
  %v2050 = vpop.f32.mrf.mxu0
  %v2051 = vpop.f32.mrf.mxu0
  %v2052 = vadd.f32 0.0, %v2051
  %v2053 = vpop.f32.mrf.mxu0
  %2054 = vmatprep.mubr.bf16.mxu0 0
  %2055 = vmatmul.mubr.bf16.gmra.mxu0 %v1187
  %v2056 = vpop.f32.mrf.mxu0
  %v2057 = vadd.f32 0.0, %v2056
  %v2058 = vpop.f32.mrf.mxu0
  %v2059 = vpop.f32.mrf.mxu0
  %v2060 = vadd.f32 0.0, %v2059
  %v2061 = vpop.f32.mrf.mxu0
  %2062 = vmatprep.mubr.bf16.mxu0 0
  %2063 = vmatmul.mubr.bf16.gmra.mxu0 %v1190
  %v2064 = vpop.f32.mrf.mxu0
  %v2065 = vadd.f32 0.0, %v2064
  %v2066 = vpop.f32.mrf.mxu0
  %v2067 = vpop.f32.mrf.mxu0
  %v2068 = vadd.f32 0.0, %v2067
  %v2069 = vpop.f32.mrf.mxu0
  %2070 = vmatprep.mubr.bf16.mxu0 0
  %2071 = vmatmul.mubr.bf16.gmra.mxu0 %v1193
  %v2072 = vpop.f32.mrf.mxu0
  %v2073 = vadd.f32 0.0, %v2072
  %v2074 = vpop.f32.mrf.mxu0
  %v2075 = vpop.f32.mrf.mxu0
  %v2076 = vadd.f32 0.0, %v2075
  %v2077 = vpop.f32.mrf.mxu0
  %2078 = vmatprep.mubr.bf16.mxu0 0
  %2079 = vmatmul.mubr.bf16.gmra.mxu0 %v1196
  %v2080 = vpop.f32.mrf.mxu0
  %v2081 = vadd.f32 0.0, %v2080
  %v2082 = vpop.f32.mrf.mxu0
  %v2083 = vpop.f32.mrf.mxu0
  %v2084 = vadd.f32 0.0, %v2083
  %v2085 = vpop.f32.mrf.mxu0
  %2086 = vmatprep.mubr.bf16.mxu0 0
  %2087 = vmatmul.mubr.bf16.gmra.mxu0 %v1199
  %v2088 = vpop.f32.mrf.mxu0
  %v2089 = vadd.f32 0.0, %v2088
  %v2090 = vpop.f32.mrf.mxu0
  %v2091 = vpop.f32.mrf.mxu0
  %v2092 = vadd.f32 0.0, %v2091
  %v2093 = vpop.f32.mrf.mxu0
  %2094 = vmatprep.mubr.bf16.mxu0 0
  %2095 = vmatmul.mubr.bf16.gmra.mxu0 %v1202
  %v2096 = vpop.f32.mrf.mxu0
  %v2097 = vadd.f32 0.0, %v2096
  %v2098 = vpop.f32.mrf.mxu0
  %v2099 = vpop.f32.mrf.mxu0
  %v2100 = vadd.f32 0.0, %v2099
  %v2101 = vpop.f32.mrf.mxu0
  %2102 = vmatprep.mubr.bf16.mxu0 0
  %2103 = vmatmul.mubr.bf16.gmra.mxu0 %v1205
  %v2104 = vpop.f32.mrf.mxu0
  %v2105 = vadd.f32 0.0, %v2104
  %v2106 = vpop.f32.mrf.mxu0
  %v2107 = vpop.f32.mrf.mxu0
  %v2108 = vadd.f32 0.0, %v2107
  %v2109 = vpop.f32.mrf.mxu0
  %2110 = vmatprep.mubr.bf16.mxu0 0
  %2111 = vmatmul.mubr.bf16.gmra.mxu0 %v1208
  %v2112 = vpop.f32.mrf.mxu0
  %v2113 = vadd.f32 0.0, %v2112
  %v2114 = vpop.f32.mrf.mxu0
  %v2115 = vpop.f32.mrf.mxu0
  %v2116 = vadd.f32 0.0, %v2115
  %v2117 = vpop.f32.mrf.mxu0
  %2118 = vmatprep.mubr.bf16.mxu0 0
  %2119 = vmatmul.mubr.bf16.gmra.mxu0 %v1211
  %v2120 = vpop.f32.mrf.mxu0
  %v2121 = vadd.f32 0.0, %v2120
  %v2122 = vpop.f32.mrf.mxu0
  %v2123 = vpop.f32.mrf.mxu0
  %v2124 = vadd.f32 0.0, %v2123
  %v2125 = vpop.f32.mrf.mxu0
  %2126 = vmatprep.mubr.bf16.mxu0 0
  %2127 = vmatmul.mubr.bf16.gmra.mxu0 %v1214
  %v2128 = vpop.f32.mrf.mxu0
  %v2129 = vadd.f32 0.0, %v2128
  %v2130 = vpop.f32.mrf.mxu0
  %v2131 = vpop.f32.mrf.mxu0
  %v2132 = vadd.f32 0.0, %v2131
  %v2133 = vpop.f32.mrf.mxu0
  %2134 = vmatprep.mubr.bf16.mxu0 0
  %2135 = vmatmul.mubr.bf16.gmra.mxu0 %v1217
  %v2136 = vpop.f32.mrf.mxu0
  %v2137 = vadd.f32 0.0, %v2136
  %v2138 = vpop.f32.mrf.mxu0
  %v2139 = vpop.f32.mrf.mxu0
  %v2140 = vadd.f32 0.0, %v2139
  %v2141 = vpop.f32.mrf.mxu0
  %2142 = vmatprep.mubr.bf16.mxu0 0
  %2143 = vmatmul.mubr.bf16.gmra.mxu0 %v1220
  %v2144 = vpop.f32.mrf.mxu0
  %v2145 = vadd.f32 0.0, %v2144
  %v2146 = vpop.f32.mrf.mxu0
  %v2147 = vpop.f32.mrf.mxu0
  %v2148 = vadd.f32 0.0, %v2147
  %v2149 = vpop.f32.mrf.mxu0
  %2150 = vmatprep.mubr.bf16.mxu0 0
  %2151 = vmatmul.mubr.bf16.gmra.mxu0 %v1223
  %v2152 = vpop.f32.mrf.mxu0
  %v2153 = vadd.f32 0.0, %v2152
  %v2154 = vpop.f32.mrf.mxu0
  %v2155 = vpop.f32.mrf.mxu0
  %v2156 = vadd.f32 0.0, %v2155
  %v2157 = vpop.f32.mrf.mxu0
  %2158 = vmatprep.mubr.bf16.mxu0 0
  %2159 = vmatmul.mubr.bf16.gmra.mxu0 %v1226
  %v2160 = vpop.f32.mrf.mxu0
  %v2161 = vadd.f32 0.0, %v2160
  %v2162 = vpop.f32.mrf.mxu0
  %v2163 = vpop.f32.mrf.mxu0
  %v2164 = vadd.f32 0.0, %v2163
  %v2165 = vpop.f32.mrf.mxu0
  %2166 = vmatprep.mubr.bf16.mxu0 0
  %2167 = vmatmul.mubr.bf16.gmra.mxu0 %v1229
  %v2168 = vpop.f32.mrf.mxu0
  %v2169 = vadd.f32 0.0, %v2168
  %v2170 = vpop.f32.mrf.mxu0
  %v2171 = vpop.f32.mrf.mxu0
  %v2172 = vadd.f32 0.0, %v2171
  %v2173 = vpop.f32.mrf.mxu0
  %2174 = vmatprep.mubr.bf16.mxu0 0
  %2175 = vmatmul.mubr.bf16.gmra.mxu0 %v1232
  %v2176 = vpop.f32.mrf.mxu0
  %v2177 = vadd.f32 0.0, %v2176
  %v2178 = vpop.f32.mrf.mxu0
  %v2179 = vpop.f32.mrf.mxu0
  %v2180 = vadd.f32 0.0, %v2179
  %v2181 = vpop.f32.mrf.mxu0
  %2182 = vmatprep.mubr.bf16.mxu0 0
  %2183 = vmatmul.mubr.bf16.gmra.mxu0 %v1235
  %v2184 = vpop.f32.mrf.mxu0
  %v2185 = vadd.f32 0.0, %v2184
  %v2186 = vpop.f32.mrf.mxu0
  %v2187 = vpop.f32.mrf.mxu0
  %v2188 = vadd.f32 0.0, %v2187
  %v2189 = vpop.f32.mrf.mxu0
  %2190 = vmatprep.mubr.bf16.mxu0 0
  %2191 = vmatmul.mubr.bf16.gmra.mxu0 %v1238
  %v2192 = vpop.f32.mrf.mxu0
  %v2193 = vadd.f32 0.0, %v2192
  %v2194 = vpop.f32.mrf.mxu0
  %v2195 = vpop.f32.mrf.mxu0
  %v2196 = vadd.f32 0.0, %v2195
  %v2197 = vpop.f32.mrf.mxu0
  %2198 = vmatprep.mubr.bf16.mxu0 0
  %2199 = vmatmul.mubr.bf16.gmra.mxu0 %v1241
  %v2200 = vpop.f32.mrf.mxu0
  %v2201 = vadd.f32 0.0, %v2200
  %v2202 = vpop.f32.mrf.mxu0
  %v2203 = vpop.f32.mrf.mxu0
  %v2204 = vadd.f32 0.0, %v2203
  %v2205 = vpop.f32.mrf.mxu0
  %2206 = vmatprep.mubr.bf16.mxu0 0
  %2207 = vmatmul.mubr.bf16.gmra.mxu0 %v1244
  %v2208 = vpop.f32.mrf.mxu0
  %v2209 = vadd.f32 0.0, %v2208
  %v2210 = vpop.f32.mrf.mxu0
  %v2211 = vpop.f32.mrf.mxu0
  %v2212 = vadd.f32 0.0, %v2211
  %v2213 = vpop.f32.mrf.mxu0
  %2214 = vmatprep.mubr.bf16.mxu0 0
  %2215 = vmatmul.mubr.bf16.gmra.mxu0 %v1247
  %v2216 = vpop.f32.mrf.mxu0
  %v2217 = vadd.f32 0.0, %v2216
  %v2218 = vpop.f32.mrf.mxu0
  %v2219 = vpop.f32.mrf.mxu0
  %v2220 = vadd.f32 0.0, %v2219
  %v2221 = vpop.f32.mrf.mxu0
  %2222 = vmatprep.mubr.bf16.mxu0 0
  %2223 = vmatmul.mubr.bf16.gmra.mxu0 %v1250
  %v2224 = vpop.f32.mrf.mxu0
  %v2225 = vadd.f32 0.0, %v2224
  %v2226 = vpop.f32.mrf.mxu0
  %v2227 = vpop.f32.mrf.mxu0
  %v2228 = vadd.f32 0.0, %v2227
  %v2229 = vpop.f32.mrf.mxu0
  %2230 = vmatprep.mubr.bf16.mxu0 0
  %2231 = vmatmul.mubr.bf16.gmra.mxu0 %v1253
  %v2232 = vpop.f32.mrf.mxu0
  %v2233 = vadd.f32 0.0, %v2232
  %v2234 = vpop.f32.mrf.mxu0
  %v2235 = vpop.f32.mrf.mxu0
  %v2236 = vadd.f32 0.0, %v2235
  %v2237 = vpop.f32.mrf.mxu0
  %2238 = vmatprep.mubr.bf16.mxu0 0
  %2239 = vmatmul.mubr.bf16.gmra.mxu0 %v1256
  %v2240 = vpop.f32.mrf.mxu0
  %v2241 = vadd.f32 0.0, %v2240
  %v2242 = vpop.f32.mrf.mxu0
  %v2243 = vpop.f32.mrf.mxu0
  %v2244 = vadd.f32 0.0, %v2243
  %v2245 = vpop.f32.mrf.mxu0
  %2246 = vmatprep.mubr.bf16.mxu0 0
  %2247 = vmatmul.mubr.bf16.gmra.mxu0 %v1259
  %v2248 = vpop.f32.mrf.mxu0
  %v2249 = vadd.f32 0.0, %v2248
  %v2250 = vpop.f32.mrf.mxu0
  %v2251 = vpop.f32.mrf.mxu0
  %v2252 = vadd.f32 0.0, %v2251
  %v2253 = vpop.f32.mrf.mxu0
  %2254 = vmatprep.mubr.bf16.mxu0 0
  %2255 = vmatmul.mubr.bf16.gmra.mxu0 %v1262
  %v2256 = vpop.f32.mrf.mxu0
  %v2257 = vadd.f32 0.0, %v2256
  %v2258 = vpop.f32.mrf.mxu0
  %v2259 = vpop.f32.mrf.mxu0
  %v2260 = vadd.f32 0.0, %v2259
  %v2261 = vpop.f32.mrf.mxu0
  %2262 = vmatprep.mubr.bf16.mxu0 0
  %2263 = vmatmul.mubr.bf16.gmra.mxu0 %v1265
  %v2264 = vpop.f32.mrf.mxu0
  %v2265 = vadd.f32 0.0, %v2264
  %v2266 = vpop.f32.mrf.mxu0
  %v2267 = vpop.f32.mrf.mxu0
  %v2268 = vadd.f32 0.0, %v2267
  %v2269 = vpop.f32.mrf.mxu0
  %2270 = vmatprep.mubr.bf16.mxu0 0
  %2271 = vmatmul.mubr.bf16.gmra.mxu0 %v1268
  %v2272 = vpop.f32.mrf.mxu0
  %v2273 = vadd.f32 0.0, %v2272
  %v2274 = vpop.f32.mrf.mxu0
  %v2275 = vpop.f32.mrf.mxu0
  %v2276 = vadd.f32 0.0, %v2275
  %v2277 = vpop.f32.mrf.mxu0
  %2278 = vmatprep.mubr.bf16.mxu0 0
  %2279 = vmatmul.mubr.bf16.gmra.mxu0 %v1271
  %v2280 = vpop.f32.mrf.mxu0
  %v2281 = vadd.f32 0.0, %v2280
  %v2282 = vpop.f32.mrf.mxu0
  %v2283 = vpop.f32.mrf.mxu0
  %v2284 = vadd.f32 0.0, %v2283
  %v2285 = vpop.f32.mrf.mxu0
  %2286 = vmatprep.mubr.bf16.mxu0 0
  %2287 = vmatmul.mubr.bf16.gmra.mxu0 %v1274
  %v2288 = vpop.f32.mrf.mxu0
  %v2289 = vadd.f32 0.0, %v2288
  %v2290 = vpop.f32.mrf.mxu0
  %v2291 = vpop.f32.mrf.mxu0
  %v2292 = vadd.f32 0.0, %v2291
  %v2293 = vpop.f32.mrf.mxu0
  %2294 = vmatprep.mubr.bf16.mxu0 0
  %2295 = vmatmul.mubr.bf16.gmra.mxu0 %v1277
  %v2296 = vpop.f32.mrf.mxu0
  %v2297 = vadd.f32 0.0, %v2296
  %v2298 = vpop.f32.mrf.mxu0
  %v2299 = vpop.f32.mrf.mxu0
  %v2300 = vadd.f32 0.0, %v2299
  %v2301 = vpop.f32.mrf.mxu0
  %2302 = vmatprep.mubr.bf16.mxu0 0
  %2303 = vmatmul.mubr.bf16.gmra.mxu0 %v1280
  %v2304 = vpop.f32.mrf.mxu0
  %v2305 = vadd.f32 0.0, %v2304
  %v2306 = vpop.f32.mrf.mxu0
  %v2307 = vpop.f32.mrf.mxu0
  %v2308 = vadd.f32 0.0, %v2307
  %v2309 = vpop.f32.mrf.mxu0
  %2310 = vmatprep.mubr.bf16.mxu0 0
  %2311 = vmatmul.mubr.bf16.gmra.mxu0 %v1283
  %v2312 = vpop.f32.mrf.mxu0
  %v2313 = vadd.f32 0.0, %v2312
  %v2314 = vpop.f32.mrf.mxu0
  %v2315 = vpop.f32.mrf.mxu0
  %v2316 = vadd.f32 0.0, %v2315
  %v2317 = vpop.f32.mrf.mxu0
  %2318 = vmatprep.mubr.bf16.mxu0 0
  %2319 = vmatmul.mubr.bf16.gmra.mxu0 %v1286
  %v2320 = vpop.f32.mrf.mxu0
  %v2321 = vadd.f32 0.0, %v2320
  %v2322 = vpop.f32.mrf.mxu0
  %v2323 = vpop.f32.mrf.mxu0
  %v2324 = vadd.f32 0.0, %v2323
  %v2325 = vpop.f32.mrf.mxu0
  %2326 = vmatprep.mubr.bf16.mxu0 0
  %2327 = vmatmul.mubr.bf16.gmra.mxu0 %v1289
  %v2328 = vpop.f32.mrf.mxu0
  %v2329 = vadd.f32 0.0, %v2328
  %v2330 = vpop.f32.mrf.mxu0
  %v2331 = vpop.f32.mrf.mxu0
  %v2332 = vadd.f32 0.0, %v2331
  %v2333 = vpop.f32.mrf.mxu0
  %2334 = vmatprep.mubr.bf16.mxu0 0
  %2335 = vmatmul.mubr.bf16.gmra.mxu0 %v1292
  %v2336 = vpop.f32.mrf.mxu0
  %v2337 = vadd.f32 0.0, %v2336
  %v2338 = vpop.f32.mrf.mxu0
  %v2339 = vpop.f32.mrf.mxu0
  %v2340 = vadd.f32 0.0, %v2339
  %v2341 = vpop.f32.mrf.mxu0
  %2342 = vmatprep.mubr.bf16.mxu0 0
  %2343 = vmatmul.mubr.bf16.gmra.mxu0 %v1295
  %v2344 = vpop.f32.mrf.mxu0
  %v2345 = vadd.f32 0.0, %v2344
  %v2346 = vpop.f32.mrf.mxu0
  %v2347 = vpop.f32.mrf.mxu0
  %v2348 = vadd.f32 0.0, %v2347
  %v2349 = vpop.f32.mrf.mxu0
  %2350 = vmatprep.mubr.bf16.mxu0 0
  %2351 = vmatmul.mubr.bf16.gmra.mxu0 %v1298
  %v2352 = vpop.f32.mrf.mxu0
  %v2353 = vadd.f32 0.0, %v2352
  %v2354 = vpop.f32.mrf.mxu0
  %v2355 = vpop.f32.mrf.mxu0
  %v2356 = vadd.f32 0.0, %v2355
  %v2357 = vpop.f32.mrf.mxu0
  %2358 = vmatprep.mubr.bf16.mxu0 0
  %2359 = vmatmul.mubr.bf16.gmra.mxu0 %v1301
  %v2360 = vpop.f32.mrf.mxu0
  %v2361 = vadd.f32 0.0, %v2360
  %v2362 = vpop.f32.mrf.mxu0
  %v2363 = vpop.f32.mrf.mxu0
  %v2364 = vadd.f32 0.0, %v2363
  %v2365 = vpop.f32.mrf.mxu0
  %2366 = vdwg.mxu0
  %v2367 = vmax.f32 %v1345, %v1601
  %v2368 = vmax.f32 %v1348, %v1604
  %v2369 = vmax.f32 %v1353, %v1609
  %v2370 = vmax.f32 %v1356, %v1612
  %v2371 = vmax.f32 %v1361, %v1617
  %v2372 = vmax.f32 %v1364, %v1620
  %v2373 = vmax.f32 %v1369, %v1625
  %v2374 = vmax.f32 %v1372, %v1628
  %v2375 = vmax.f32 %v1377, %v1633
  %v2376 = vmax.f32 %v1380, %v1636
  %v2377 = vmax.f32 %v1385, %v1641
  %v2378 = vmax.f32 %v1388, %v1644
  %v2379 = vmax.f32 %v1393, %v1649
  %v2380 = vmax.f32 %v1396, %v1652
  %v2381 = vmax.f32 %v1401, %v1657
  %v2382 = vmax.f32 %v1404, %v1660
  %v2383 = vmax.f32 %v1409, %v1665
  %v2384 = vmax.f32 %v1412, %v1668
  %v2385 = vmax.f32 %v1417, %v1673
  %v2386 = vmax.f32 %v1420, %v1676
  %v2387 = vmax.f32 %v1425, %v1681
  %v2388 = vmax.f32 %v1428, %v1684
  %v2389 = vmax.f32 %v1433, %v1689
  %v2390 = vmax.f32 %v1436, %v1692
  %v2391 = vmax.f32 %v1441, %v1697
  %v2392 = vmax.f32 %v1444, %v1700
  %v2393 = vmax.f32 %v1449, %v1705
  %v2394 = vmax.f32 %v1452, %v1708
  %v2395 = vmax.f32 %v1457, %v1713
  %v2396 = vmax.f32 %v1460, %v1716
  %v2397 = vmax.f32 %v1465, %v1721
  %v2398 = vmax.f32 %v1468, %v1724
  %v2399 = vmax.f32 %v1473, %v1729
  %v2400 = vmax.f32 %v1476, %v1732
  %v2401 = vmax.f32 %v1481, %v1737
  %v2402 = vmax.f32 %v1484, %v1740
  %v2403 = vmax.f32 %v1489, %v1745
  %v2404 = vmax.f32 %v1492, %v1748
  %v2405 = vmax.f32 %v1497, %v1753
  %v2406 = vmax.f32 %v1500, %v1756
  %v2407 = vmax.f32 %v1505, %v1761
  %v2408 = vmax.f32 %v1508, %v1764
  %v2409 = vmax.f32 %v1513, %v1769
  %v2410 = vmax.f32 %v1516, %v1772
  %v2411 = vmax.f32 %v1521, %v1777
  %v2412 = vmax.f32 %v1524, %v1780
  %v2413 = vmax.f32 %v1529, %v1785
  %v2414 = vmax.f32 %v1532, %v1788
  %v2415 = vmax.f32 %v1537, %v1793
  %v2416 = vmax.f32 %v1540, %v1796
  %v2417 = vmax.f32 %v1545, %v1801
  %v2418 = vmax.f32 %v1548, %v1804
  %v2419 = vmax.f32 %v1553, %v1809
  %v2420 = vmax.f32 %v1556, %v1812
  %v2421 = vmax.f32 %v1561, %v1817
  %v2422 = vmax.f32 %v1564, %v1820
  %v2423 = vmax.f32 %v1569, %v1825
  %v2424 = vmax.f32 %v1572, %v1828
  %v2425 = vmax.f32 %v1577, %v1833
  %v2426 = vmax.f32 %v1580, %v1836
  %v2427 = vmax.f32 %v1585, %v1841
  %v2428 = vmax.f32 %v1588, %v1844
  %v2429 = vmax.f32 %v1593, %v1849
  %v2430 = vmax.f32 %v1596, %v1852
  %v2431 = vmax.f32 %v1857, %v2113
  %v2432 = vmax.f32 %v1860, %v2116
  %v2433 = vmax.f32 %v1865, %v2121
  %v2434 = vmax.f32 %v1868, %v2124
  %v2435 = vmax.f32 %v1873, %v2129
  %v2436 = vmax.f32 %v1876, %v2132
  %v2437 = vmax.f32 %v1881, %v2137
  %v2438 = vmax.f32 %v1884, %v2140
  %v2439 = vmax.f32 %v1889, %v2145
  %v2440 = vmax.f32 %v1892, %v2148
  %v2441 = vmax.f32 %v1897, %v2153
  %v2442 = vmax.f32 %v1900, %v2156
  %v2443 = vmax.f32 %v1905, %v2161
  %v2444 = vmax.f32 %v1908, %v2164
  %v2445 = vmax.f32 %v1913, %v2169
  %v2446 = vmax.f32 %v1916, %v2172
  %v2447 = vmax.f32 %v1921, %v2177
  %v2448 = vmax.f32 %v1924, %v2180
  %v2449 = vmax.f32 %v1929, %v2185
  %v2450 = vmax.f32 %v1932, %v2188
  %v2451 = vmax.f32 %v1937, %v2193
  %v2452 = vmax.f32 %v1940, %v2196
  %v2453 = vmax.f32 %v1945, %v2201
  %v2454 = vmax.f32 %v1948, %v2204
  %v2455 = vmax.f32 %v1953, %v2209
  %v2456 = vmax.f32 %v1956, %v2212
  %v2457 = vmax.f32 %v1961, %v2217
  %v2458 = vmax.f32 %v1964, %v2220
  %v2459 = vmax.f32 %v1969, %v2225
  %v2460 = vmax.f32 %v1972, %v2228
  %v2461 = vmax.f32 %v1977, %v2233
  %v2462 = vmax.f32 %v1980, %v2236
  %v2463 = vmax.f32 %v1985, %v2241
  %v2464 = vmax.f32 %v1988, %v2244
  %v2465 = vmax.f32 %v1993, %v2249
  %v2466 = vmax.f32 %v1996, %v2252
  %v2467 = vmax.f32 %v2001, %v2257
  %v2468 = vmax.f32 %v2004, %v2260
  %v2469 = vmax.f32 %v2009, %v2265
  %v2470 = vmax.f32 %v2012, %v2268
  %v2471 = vmax.f32 %v2017, %v2273
  %v2472 = vmax.f32 %v2020, %v2276
  %v2473 = vmax.f32 %v2025, %v2281
  %v2474 = vmax.f32 %v2028, %v2284
  %v2475 = vmax.f32 %v2033, %v2289
  %v2476 = vmax.f32 %v2036, %v2292
  %v2477 = vmax.f32 %v2041, %v2297
  %v2478 = vmax.f32 %v2044, %v2300
  %v2479 = vmax.f32 %v2049, %v2305
  %v2480 = vmax.f32 %v2052, %v2308
  %v2481 = vmax.f32 %v2057, %v2313
  %v2482 = vmax.f32 %v2060, %v2316
  %v2483 = vmax.f32 %v2065, %v2321
  %v2484 = vmax.f32 %v2068, %v2324
  %v2485 = vmax.f32 %v2073, %v2329
  %v2486 = vmax.f32 %v2076, %v2332
  %v2487 = vmax.f32 %v2081, %v2337
  %v2488 = vmax.f32 %v2084, %v2340
  %v2489 = vmax.f32 %v2089, %v2345
  %v2490 = vmax.f32 %v2092, %v2348
  %v2491 = vmax.f32 %v2097, %v2353
  %v2492 = vmax.f32 %v2100, %v2356
  %v2493 = vmax.f32 %v2105, %v2361
  %v2494 = vmax.f32 %v2108, %v2364
  %v2495 = vmax.f32 %v2367, %v2431
  %v2496 = vmax.f32 %v2368, %v2432
  %v2497 = vmax.f32 %v2369, %v2433
  %v2498 = vmax.f32 %v2370, %v2434
  %v2499 = vmax.f32 %v2371, %v2435
  %v2500 = vmax.f32 %v2372, %v2436
  %v2501 = vmax.f32 %v2373, %v2437
  %v2502 = vmax.f32 %v2374, %v2438
  %v2503 = vmax.f32 %v2375, %v2439
  %v2504 = vmax.f32 %v2376, %v2440
  %v2505 = vmax.f32 %v2377, %v2441
  %v2506 = vmax.f32 %v2378, %v2442
  %v2507 = vmax.f32 %v2379, %v2443
  %v2508 = vmax.f32 %v2380, %v2444
  %v2509 = vmax.f32 %v2381, %v2445
  %v2510 = vmax.f32 %v2382, %v2446
  %v2511 = vmax.f32 %v2383, %v2447
  %v2512 = vmax.f32 %v2384, %v2448
  %v2513 = vmax.f32 %v2385, %v2449
  %v2514 = vmax.f32 %v2386, %v2450
  %v2515 = vmax.f32 %v2387, %v2451
  %v2516 = vmax.f32 %v2388, %v2452
  %v2517 = vmax.f32 %v2389, %v2453
  %v2518 = vmax.f32 %v2390, %v2454
  %v2519 = vmax.f32 %v2391, %v2455
  %v2520 = vmax.f32 %v2392, %v2456
  %v2521 = vmax.f32 %v2393, %v2457
  %v2522 = vmax.f32 %v2394, %v2458
  %v2523 = vmax.f32 %v2395, %v2459
  %v2524 = vmax.f32 %v2396, %v2460
  %v2525 = vmax.f32 %v2397, %v2461
  %v2526 = vmax.f32 %v2398, %v2462
  %v2527 = vmax.f32 %v2399, %v2463
  %v2528 = vmax.f32 %v2400, %v2464
  %v2529 = vmax.f32 %v2401, %v2465
  %v2530 = vmax.f32 %v2402, %v2466
  %v2531 = vmax.f32 %v2403, %v2467
  %v2532 = vmax.f32 %v2404, %v2468
  %v2533 = vmax.f32 %v2405, %v2469
  %v2534 = vmax.f32 %v2406, %v2470
  %v2535 = vmax.f32 %v2407, %v2471
  %v2536 = vmax.f32 %v2408, %v2472
  %v2537 = vmax.f32 %v2409, %v2473
  %v2538 = vmax.f32 %v2410, %v2474
  %v2539 = vmax.f32 %v2411, %v2475
  %v2540 = vmax.f32 %v2412, %v2476
  %v2541 = vmax.f32 %v2413, %v2477
  %v2542 = vmax.f32 %v2414, %v2478
  %v2543 = vmax.f32 %v2415, %v2479
  %v2544 = vmax.f32 %v2416, %v2480
  %v2545 = vmax.f32 %v2417, %v2481
  %v2546 = vmax.f32 %v2418, %v2482
  %v2547 = vmax.f32 %v2419, %v2483
  %v2548 = vmax.f32 %v2420, %v2484
  %v2549 = vmax.f32 %v2421, %v2485
  %v2550 = vmax.f32 %v2422, %v2486
  %v2551 = vmax.f32 %v2423, %v2487
  %v2552 = vmax.f32 %v2424, %v2488
  %v2553 = vmax.f32 %v2425, %v2489
  %v2554 = vmax.f32 %v2426, %v2490
  %v2555 = vmax.f32 %v2427, %v2491
  %v2556 = vmax.f32 %v2428, %v2492
  %v2557 = vmax.f32 %v2429, %v2493
  %v2558 = vmax.f32 %v2430, %v2494
  %v2559 = vld [vmem:[%s2] sm:$0x1]
  %v2561 = vlaneseq
  %v2562 = vshrl.u32 %v2561, 7
  %v2563 = vsub.s32 0, %v2562
  %v2564 = vrot.slane %v2559, %v2563
  %v2566 = vadd.f32 %v2495, %v2564
  %v2567 = vadd.f32 %v2496, %v2564
  %v2568 = vadd.f32 %v2497, %v2564
  %v2569 = vadd.f32 %v2498, %v2564
  %v2570 = vadd.f32 %v2499, %v2564
  %v2571 = vadd.f32 %v2500, %v2564
  %v2572 = vadd.f32 %v2501, %v2564
  %v2573 = vadd.f32 %v2502, %v2564
  %v2574 = vadd.f32 %v2503, %v2564
  %v2575 = vadd.f32 %v2504, %v2564
  %v2576 = vadd.f32 %v2505, %v2564
  %v2577 = vadd.f32 %v2506, %v2564
  %v2578 = vadd.f32 %v2507, %v2564
  %v2579 = vadd.f32 %v2508, %v2564
  %v2580 = vadd.f32 %v2509, %v2564
  %v2581 = vadd.f32 %v2510, %v2564
  %v2582 = vadd.f32 %v2511, %v2564
  %v2583 = vadd.f32 %v2512, %v2564
  %v2584 = vadd.f32 %v2513, %v2564
  %v2585 = vadd.f32 %v2514, %v2564
  %v2586 = vadd.f32 %v2515, %v2564
  %v2587 = vadd.f32 %v2516, %v2564
  %v2588 = vadd.f32 %v2517, %v2564
  %v2589 = vadd.f32 %v2518, %v2564
  %v2590 = vadd.f32 %v2519, %v2564
  %v2591 = vadd.f32 %v2520, %v2564
  %v2592 = vadd.f32 %v2521, %v2564
  %v2593 = vadd.f32 %v2522, %v2564
  %v2594 = vadd.f32 %v2523, %v2564
  %v2595 = vadd.f32 %v2524, %v2564
  %v2596 = vadd.f32 %v2525, %v2564
  %v2597 = vadd.f32 %v2526, %v2564
  %v2598 = vadd.f32 %v2527, %v2564
  %v2599 = vadd.f32 %v2528, %v2564
  %v2600 = vadd.f32 %v2529, %v2564
  %v2601 = vadd.f32 %v2530, %v2564
  %v2602 = vadd.f32 %v2531, %v2564
  %v2603 = vadd.f32 %v2532, %v2564
  %v2604 = vadd.f32 %v2533, %v2564
  %v2605 = vadd.f32 %v2534, %v2564
  %v2606 = vadd.f32 %v2535, %v2564
  %v2607 = vadd.f32 %v2536, %v2564
  %v2608 = vadd.f32 %v2537, %v2564
  %v2609 = vadd.f32 %v2538, %v2564
  %v2610 = vadd.f32 %v2539, %v2564
  %v2611 = vadd.f32 %v2540, %v2564
  %v2612 = vadd.f32 %v2541, %v2564
  %v2613 = vadd.f32 %v2542, %v2564
  %v2614 = vadd.f32 %v2543, %v2564
  %v2615 = vadd.f32 %v2544, %v2564
  %v2616 = vadd.f32 %v2545, %v2564
  %v2617 = vadd.f32 %v2546, %v2564
  %v2618 = vadd.f32 %v2547, %v2564
  %v2619 = vadd.f32 %v2548, %v2564
  %v2620 = vadd.f32 %v2549, %v2564
  %v2621 = vadd.f32 %v2550, %v2564
  %v2622 = vadd.f32 %v2551, %v2564
  %v2623 = vadd.f32 %v2552, %v2564
  %v2624 = vadd.f32 %v2553, %v2564
  %v2625 = vadd.f32 %v2554, %v2564
  %v2626 = vadd.f32 %v2555, %v2564
  %v2627 = vadd.f32 %v2556, %v2564
  %v2628 = vadd.f32 %v2557, %v2564
  %v2629 = vadd.f32 %v2558, %v2564
  %v2630 = vmax.f32 %v2566, 0.0
  %v2631 = vmax.f32 %v2567, 0.0
  %v2632 = vmax.f32 %v2568, 0.0
  %v2633 = vmax.f32 %v2569, 0.0
  %v2634 = vmax.f32 %v2570, 0.0
  %v2635 = vmax.f32 %v2571, 0.0
  %v2636 = vmax.f32 %v2572, 0.0
  %v2637 = vmax.f32 %v2573, 0.0
  %v2638 = vmax.f32 %v2574, 0.0
  %v2639 = vmax.f32 %v2575, 0.0
  %v2640 = vmax.f32 %v2576, 0.0
  %v2641 = vmax.f32 %v2577, 0.0
  %v2642 = vmax.f32 %v2578, 0.0
  %v2643 = vmax.f32 %v2579, 0.0
  %v2644 = vmax.f32 %v2580, 0.0
  %v2645 = vmax.f32 %v2581, 0.0
  %v2646 = vmax.f32 %v2582, 0.0
  %v2647 = vmax.f32 %v2583, 0.0
  %v2648 = vmax.f32 %v2584, 0.0
  %v2649 = vmax.f32 %v2585, 0.0
  %v2650 = vmax.f32 %v2586, 0.0
  %v2651 = vmax.f32 %v2587, 0.0
  %v2652 = vmax.f32 %v2588, 0.0
  %v2653 = vmax.f32 %v2589, 0.0
  %v2654 = vmax.f32 %v2590, 0.0
  %v2655 = vmax.f32 %v2591, 0.0
  %v2656 = vmax.f32 %v2592, 0.0
  %v2657 = vmax.f32 %v2593, 0.0
  %v2658 = vmax.f32 %v2594, 0.0
  %v2659 = vmax.f32 %v2595, 0.0
  %v2660 = vmax.f32 %v2596, 0.0
  %v2661 = vmax.f32 %v2597, 0.0
  %v2662 = vmax.f32 %v2598, 0.0
  %v2663 = vmax.f32 %v2599, 0.0
  %v2664 = vmax.f32 %v2600, 0.0
  %v2665 = vmax.f32 %v2601, 0.0
  %v2666 = vmax.f32 %v2602, 0.0
  %v2667 = vmax.f32 %v2603, 0.0
  %v2668 = vmax.f32 %v2604, 0.0
  %v2669 = vmax.f32 %v2605, 0.0
  %v2670 = vmax.f32 %v2606, 0.0
  %v2671 = vmax.f32 %v2607, 0.0
  %v2672 = vmax.f32 %v2608, 0.0
  %v2673 = vmax.f32 %v2609, 0.0
  %v2674 = vmax.f32 %v2610, 0.0
  %v2675 = vmax.f32 %v2611, 0.0
  %v2676 = vmax.f32 %v2612, 0.0
  %v2677 = vmax.f32 %v2613, 0.0
  %v2678 = vmax.f32 %v2614, 0.0
  %v2679 = vmax.f32 %v2615, 0.0
  %v2680 = vmax.f32 %v2616, 0.0
  %v2681 = vmax.f32 %v2617, 0.0
  %v2682 = vmax.f32 %v2618, 0.0
  %v2683 = vmax.f32 %v2619, 0.0
  %v2684 = vmax.f32 %v2620, 0.0
  %v2685 = vmax.f32 %v2621, 0.0
  %v2686 = vmax.f32 %v2622, 0.0
  %v2687 = vmax.f32 %v2623, 0.0
  %v2688 = vmax.f32 %v2624, 0.0
  %v2689 = vmax.f32 %v2625, 0.0
  %v2690 = vmax.f32 %v2626, 0.0
  %v2691 = vmax.f32 %v2627, 0.0
  %v2692 = vmax.f32 %v2628, 0.0
  %v2693 = vmax.f32 %v2629, 0.0
  %v2694 = vpack.c.bf16 %v2631, %v2630
  %v2695 = vpack.c.bf16 %v2633, %v2632
  %v2696 = vpack.c.bf16 %v2635, %v2634
  %v2697 = vpack.c.bf16 %v2637, %v2636
  %v2698 = vpack.c.bf16 %v2639, %v2638
  %v2699 = vpack.c.bf16 %v2641, %v2640
  %v2700 = vpack.c.bf16 %v2643, %v2642
  %v2701 = vpack.c.bf16 %v2645, %v2644
  %v2702 = vpack.c.bf16 %v2647, %v2646
  %v2703 = vpack.c.bf16 %v2649, %v2648
  %v2704 = vpack.c.bf16 %v2651, %v2650
  %v2705 = vpack.c.bf16 %v2653, %v2652
  %v2706 = vpack.c.bf16 %v2655, %v2654
  %v2707 = vpack.c.bf16 %v2657, %v2656
  %v2708 = vpack.c.bf16 %v2659, %v2658
  %v2709 = vpack.c.bf16 %v2661, %v2660
  %v2710 = vpack.c.bf16 %v2663, %v2662
  %v2711 = vpack.c.bf16 %v2665, %v2664
  %v2712 = vpack.c.bf16 %v2667, %v2666
  %v2713 = vpack.c.bf16 %v2669, %v2668
  %v2714 = vpack.c.bf16 %v2671, %v2670
  %v2715 = vpack.c.bf16 %v2673, %v2672
  %v2716 = vpack.c.bf16 %v2675, %v2674
  %v2717 = vpack.c.bf16 %v2677, %v2676
  %v2718 = vpack.c.bf16 %v2679, %v2678
  %v2719 = vpack.c.bf16 %v2681, %v2680
  %v2720 = vpack.c.bf16 %v2683, %v2682
  %v2721 = vpack.c.bf16 %v2685, %v2684
  %v2722 = vpack.c.bf16 %v2687, %v2686
  %v2723 = vpack.c.bf16 %v2689, %v2688
  %v2724 = vpack.c.bf16 %v2691, %v2690
  %v2725 = vpack.c.bf16 %v2693, %v2692
  %v2758 = vunpack.c.l.b16 %v2694
  %v2759 = vunpack.c.h.b16 %v2694
  %v2760 = vunpack.c.l.b16 %v2695
  %v2761 = vunpack.c.h.b16 %v2695
  %v2762 = vunpack.c.l.b16 %v2696
  %v2763 = vunpack.c.h.b16 %v2696
  %v2764 = vunpack.c.l.b16 %v2697
  %v2765 = vunpack.c.h.b16 %v2697
  %v2766 = vunpack.c.l.b16 %v2698
  %v2767 = vunpack.c.h.b16 %v2698
  %v2768 = vunpack.c.l.b16 %v2699
  %v2769 = vunpack.c.h.b16 %v2699
  %v2770 = vunpack.c.l.b16 %v2700
  %v2771 = vunpack.c.h.b16 %v2700
  %v2772 = vunpack.c.l.b16 %v2701
  %v2773 = vunpack.c.h.b16 %v2701
  %v2774 = vunpack.c.l.b16 %v2702
  %v2775 = vunpack.c.h.b16 %v2702
  %v2776 = vunpack.c.l.b16 %v2703
  %v2777 = vunpack.c.h.b16 %v2703
  %v2778 = vunpack.c.l.b16 %v2704
  %v2779 = vunpack.c.h.b16 %v2704
  %v2780 = vunpack.c.l.b16 %v2705
  %v2781 = vunpack.c.h.b16 %v2705
  %v2782 = vunpack.c.l.b16 %v2706
  %v2783 = vunpack.c.h.b16 %v2706
  %v2784 = vunpack.c.l.b16 %v2707
  %v2785 = vunpack.c.h.b16 %v2707
  %v2786 = vunpack.c.l.b16 %v2708
  %v2787 = vunpack.c.h.b16 %v2708
  %v2788 = vunpack.c.l.b16 %v2709
  %v2789 = vunpack.c.h.b16 %v2709
  %v2790 = vunpack.c.l.b16 %v2710
  %v2791 = vunpack.c.h.b16 %v2710
  %v2792 = vunpack.c.l.b16 %v2711
  %v2793 = vunpack.c.h.b16 %v2711
  %v2794 = vunpack.c.l.b16 %v2712
  %v2795 = vunpack.c.h.b16 %v2712
  %v2796 = vunpack.c.l.b16 %v2713
  %v2797 = vunpack.c.h.b16 %v2713
  %v2798 = vunpack.c.l.b16 %v2714
  %v2799 = vunpack.c.h.b16 %v2714
  %v2800 = vunpack.c.l.b16 %v2715
  %v2801 = vunpack.c.h.b16 %v2715
  %v2802 = vunpack.c.l.b16 %v2716
  %v2803 = vunpack.c.h.b16 %v2716
  %v2804 = vunpack.c.l.b16 %v2717
  %v2805 = vunpack.c.h.b16 %v2717
  %v2806 = vunpack.c.l.b16 %v2718
  %v2807 = vunpack.c.h.b16 %v2718
  %v2808 = vunpack.c.l.b16 %v2719
  %v2809 = vunpack.c.h.b16 %v2719
  %v2810 = vunpack.c.l.b16 %v2720
  %v2811 = vunpack.c.h.b16 %v2720
  %v2812 = vunpack.c.l.b16 %v2721
  %v2813 = vunpack.c.h.b16 %v2721
  %v2814 = vunpack.c.l.b16 %v2722
  %v2815 = vunpack.c.h.b16 %v2722
  %v2816 = vunpack.c.l.b16 %v2723
  %v2817 = vunpack.c.h.b16 %v2723
  %v2818 = vunpack.c.l.b16 %v2724
  %v2819 = vunpack.c.h.b16 %v2724
  %v2820 = vunpack.c.l.b16 %v2725
  %v2821 = vunpack.c.h.b16 %v2725
  %v2822 = vpack.c.b16 %v2758, %v2758
  %v2823 = vpack.c.b16 %v2759, %v2759
  %v2824 = vpack.c.b16 %v2760, %v2760
  %v2825 = vpack.c.b16 %v2761, %v2761
  %v2826 = vpack.c.b16 %v2762, %v2762
  %v2827 = vpack.c.b16 %v2763, %v2763
  %v2828 = vpack.c.b16 %v2764, %v2764
  %v2829 = vpack.c.b16 %v2765, %v2765
  %v2830 = vpack.c.b16 %v2766, %v2766
  %v2831 = vpack.c.b16 %v2767, %v2767
  %v2832 = vpack.c.b16 %v2768, %v2768
  %v2833 = vpack.c.b16 %v2769, %v2769
  %v2834 = vpack.c.b16 %v2770, %v2770
  %v2835 = vpack.c.b16 %v2771, %v2771
  %v2836 = vpack.c.b16 %v2772, %v2772
  %v2837 = vpack.c.b16 %v2773, %v2773
  %v2838 = vpack.c.b16 %v2774, %v2774
  %v2839 = vpack.c.b16 %v2775, %v2775
  %v2840 = vpack.c.b16 %v2776, %v2776
  %v2841 = vpack.c.b16 %v2777, %v2777
  %v2842 = vpack.c.b16 %v2778, %v2778
  %v2843 = vpack.c.b16 %v2779, %v2779
  %v2844 = vpack.c.b16 %v2780, %v2780
  %v2845 = vpack.c.b16 %v2781, %v2781
  %v2846 = vpack.c.b16 %v2782, %v2782
  %v2847 = vpack.c.b16 %v2783, %v2783
  %v2848 = vpack.c.b16 %v2784, %v2784
  %v2849 = vpack.c.b16 %v2785, %v2785
  %v2850 = vpack.c.b16 %v2786, %v2786
  %v2851 = vpack.c.b16 %v2787, %v2787
  %v2852 = vpack.c.b16 %v2788, %v2788
  %v2853 = vpack.c.b16 %v2789, %v2789
  %v2854 = vpack.c.b16 %v2790, %v2790
  %v2855 = vpack.c.b16 %v2791, %v2791
  %v2856 = vpack.c.b16 %v2792, %v2792
  %v2857 = vpack.c.b16 %v2793, %v2793
  %v2858 = vpack.c.b16 %v2794, %v2794
  %v2859 = vpack.c.b16 %v2795, %v2795
  %v2860 = vpack.c.b16 %v2796, %v2796
  %v2861 = vpack.c.b16 %v2797, %v2797
  %v2862 = vpack.c.b16 %v2798, %v2798
  %v2863 = vpack.c.b16 %v2799, %v2799
  %v2864 = vpack.c.b16 %v2800, %v2800
  %v2865 = vpack.c.b16 %v2801, %v2801
  %v2866 = vpack.c.b16 %v2802, %v2802
  %v2867 = vpack.c.b16 %v2803, %v2803
  %v2868 = vpack.c.b16 %v2804, %v2804
  %v2869 = vpack.c.b16 %v2805, %v2805
  %v2870 = vpack.c.b16 %v2806, %v2806
  %v2871 = vpack.c.b16 %v2807, %v2807
  %v2872 = vpack.c.b16 %v2808, %v2808
  %v2873 = vpack.c.b16 %v2809, %v2809
  %v2874 = vpack.c.b16 %v2810, %v2810
  %v2875 = vpack.c.b16 %v2811, %v2811
  %v2876 = vpack.c.b16 %v2812, %v2812
  %v2877 = vpack.c.b16 %v2813, %v2813
  %v2878 = vpack.c.b16 %v2814, %v2814
  %v2879 = vpack.c.b16 %v2815, %v2815
  %v2880 = vpack.c.b16 %v2816, %v2816
  %v2881 = vpack.c.b16 %v2817, %v2817
  %v2882 = vpack.c.b16 %v2818, %v2818
  %v2883 = vpack.c.b16 %v2819, %v2819
  %v2884 = vpack.c.b16 %v2820, %v2820
  %v2885 = vpack.c.b16 %v2821, %v2821
  %2950 = vst [vmem:[%s3] sm:$0xf] %v2822
  %2951 = vst [vmem:[%s3 + $0x4] sm:$0xf] %v2823
  %2952 = vst [vmem:[%s3 + $0x8] sm:$0xf] %v2824
  %2953 = vst [vmem:[%s3 + $0xc] sm:$0xf] %v2825
  %2954 = vst [vmem:[%s3 + $0x10] sm:$0xf] %v2826
  %2955 = vst [vmem:[%s3 + $0x14] sm:$0xf] %v2827
  %2956 = vst [vmem:[%s3 + $0x18] sm:$0xf] %v2828
  %2957 = vst [vmem:[%s3 + $0x1c] sm:$0xf] %v2829
  %2958 = vst [vmem:[%s3 + $0x20] sm:$0xf] %v2830
  %2959 = vst [vmem:[%s3 + $0x24] sm:$0xf] %v2831
  %2960 = vst [vmem:[%s3 + $0x28] sm:$0xf] %v2832
  %2961 = vst [vmem:[%s3 + $0x2c] sm:$0xf] %v2833
  %2962 = vst [vmem:[%s3 + $0x30] sm:$0xf] %v2834
  %2963 = vst [vmem:[%s3 + $0x34] sm:$0xf] %v2835
  %2964 = vst [vmem:[%s3 + $0x38] sm:$0xf] %v2836
  %2965 = vst [vmem:[%s3 + $0x3c] sm:$0xf] %v2837
  %2966 = vst [vmem:[%s3 + $0x40] sm:$0xf] %v2838
  %2967 = vst [vmem:[%s3 + $0x44] sm:$0xf] %v2839
  %2968 = vst [vmem:[%s3 + $0x48] sm:$0xf] %v2840
  %2969 = vst [vmem:[%s3 + $0x4c] sm:$0xf] %v2841
  %2970 = vst [vmem:[%s3 + $0x50] sm:$0xf] %v2842
  %2971 = vst [vmem:[%s3 + $0x54] sm:$0xf] %v2843
  %2972 = vst [vmem:[%s3 + $0x58] sm:$0xf] %v2844
  %2973 = vst [vmem:[%s3 + $0x5c] sm:$0xf] %v2845
  %2974 = vst [vmem:[%s3 + $0x60] sm:$0xf] %v2846
  %2975 = vst [vmem:[%s3 + $0x64] sm:$0xf] %v2847
  %2976 = vst [vmem:[%s3 + $0x68] sm:$0xf] %v2848
  %2977 = vst [vmem:[%s3 + $0x6c] sm:$0xf] %v2849
  %2978 = vst [vmem:[%s3 + $0x70] sm:$0xf] %v2850
  %2979 = vst [vmem:[%s3 + $0x74] sm:$0xf] %v2851
  %2980 = vst [vmem:[%s3 + $0x78] sm:$0xf] %v2852
  %2981 = vst [vmem:[%s3 + $0x7c] sm:$0xf] %v2853
  %2982 = vst [vmem:[%s3 + $0x80] sm:$0xf] %v2854
  %2983 = vst [vmem:[%s3 + $0x84] sm:$0xf] %v2855
  %2984 = vst [vmem:[%s3 + $0x88] sm:$0xf] %v2856
  %2985 = vst [vmem:[%s3 + $0x8c] sm:$0xf] %v2857
  %2986 = vst [vmem:[%s3 + $0x90] sm:$0xf] %v2858
  %2987 = vst [vmem:[%s3 + $0x94] sm:$0xf] %v2859
  %2988 = vst [vmem:[%s3 + $0x98] sm:$0xf] %v2860
  %2989 = vst [vmem:[%s3 + $0x9c] sm:$0xf] %v2861
  %2990 = vst [vmem:[%s3 + $0xa0] sm:$0xf] %v2862
  %2991 = vst [vmem:[%s3 + $0xa4] sm:$0xf] %v2863
  %2992 = vst [vmem:[%s3 + $0xa8] sm:$0xf] %v2864
  %2993 = vst [vmem:[%s3 + $0xac] sm:$0xf] %v2865
  %2994 = vst [vmem:[%s3 + $0xb0] sm:$0xf] %v2866
  %2995 = vst [vmem:[%s3 + $0xb4] sm:$0xf] %v2867
  %2996 = vst [vmem:[%s3 + $0xb8] sm:$0xf] %v2868
  %2997 = vst [vmem:[%s3 + $0xbc] sm:$0xf] %v2869
  %2998 = vst [vmem:[%s3 + $0xc0] sm:$0xf] %v2870
  %2999 = vst [vmem:[%s3 + $0xc4] sm:$0xf] %v2871
  %3000 = vst [vmem:[%s3 + $0xc8] sm:$0xf] %v2872
  %3001 = vst [vmem:[%s3 + $0xcc] sm:$0xf] %v2873
  %3002 = vst [vmem:[%s3 + $0xd0] sm:$0xf] %v2874
  %3003 = vst [vmem:[%s3 + $0xd4] sm:$0xf] %v2875
  %3004 = vst [vmem:[%s3 + $0xd8] sm:$0xf] %v2876
  %3005 = vst [vmem:[%s3 + $0xdc] sm:$0xf] %v2877
  %3006 = vst [vmem:[%s3 + $0xe0] sm:$0xf] %v2878
  %3007 = vst [vmem:[%s3 + $0xe4] sm:$0xf] %v2879
  %3008 = vst [vmem:[%s3 + $0xe8] sm:$0xf] %v2880
  %3009 = vst [vmem:[%s3 + $0xec] sm:$0xf] %v2881
  %3010 = vst [vmem:[%s3 + $0xf0] sm:$0xf] %v2882
  %3011 = vst [vmem:[%s3 + $0xf4] sm:$0xf] %v2883
  %3012 = vst [vmem:[%s3 + $0xf8] sm:$0xf] %v2884
  %3013 = vst [vmem:[%s3 + $0xfc] sm:$0xf] %v2885
  // Predicated region
  $region14: #{my_cnn_network_forward.4} parent=0 // pred_check
    _
  $region15: #{my_cnn_network_forward.4} parent=0 // pred_check_branch
    %3015 = sbr.rel (0) target = $region17
  $region16: #{my_cnn_network_forward.4} parent=0 // pred_region
    _
  $region17: #{my_cnn_network_forward.4} parent=0 // pred_fallthru
    _
  // Predicated region
  $region18: #{my_cnn_network_forward.4} parent=0 // pred_check
    _
  $region19: #{my_cnn_network_forward.4} parent=0 // pred_check_branch
    %3017 = sbr.rel (0) target = $region21
  $region20: #{my_cnn_network_forward.4} parent=0 // pred_region
    _
  $region21: #{my_cnn_network_forward.4} parent=0 // pred_fallthru
    _

// kernel: my_cnn_network_forward.5
$region0: #{my_cnn_network_forward.5}
  #allocation0 [shape = 'u32[]', space=smem, size = 0x4, offset = 0x4, fixed_abs, tag = 'smem constant byte address 0x4 - core index']
  #allocation1 [shape = 'u32[144,128]{1,0:T(1,128)}', space=vmem, size = 0x12000, scoped, tag = 'internal scratch']
  %s0 = inlined_call_operand.vmem [shape: bf16[4,128,180], index: 0, kind: input, shape index: {}]
  %s1 = inlined_call_operand.vmem [shape: bf16[180,128], index: 1, kind: input, shape index: {}]
  %s2 = inlined_call_operand.vmem [shape: f32[1,128], index: 2, kind: input, shape index: {}]
  %s3 = inlined_call_operand.vmem [shape: bf16[128,128], index: 3, kind: output, shape index: {}]
  %s4 = sld [smem:[#allocation0]]
  $region22: #{my_cnn_network_forward.5} parent=0
    _
  %s6 = ssub.s32 1, %s4
  %s7 = scalar_select 0, %s6, %s4
  // Predicated region
  $region2: #{my_cnn_network_forward.5} parent=0 // pred_check
    _
  $region3: #{my_cnn_network_forward.5} parent=0 // pred_check_branch
    %9 = sbr.rel (0) target = $region5
  $region4: #{my_cnn_network_forward.5} parent=0 // pred_region
    _
  $region5: #{my_cnn_network_forward.5} parent=0 // pred_fallthru
    _
  // Predicated region
  $region6: #{my_cnn_network_forward.5} parent=0 // pred_check
    _
  $region7: #{my_cnn_network_forward.5} parent=0 // pred_check_branch
    %11 = sbr.rel (0) target = $region9
  $region8: #{my_cnn_network_forward.5} parent=0 // pred_region
    _
  $region9: #{my_cnn_network_forward.5} parent=0 // pred_fallthru
    _
  // Predicated region
  $region10: #{my_cnn_network_forward.5} parent=0 // pred_check
    _
  $region11: #{my_cnn_network_forward.5} parent=0 // pred_check_branch
    %13 = sbr.rel (0) target = $region13
  $region12: #{my_cnn_network_forward.5} parent=0 // pred_region
    _
  $region13: #{my_cnn_network_forward.5} parent=0 // pred_fallthru
    _
  %v15 = vld [vmem:[%s0] sm:$0xff]
  %v16 = vld [vmem:[%s0 + $0x8] sm:$0xff]
  %v17 = vld [vmem:[%s0 + $0x10] sm:$0xff]
  %v18 = vld [vmem:[%s0 + $0x18] sm:$0xff]
  %v19 = vld [vmem:[%s0 + $0x20] sm:$0xff]
  %v20 = vld [vmem:[%s0 + $0x28] sm:$0xff]
  %v21 = vld [vmem:[%s0 + $0x30] sm:$0xff]
  %v22 = vld [vmem:[%s0 + $0x38] sm:$0xff]
  %v23 = vld [vmem:[%s0 + $0x40] sm:$0xff]
  %v24 = vld [vmem:[%s0 + $0x48] sm:$0xff]
  %v25 = vld [vmem:[%s0 + $0x50] sm:$0xff]
  %v26 = vld [vmem:[%s0 + $0x58] sm:$0xff]
  %v27 = vld [vmem:[%s0 + $0x60] sm:$0xff]
  %v28 = vld [vmem:[%s0 + $0x68] sm:$0xff]
  %v29 = vld [vmem:[%s0 + $0x70] sm:$0xff]
  %v30 = vld [vmem:[%s0 + $0x78] sm:$0xff]
  %v31 = vld [vmem:[%s0 + $0x80] sm:$0xff]
  %v32 = vld [vmem:[%s0 + $0x88] sm:$0xff]
  %v33 = vld [vmem:[%s0 + $0x90] sm:$0xff]
  %v34 = vld [vmem:[%s0 + $0x98] sm:$0xff]
  %v35 = vld [vmem:[%s0 + $0xa0] sm:$0xff]
  %v36 = vld [vmem:[%s0 + $0xa8] sm:$0xff]
  %v37 = vld [vmem:[%s0 + $0xb0] sm:$0xff]
  %v38 = vld [vmem:[%s0 + $0xb8] sm:$0xff]
  %v39 = vld [vmem:[%s0 + $0xc0] sm:$0xff]
  %v40 = vld [vmem:[%s0 + $0xc8] sm:$0xff]
  %v41 = vld [vmem:[%s0 + $0xd0] sm:$0xff]
  %v42 = vld [vmem:[%s0 + $0xd8] sm:$0xff]
  %v43 = vld [vmem:[%s0 + $0xe0] sm:$0xff]
  %v44 = vld [vmem:[%s0 + $0xe8] sm:$0xff]
  %v45 = vld [vmem:[%s0 + $0xf0] sm:$0xff]
  %v46 = vld [vmem:[%s0 + $0xf8] sm:$0xff]
  %v47 = vld [vmem:[%s0 + $0x100] sm:$0xff]
  %v48 = vld [vmem:[%s0 + $0x108] sm:$0xff]
  %v49 = vld [vmem:[%s0 + $0x110] sm:$0xff]
  %v50 = vld [vmem:[%s0 + $0x118] sm:$0xff]
  %v51 = vld [vmem:[%s0 + $0x120] sm:$0xff]
  %v52 = vld [vmem:[%s0 + $0x128] sm:$0xff]
  %v53 = vld [vmem:[%s0 + $0x130] sm:$0xff]
  %v54 = vld [vmem:[%s0 + $0x138] sm:$0xff]
  %v55 = vld [vmem:[%s0 + $0x140] sm:$0xff]
  %v56 = vld [vmem:[%s0 + $0x148] sm:$0xff]
  %v57 = vld [vmem:[%s0 + $0x150] sm:$0xff]
  %v58 = vld [vmem:[%s0 + $0x158] sm:$0xff]
  %v59 = vld [vmem:[%s0 + $0x160] sm:$0xff]
  %v60 = vld [vmem:[%s0 + $0x168] sm:$0xff]
  %v61 = vld [vmem:[%s0 + $0x170] sm:$0xff]
  %v62 = vld [vmem:[%s0 + $0x178] sm:$0xff]
  %v63 = vld [vmem:[%s0 + $0x180] sm:$0xff]
  %v64 = vld [vmem:[%s0 + $0x188] sm:$0xff]
  %v65 = vld [vmem:[%s0 + $0x190] sm:$0xff]
  %v66 = vld [vmem:[%s0 + $0x198] sm:$0xff]
  %v67 = vld [vmem:[%s0 + $0x1a0] sm:$0xff]
  %v68 = vld [vmem:[%s0 + $0x1a8] sm:$0xff]
  %v69 = vld [vmem:[%s0 + $0x1b0] sm:$0xff]
  %v70 = vld [vmem:[%s0 + $0x1b8] sm:$0xff]
  %v71 = vld [vmem:[%s0 + $0x1c0] sm:$0xff]
  %v72 = vld [vmem:[%s0 + $0x1c8] sm:$0xff]
  %v73 = vld [vmem:[%s0 + $0x1d0] sm:$0xff]
  %v74 = vld [vmem:[%s0 + $0x1d8] sm:$0xff]
  %v75 = vld [vmem:[%s0 + $0x1e0] sm:$0xff]
  %v76 = vld [vmem:[%s0 + $0x1e8] sm:$0xff]
  %v77 = vld [vmem:[%s0 + $0x1f0] sm:$0xff]
  %v78 = vld [vmem:[%s0 + $0x1f8] sm:$0xff]
  %v79 = vld [vmem:[%s1] sm:$0xf]
  %v80 = vld [vmem:[%s1 + $0x4] sm:$0xf]
  %v81 = vld [vmem:[%s1 + $0x8] sm:$0xf]
  %v82 = vld [vmem:[%s1 + $0xc] sm:$0xf]
  %v83 = vld [vmem:[%s1 + $0x10] sm:$0xf]
  %v84 = vld [vmem:[%s1 + $0x14] sm:$0xf]
  %v85 = vld [vmem:[%s1 + $0x18] sm:$0xf]
  %v86 = vld [vmem:[%s1 + $0x1c] sm:$0xf]
  %v87 = vld [vmem:[%s1 + $0x20] sm:$0xf]
  %v88 = vld [vmem:[%s1 + $0x24] sm:$0xf]
  %v89 = vld [vmem:[%s1 + $0x28] sm:$0xf]
  %v90 = vld [vmem:[%s1 + $0x2c] sm:$0xf]
  %v91 = vld [vmem:[%s1 + $0x30] sm:$0xf]
  %v92 = vld [vmem:[%s1 + $0x34] sm:$0xf]
  %v93 = vld [vmem:[%s1 + $0x38] sm:$0xf]
  %v94 = vld [vmem:[%s1 + $0x3c] sm:$0xf]
  %v95 = vld [vmem:[%s1 + $0x40] sm:$0xf]
  %v96 = vld [vmem:[%s1 + $0x44] sm:$0xf]
  %v97 = vld [vmem:[%s1 + $0x48] sm:$0xf]
  %v98 = vld [vmem:[%s1 + $0x4c] sm:$0xf]
  %v99 = vld [vmem:[%s1 + $0x50] sm:$0xf]
  %v100 = vld [vmem:[%s1 + $0x54] sm:$0xf]
  %v101 = vld [vmem:[%s1 + $0x58] sm:$0x3]
  %v166 = vunpack.c.l.b16 %v15
  %v167 = vunpack.c.h.b16 %v15
  %v168 = vunpack.c.l.b16 %v16
  %v169 = vunpack.c.h.b16 %v16
  %v170 = vunpack.c.l.b16 %v17
  %v171 = vunpack.c.h.b16 %v17
  %v172 = vunpack.c.l.b16 %v18
  %v173 = vunpack.c.h.b16 %v18
  %v174 = vunpack.c.l.b16 %v19
  %v175 = vunpack.c.h.b16 %v19
  %v176 = vunpack.c.l.b16 %v20
  %v177 = vunpack.c.h.b16 %v20
  %v178 = vunpack.c.l.b16 %v21
  %v179 = vunpack.c.h.b16 %v21
  %v180 = vunpack.c.l.b16 %v22
  %v181 = vunpack.c.h.b16 %v22
  %v182 = vunpack.c.l.b16 %v23
  %v183 = vunpack.c.h.b16 %v23
  %v184 = vunpack.c.l.b16 %v24
  %v185 = vunpack.c.h.b16 %v24
  %v186 = vunpack.c.l.b16 %v25
  %v187 = vunpack.c.h.b16 %v25
  %v188 = vunpack.c.l.b16 %v26
  %v189 = vunpack.c.h.b16 %v26
  %v190 = vunpack.c.l.b16 %v27
  %v191 = vunpack.c.h.b16 %v27
  %v192 = vunpack.c.l.b16 %v28
  %v193 = vunpack.c.h.b16 %v28
  %v194 = vunpack.c.l.b16 %v29
  %v195 = vunpack.c.h.b16 %v29
  %v196 = vunpack.c.l.b16 %v30
  %v197 = vunpack.c.h.b16 %v30
  %v198 = vunpack.c.l.b16 %v31
  %v199 = vunpack.c.h.b16 %v31
  %v200 = vunpack.c.l.b16 %v32
  %v201 = vunpack.c.h.b16 %v32
  %v202 = vunpack.c.l.b16 %v33
  %v203 = vunpack.c.h.b16 %v33
  %v204 = vunpack.c.l.b16 %v34
  %v205 = vunpack.c.h.b16 %v34
  %v206 = vunpack.c.l.b16 %v35
  %v207 = vunpack.c.h.b16 %v35
  %v208 = vunpack.c.l.b16 %v36
  %v209 = vunpack.c.h.b16 %v36
  %v210 = vunpack.c.l.b16 %v37
  %v211 = vunpack.c.h.b16 %v37
  %v212 = vunpack.c.l.b16 %v38
  %v213 = vunpack.c.h.b16 %v38
  %v214 = vunpack.c.l.b16 %v39
  %v215 = vunpack.c.h.b16 %v39
  %v216 = vunpack.c.l.b16 %v40
  %v217 = vunpack.c.h.b16 %v40
  %v218 = vunpack.c.l.b16 %v41
  %v219 = vunpack.c.h.b16 %v41
  %v220 = vunpack.c.l.b16 %v42
  %v221 = vunpack.c.h.b16 %v42
  %v222 = vunpack.c.l.b16 %v43
  %v223 = vunpack.c.h.b16 %v43
  %v224 = vunpack.c.l.b16 %v44
  %v225 = vunpack.c.h.b16 %v44
  %v226 = vunpack.c.l.b16 %v45
  %v227 = vunpack.c.h.b16 %v45
  %v228 = vunpack.c.l.b16 %v46
  %v229 = vunpack.c.h.b16 %v46
  %v230 = vunpack.c.l.b16 %v47
  %v231 = vunpack.c.h.b16 %v47
  %v232 = vunpack.c.l.b16 %v48
  %v233 = vunpack.c.h.b16 %v48
  %v234 = vunpack.c.l.b16 %v49
  %v235 = vunpack.c.h.b16 %v49
  %v236 = vunpack.c.l.b16 %v50
  %v237 = vunpack.c.h.b16 %v50
  %v238 = vunpack.c.l.b16 %v51
  %v239 = vunpack.c.h.b16 %v51
  %v240 = vunpack.c.l.b16 %v52
  %v241 = vunpack.c.h.b16 %v52
  %v242 = vunpack.c.l.b16 %v53
  %v243 = vunpack.c.h.b16 %v53
  %v244 = vunpack.c.l.b16 %v54
  %v245 = vunpack.c.h.b16 %v54
  %v246 = vunpack.c.l.b16 %v55
  %v247 = vunpack.c.h.b16 %v55
  %v248 = vunpack.c.l.b16 %v56
  %v249 = vunpack.c.h.b16 %v56
  %v250 = vunpack.c.l.b16 %v57
  %v251 = vunpack.c.h.b16 %v57
  %v252 = vunpack.c.l.b16 %v58
  %v253 = vunpack.c.h.b16 %v58
  %v254 = vunpack.c.l.b16 %v59
  %v255 = vunpack.c.h.b16 %v59
  %v256 = vunpack.c.l.b16 %v60
  %v257 = vunpack.c.h.b16 %v60
  %v258 = vunpack.c.l.b16 %v61
  %v259 = vunpack.c.h.b16 %v61
  %v260 = vunpack.c.l.b16 %v62
  %v261 = vunpack.c.h.b16 %v62
  %v262 = vunpack.c.l.b16 %v63
  %v263 = vunpack.c.h.b16 %v63
  %v264 = vunpack.c.l.b16 %v64
  %v265 = vunpack.c.h.b16 %v64
  %v266 = vunpack.c.l.b16 %v65
  %v267 = vunpack.c.h.b16 %v65
  %v268 = vunpack.c.l.b16 %v66
  %v269 = vunpack.c.h.b16 %v66
  %v270 = vunpack.c.l.b16 %v67
  %v271 = vunpack.c.h.b16 %v67
  %v272 = vunpack.c.l.b16 %v68
  %v273 = vunpack.c.h.b16 %v68
  %v274 = vunpack.c.l.b16 %v69
  %v275 = vunpack.c.h.b16 %v69
  %v276 = vunpack.c.l.b16 %v70
  %v277 = vunpack.c.h.b16 %v70
  %v278 = vunpack.c.l.b16 %v71
  %v279 = vunpack.c.h.b16 %v71
  %v280 = vunpack.c.l.b16 %v72
  %v281 = vunpack.c.h.b16 %v72
  %v282 = vunpack.c.l.b16 %v73
  %v283 = vunpack.c.h.b16 %v73
  %v284 = vunpack.c.l.b16 %v74
  %v285 = vunpack.c.h.b16 %v74
  %v286 = vunpack.c.l.b16 %v75
  %v287 = vunpack.c.h.b16 %v75
  %v288 = vunpack.c.l.b16 %v76
  %v289 = vunpack.c.h.b16 %v76
  %v290 = vunpack.c.l.b16 %v77
  %v291 = vunpack.c.h.b16 %v77
  %v292 = vunpack.c.l.b16 %v78
  %v293 = vunpack.c.h.b16 %v78
  %v294 = vpack.c.b16 %v168, %v166
  %v295 = vpack.c.b16 %v169, %v167
  %v296 = vpack.c.b16 %v172, %v170
  %v297 = vpack.c.b16 %v173, %v171
  %v298 = vpack.c.b16 %v176, %v174
  %v299 = vpack.c.b16 %v177, %v175
  %v300 = vpack.c.b16 %v180, %v178
  %v301 = vpack.c.b16 %v181, %v179
  %v302 = vpack.c.b16 %v184, %v182
  %v303 = vpack.c.b16 %v185, %v183
  %v304 = vpack.c.b16 %v188, %v186
  %v305 = vpack.c.b16 %v189, %v187
  %v306 = vpack.c.b16 %v192, %v190
  %v307 = vpack.c.b16 %v193, %v191
  %v308 = vpack.c.b16 %v196, %v194
  %v309 = vpack.c.b16 %v197, %v195
  %v310 = vpack.c.b16 %v200, %v198
  %v311 = vpack.c.b16 %v201, %v199
  %v312 = vpack.c.b16 %v204, %v202
  %v313 = vpack.c.b16 %v205, %v203
  %v314 = vpack.c.b16 %v208, %v206
  %v315 = vpack.c.b16 %v209, %v207
  %v316 = vpack.c.b16 %v212, %v210
  %v317 = vpack.c.b16 %v213, %v211
  %v318 = vpack.c.b16 %v216, %v214
  %v319 = vpack.c.b16 %v217, %v215
  %v320 = vpack.c.b16 %v220, %v218
  %v321 = vpack.c.b16 %v221, %v219
  %v322 = vpack.c.b16 %v224, %v222
  %v323 = vpack.c.b16 %v225, %v223
  %v324 = vpack.c.b16 %v228, %v226
  %v325 = vpack.c.b16 %v229, %v227
  %v326 = vpack.c.b16 %v232, %v230
  %v327 = vpack.c.b16 %v233, %v231
  %v328 = vpack.c.b16 %v236, %v234
  %v329 = vpack.c.b16 %v237, %v235
  %v330 = vpack.c.b16 %v240, %v238
  %v331 = vpack.c.b16 %v241, %v239
  %v332 = vpack.c.b16 %v244, %v242
  %v333 = vpack.c.b16 %v245, %v243
  %v334 = vpack.c.b16 %v248, %v246
  %v335 = vpack.c.b16 %v249, %v247
  %v336 = vpack.c.b16 %v252, %v250
  %v337 = vpack.c.b16 %v253, %v251
  %v338 = vpack.c.b16 %v256, %v254
  %v339 = vpack.c.b16 %v257, %v255
  %v340 = vpack.c.b16 %v260, %v258
  %v341 = vpack.c.b16 %v261, %v259
  %v342 = vpack.c.b16 %v264, %v262
  %v343 = vpack.c.b16 %v265, %v263
  %v344 = vpack.c.b16 %v268, %v266
  %v345 = vpack.c.b16 %v269, %v267
  %v346 = vpack.c.b16 %v272, %v270
  %v347 = vpack.c.b16 %v273, %v271
  %v348 = vpack.c.b16 %v276, %v274
  %v349 = vpack.c.b16 %v277, %v275
  %v350 = vpack.c.b16 %v280, %v278
  %v351 = vpack.c.b16 %v281, %v279
  %v352 = vpack.c.b16 %v284, %v282
  %v353 = vpack.c.b16 %v285, %v283
  %v354 = vpack.c.b16 %v288, %v286
  %v355 = vpack.c.b16 %v289, %v287
  %v356 = vpack.c.b16 %v292, %v290
  %v357 = vpack.c.b16 %v293, %v291
  %v413 = vunpack.c.l.b16 %v79
  %v414 = vunpack.c.l.b16 %v80
  %v415 = vunpack.c.l.b16 %v81
  %v416 = vunpack.c.l.b16 %v82
  %v417 = vunpack.c.l.b16 %v83
  %v418 = vunpack.c.l.b16 %v84
  %v419 = vunpack.c.l.b16 %v85
  %v420 = vunpack.c.l.b16 %v86
  %v421 = vunpack.c.l.b16 %v87
  %v422 = vunpack.c.l.b16 %v88
  %v423 = vunpack.c.l.b16 %v89
  %v424 = vunpack.c.l.b16 %v90
  %v425 = vunpack.c.l.b16 %v91
  %v426 = vunpack.c.l.b16 %v92
  %v427 = vunpack.c.l.b16 %v93
  %v428 = vunpack.c.l.b16 %v94
  %v429 = vunpack.c.l.b16 %v95
  %v430 = vunpack.c.l.b16 %v96
  %v431 = vunpack.c.l.b16 %v97
  %v432 = vunpack.c.l.b16 %v98
  %v433 = vunpack.c.l.b16 %v99
  %v434 = vunpack.c.l.b16 %v100
  %v435 = vunpack.c.l.b16 %v101
  %v436 = vpack.c.b16 %v414, %v413
  %v437 = vpack.c.b16 %v416, %v415
  %v438 = vpack.c.b16 %v418, %v417
  %v439 = vpack.c.b16 %v420, %v419
  %v440 = vpack.c.b16 %v422, %v421
  %v441 = vpack.c.b16 %v424, %v423
  %v442 = vpack.c.b16 %v426, %v425
  %v443 = vpack.c.b16 %v428, %v427
  %v444 = vpack.c.b16 %v430, %v429
  %v445 = vpack.c.b16 %v432, %v431
  %v446 = vpack.c.b16 %v434, %v433
  %v447 = vpack.c.b16 %v435, %v435
  %vm459 = vcmask 424960
  %v461 = vsel %vm459, %v295, 0
  %v464 = vsel %vm459, %v297, 0
  %v467 = vsel %vm459, %v299, 0
  %v470 = vsel %vm459, %v301, 0
  %v473 = vsel %vm459, %v303, 0
  %v476 = vsel %vm459, %v305, 0
  %v479 = vsel %vm459, %v307, 0
  %v482 = vsel %vm459, %v309, 0
  %v485 = vsel %vm459, %v311, 0
  %v488 = vsel %vm459, %v313, 0
  %v491 = vsel %vm459, %v315, 0
  %v494 = vsel %vm459, %v317, 0
  %v497 = vsel %vm459, %v319, 0
  %v500 = vsel %vm459, %v321, 0
  %v503 = vsel %vm459, %v323, 0
  %v506 = vsel %vm459, %v325, 0
  %v509 = vsel %vm459, %v327, 0
  %v512 = vsel %vm459, %v329, 0
  %v515 = vsel %vm459, %v331, 0
  %v518 = vsel %vm459, %v333, 0
  %v521 = vsel %vm459, %v335, 0
  %v524 = vsel %vm459, %v337, 0
  %v527 = vsel %vm459, %v339, 0
  %v530 = vsel %vm459, %v341, 0
  %v533 = vsel %vm459, %v343, 0
  %v536 = vsel %vm459, %v345, 0
  %v539 = vsel %vm459, %v347, 0
  %v542 = vsel %vm459, %v349, 0
  %v545 = vsel %vm459, %v351, 0
  %v548 = vsel %vm459, %v353, 0
  %v551 = vsel %vm459, %v355, 0
  %v554 = vsel %vm459, %v357, 0
  %vm556 = vcmask 1041408
  %v558 = vsel %vm556, %v447, 0
  %560 = vmatprep.subr.bf16.mxu0 0
  %561 = vmatpush1.bf16.msra.mxu0 %v443
  %562 = vmatprep.subr.bf16.mxu0 0
  %563 = vmatpush1.bf16.msra.mxu0 %v442
  %564 = vmatprep.subr.bf16.mxu0 0
  %565 = vmatpush1.bf16.msra.mxu0 %v441
  %566 = vmatprep.subr.bf16.mxu0 0
  %567 = vmatpush1.bf16.msra.mxu0 %v440
  %568 = vmatprep.subr.bf16.mxu0 0
  %569 = vmatpush1.bf16.msra.mxu0 %v439
  %570 = vmatprep.subr.bf16.mxu0 0
  %571 = vmatpush1.bf16.msra.mxu0 %v438
  %572 = vmatprep.subr.bf16.mxu0 0
  %573 = vmatpush1.bf16.msra.mxu0 %v437
  %574 = vmatprep.subr.bf16.mxu0 0
  %575 = vmatpush1.bf16.msra.mxu0 %v436
  %576 = vmatprep.subr.bf16.mxu0 0
  %577 = vmatpush2.bf16.msra.mxu0 0
  %578 = vmatprep.subr.bf16.mxu0 0
  %579 = vmatpush2.bf16.msra.mxu0 0
  %580 = vmatprep.subr.bf16.mxu0 0
  %581 = vmatpush2.bf16.msra.mxu0 0
  %582 = vmatprep.subr.bf16.mxu0 0
  %583 = vmatpush2.bf16.msra.mxu0 0
  %584 = vmatprep.subr.bf16.mxu0 0
  %585 = vmatpush2.bf16.msra.mxu0 %v558
  %586 = vmatprep.subr.bf16.mxu0 0
  %587 = vmatpush2.bf16.msra.mxu0 %v446
  %588 = vmatprep.subr.bf16.mxu0 0
  %589 = vmatpush2.bf16.msra.mxu0 %v445
  %590 = vmatprep.subr.bf16.mxu0 0
  %591 = vmatpush2.bf16.msra.mxu0 %v444
  %592 = vmatprep.mubr.bf16.mxu0 %v461
  %593 = vmatmul.mubr.bf16.gmra.mxu0 %v294
  %v594 = vpop.f32.mrf.mxu0
  %v595 = vadd.f32 0.0, %v594
  %v596 = vpop.f32.mrf.mxu0
  %v597 = vpop.f32.mrf.mxu0
  %v598 = vadd.f32 0.0, %v597
  %v599 = vpop.f32.mrf.mxu0
  %600 = vmatprep.mubr.bf16.mxu0 %v464
  %601 = vmatmul.mubr.bf16.gmra.mxu0 %v296
  %v602 = vpop.f32.mrf.mxu0
  %v603 = vadd.f32 0.0, %v602
  %v604 = vpop.f32.mrf.mxu0
  %v605 = vpop.f32.mrf.mxu0
  %v606 = vadd.f32 0.0, %v605
  %v607 = vpop.f32.mrf.mxu0
  %608 = vmatprep.mubr.bf16.mxu0 %v467
  %609 = vmatmul.mubr.bf16.gmra.mxu0 %v298
  %v610 = vpop.f32.mrf.mxu0
  %v611 = vadd.f32 0.0, %v610
  %v612 = vpop.f32.mrf.mxu0
  %v613 = vpop.f32.mrf.mxu0
  %v614 = vadd.f32 0.0, %v613
  %v615 = vpop.f32.mrf.mxu0
  %616 = vmatprep.mubr.bf16.mxu0 %v470
  %617 = vmatmul.mubr.bf16.gmra.mxu0 %v300
  %v618 = vpop.f32.mrf.mxu0
  %v619 = vadd.f32 0.0, %v618
  %v620 = vpop.f32.mrf.mxu0
  %v621 = vpop.f32.mrf.mxu0
  %v622 = vadd.f32 0.0, %v621
  %v623 = vpop.f32.mrf.mxu0
  %624 = vmatprep.mubr.bf16.mxu0 %v473
  %625 = vmatmul.mubr.bf16.gmra.mxu0 %v302
  %v626 = vpop.f32.mrf.mxu0
  %v627 = vadd.f32 0.0, %v626
  %v628 = vpop.f32.mrf.mxu0
  %v629 = vpop.f32.mrf.mxu0
  %v630 = vadd.f32 0.0, %v629
  %v631 = vpop.f32.mrf.mxu0
  %632 = vmatprep.mubr.bf16.mxu0 %v476
  %633 = vmatmul.mubr.bf16.gmra.mxu0 %v304
  %v634 = vpop.f32.mrf.mxu0
  %v635 = vadd.f32 0.0, %v634
  %v636 = vpop.f32.mrf.mxu0
  %v637 = vpop.f32.mrf.mxu0
  %v638 = vadd.f32 0.0, %v637
  %v639 = vpop.f32.mrf.mxu0
  %640 = vmatprep.mubr.bf16.mxu0 %v479
  %641 = vmatmul.mubr.bf16.gmra.mxu0 %v306
  %v642 = vpop.f32.mrf.mxu0
  %v643 = vadd.f32 0.0, %v642
  %v644 = vpop.f32.mrf.mxu0
  %v645 = vpop.f32.mrf.mxu0
  %v646 = vadd.f32 0.0, %v645
  %v647 = vpop.f32.mrf.mxu0
  %648 = vmatprep.mubr.bf16.mxu0 %v482
  %649 = vmatmul.mubr.bf16.gmra.mxu0 %v308
  %v650 = vpop.f32.mrf.mxu0
  %v651 = vadd.f32 0.0, %v650
  %v652 = vpop.f32.mrf.mxu0
  %v653 = vpop.f32.mrf.mxu0
  %v654 = vadd.f32 0.0, %v653
  %v655 = vpop.f32.mrf.mxu0
  %656 = vmatprep.mubr.bf16.mxu0 %v485
  %657 = vmatmul.mubr.bf16.gmra.mxu0 %v310
  %v658 = vpop.f32.mrf.mxu0
  %v659 = vadd.f32 0.0, %v658
  %v660 = vpop.f32.mrf.mxu0
  %v661 = vpop.f32.mrf.mxu0
  %v662 = vadd.f32 0.0, %v661
  %v663 = vpop.f32.mrf.mxu0
  %664 = vmatprep.mubr.bf16.mxu0 %v488
  %665 = vmatmul.mubr.bf16.gmra.mxu0 %v312
  %v666 = vpop.f32.mrf.mxu0
  %v667 = vadd.f32 0.0, %v666
  %v668 = vpop.f32.mrf.mxu0
  %v669 = vpop.f32.mrf.mxu0
  %v670 = vadd.f32 0.0, %v669
  %v671 = vpop.f32.mrf.mxu0
  %672 = vmatprep.mubr.bf16.mxu0 %v491
  %673 = vmatmul.mubr.bf16.gmra.mxu0 %v314
  %v674 = vpop.f32.mrf.mxu0
  %v675 = vadd.f32 0.0, %v674
  %v676 = vpop.f32.mrf.mxu0
  %v677 = vpop.f32.mrf.mxu0
  %v678 = vadd.f32 0.0, %v677
  %v679 = vpop.f32.mrf.mxu0
  %680 = vmatprep.mubr.bf16.mxu0 %v494
  %681 = vmatmul.mubr.bf16.gmra.mxu0 %v316
  %v682 = vpop.f32.mrf.mxu0
  %v683 = vadd.f32 0.0, %v682
  %v684 = vpop.f32.mrf.mxu0
  %v685 = vpop.f32.mrf.mxu0
  %v686 = vadd.f32 0.0, %v685
  %v687 = vpop.f32.mrf.mxu0
  %688 = vmatprep.mubr.bf16.mxu0 %v497
  %689 = vmatmul.mubr.bf16.gmra.mxu0 %v318
  %v690 = vpop.f32.mrf.mxu0
  %v691 = vadd.f32 0.0, %v690
  %v692 = vpop.f32.mrf.mxu0
  %v693 = vpop.f32.mrf.mxu0
  %v694 = vadd.f32 0.0, %v693
  %v695 = vpop.f32.mrf.mxu0
  %696 = vmatprep.mubr.bf16.mxu0 %v500
  %697 = vmatmul.mubr.bf16.gmra.mxu0 %v320
  %v698 = vpop.f32.mrf.mxu0
  %v699 = vadd.f32 0.0, %v698
  %v700 = vpop.f32.mrf.mxu0
  %v701 = vpop.f32.mrf.mxu0
  %v702 = vadd.f32 0.0, %v701
  %v703 = vpop.f32.mrf.mxu0
  %704 = vmatprep.mubr.bf16.mxu0 %v503
  %705 = vmatmul.mubr.bf16.gmra.mxu0 %v322
  %v706 = vpop.f32.mrf.mxu0
  %v707 = vadd.f32 0.0, %v706
  %v708 = vpop.f32.mrf.mxu0
  %v709 = vpop.f32.mrf.mxu0
  %v710 = vadd.f32 0.0, %v709
  %v711 = vpop.f32.mrf.mxu0
  %712 = vmatprep.mubr.bf16.mxu0 %v506
  %713 = vmatmul.mubr.bf16.gmra.mxu0 %v324
  %v714 = vpop.f32.mrf.mxu0
  %v715 = vadd.f32 0.0, %v714
  %v716 = vpop.f32.mrf.mxu0
  %v717 = vpop.f32.mrf.mxu0
  %v718 = vadd.f32 0.0, %v717
  %v719 = vpop.f32.mrf.mxu0
  %720 = vmatprep.mubr.bf16.mxu0 %v509
  %721 = vmatmul.mubr.bf16.gmra.mxu0 %v326
  %v722 = vpop.f32.mrf.mxu0
  %v723 = vadd.f32 0.0, %v722
  %v724 = vpop.f32.mrf.mxu0
  %v725 = vpop.f32.mrf.mxu0
  %v726 = vadd.f32 0.0, %v725
  %v727 = vpop.f32.mrf.mxu0
  %728 = vmatprep.mubr.bf16.mxu0 %v512
  %729 = vmatmul.mubr.bf16.gmra.mxu0 %v328
  %v730 = vpop.f32.mrf.mxu0
  %v731 = vadd.f32 0.0, %v730
  %v732 = vpop.f32.mrf.mxu0
  %v733 = vpop.f32.mrf.mxu0
  %v734 = vadd.f32 0.0, %v733
  %v735 = vpop.f32.mrf.mxu0
  %736 = vmatprep.mubr.bf16.mxu0 %v515
  %737 = vmatmul.mubr.bf16.gmra.mxu0 %v330
  %v738 = vpop.f32.mrf.mxu0
  %v739 = vadd.f32 0.0, %v738
  %v740 = vpop.f32.mrf.mxu0
  %v741 = vpop.f32.mrf.mxu0
  %v742 = vadd.f32 0.0, %v741
  %v743 = vpop.f32.mrf.mxu0
  %744 = vmatprep.mubr.bf16.mxu0 %v518
  %745 = vmatmul.mubr.bf16.gmra.mxu0 %v332
  %v746 = vpop.f32.mrf.mxu0
  %v747 = vadd.f32 0.0, %v746
  %v748 = vpop.f32.mrf.mxu0
  %v749 = vpop.f32.mrf.mxu0
  %v750 = vadd.f32 0.0, %v749
  %v751 = vpop.f32.mrf.mxu0
  %752 = vmatprep.mubr.bf16.mxu0 %v521
  %753 = vmatmul.mubr.bf16.gmra.mxu0 %v334
  %v754 = vpop.f32.mrf.mxu0
  %v755 = vadd.f32 0.0, %v754
  %v756 = vpop.f32.mrf.mxu0
  %v757 = vpop.f32.mrf.mxu0
  %v758 = vadd.f32 0.0, %v757
  %v759 = vpop.f32.mrf.mxu0
  %760 = vmatprep.mubr.bf16.mxu0 %v524
  %761 = vmatmul.mubr.bf16.gmra.mxu0 %v336
  %v762 = vpop.f32.mrf.mxu0
  %v763 = vadd.f32 0.0, %v762
  %v764 = vpop.f32.mrf.mxu0
  %v765 = vpop.f32.mrf.mxu0
  %v766 = vadd.f32 0.0, %v765
  %v767 = vpop.f32.mrf.mxu0
  %768 = vmatprep.mubr.bf16.mxu0 %v527
  %769 = vmatmul.mubr.bf16.gmra.mxu0 %v338
  %v770 = vpop.f32.mrf.mxu0
  %v771 = vadd.f32 0.0, %v770
  %v772 = vpop.f32.mrf.mxu0
  %v773 = vpop.f32.mrf.mxu0
  %v774 = vadd.f32 0.0, %v773
  %v775 = vpop.f32.mrf.mxu0
  %776 = vmatprep.mubr.bf16.mxu0 %v530
  %777 = vmatmul.mubr.bf16.gmra.mxu0 %v340
  %v778 = vpop.f32.mrf.mxu0
  %v779 = vadd.f32 0.0, %v778
  %v780 = vpop.f32.mrf.mxu0
  %v781 = vpop.f32.mrf.mxu0
  %v782 = vadd.f32 0.0, %v781
  %v783 = vpop.f32.mrf.mxu0
  %784 = vmatprep.mubr.bf16.mxu0 %v533
  %785 = vmatmul.mubr.bf16.gmra.mxu0 %v342
  %v786 = vpop.f32.mrf.mxu0
  %v787 = vadd.f32 0.0, %v786
  %v788 = vpop.f32.mrf.mxu0
  %v789 = vpop.f32.mrf.mxu0
  %v790 = vadd.f32 0.0, %v789
  %v791 = vpop.f32.mrf.mxu0
  %792 = vmatprep.mubr.bf16.mxu0 %v536
  %793 = vmatmul.mubr.bf16.gmra.mxu0 %v344
  %v794 = vpop.f32.mrf.mxu0
  %v795 = vadd.f32 0.0, %v794
  %v796 = vpop.f32.mrf.mxu0
  %v797 = vpop.f32.mrf.mxu0
  %v798 = vadd.f32 0.0, %v797
  %v799 = vpop.f32.mrf.mxu0
  %800 = vmatprep.mubr.bf16.mxu0 %v539
  %801 = vmatmul.mubr.bf16.gmra.mxu0 %v346
  %v802 = vpop.f32.mrf.mxu0
  %v803 = vadd.f32 0.0, %v802
  %v804 = vpop.f32.mrf.mxu0
  %v805 = vpop.f32.mrf.mxu0
  %v806 = vadd.f32 0.0, %v805
  %v807 = vpop.f32.mrf.mxu0
  %808 = vmatprep.mubr.bf16.mxu0 %v542
  %809 = vmatmul.mubr.bf16.gmra.mxu0 %v348
  %v810 = vpop.f32.mrf.mxu0
  %v811 = vadd.f32 0.0, %v810
  %v812 = vpop.f32.mrf.mxu0
  %v813 = vpop.f32.mrf.mxu0
  %v814 = vadd.f32 0.0, %v813
  %v815 = vpop.f32.mrf.mxu0
  %816 = vmatprep.mubr.bf16.mxu0 %v545
  %817 = vmatmul.mubr.bf16.gmra.mxu0 %v350
  %v818 = vpop.f32.mrf.mxu0
  %v819 = vadd.f32 0.0, %v818
  %v820 = vpop.f32.mrf.mxu0
  %v821 = vpop.f32.mrf.mxu0
  %v822 = vadd.f32 0.0, %v821
  %v823 = vpop.f32.mrf.mxu0
  %824 = vmatprep.mubr.bf16.mxu0 %v548
  %825 = vmatmul.mubr.bf16.gmra.mxu0 %v352
  %v826 = vpop.f32.mrf.mxu0
  %v827 = vadd.f32 0.0, %v826
  %v828 = vpop.f32.mrf.mxu0
  %v829 = vpop.f32.mrf.mxu0
  %v830 = vadd.f32 0.0, %v829
  %v831 = vpop.f32.mrf.mxu0
  %832 = vmatprep.mubr.bf16.mxu0 %v551
  %833 = vmatmul.mubr.bf16.gmra.mxu0 %v354
  %v834 = vpop.f32.mrf.mxu0
  %v835 = vadd.f32 0.0, %v834
  %v836 = vpop.f32.mrf.mxu0
  %v837 = vpop.f32.mrf.mxu0
  %v838 = vadd.f32 0.0, %v837
  %v839 = vpop.f32.mrf.mxu0
  %840 = vmatprep.mubr.bf16.mxu0 %v554
  %841 = vmatmul.mubr.bf16.gmra.mxu0 %v356
  %v842 = vpop.f32.mrf.mxu0
  %v843 = vadd.f32 0.0, %v842
  %v844 = vpop.f32.mrf.mxu0
  %v845 = vpop.f32.mrf.mxu0
  %v846 = vadd.f32 0.0, %v845
  %v847 = vpop.f32.mrf.mxu0
  %848 = vdwg.mxu0
  %v849 = vmax.f32 %v595, %v659
  %v850 = vmax.f32 %v598, %v662
  %v851 = vmax.f32 %v603, %v667
  %v852 = vmax.f32 %v606, %v670
  %v853 = vmax.f32 %v611, %v675
  %v854 = vmax.f32 %v614, %v678
  %v855 = vmax.f32 %v619, %v683
  %v856 = vmax.f32 %v622, %v686
  %v857 = vmax.f32 %v627, %v691
  %v858 = vmax.f32 %v630, %v694
  %v859 = vmax.f32 %v635, %v699
  %v860 = vmax.f32 %v638, %v702
  %v861 = vmax.f32 %v643, %v707
  %v862 = vmax.f32 %v646, %v710
  %v863 = vmax.f32 %v651, %v715
  %v864 = vmax.f32 %v654, %v718
  %v865 = vmax.f32 %v723, %v787
  %v866 = vmax.f32 %v726, %v790
  %v867 = vmax.f32 %v731, %v795
  %v868 = vmax.f32 %v734, %v798
  %v869 = vmax.f32 %v739, %v803
  %v870 = vmax.f32 %v742, %v806
  %v871 = vmax.f32 %v747, %v811
  %v872 = vmax.f32 %v750, %v814
  %v873 = vmax.f32 %v755, %v819
  %v874 = vmax.f32 %v758, %v822
  %v875 = vmax.f32 %v763, %v827
  %v876 = vmax.f32 %v766, %v830
  %v877 = vmax.f32 %v771, %v835
  %v878 = vmax.f32 %v774, %v838
  %v879 = vmax.f32 %v779, %v843
  %v880 = vmax.f32 %v782, %v846
  %v881 = vmax.f32 %v849, %v865
  %v882 = vmax.f32 %v850, %v866
  %v883 = vmax.f32 %v851, %v867
  %v884 = vmax.f32 %v852, %v868
  %v885 = vmax.f32 %v853, %v869
  %v886 = vmax.f32 %v854, %v870
  %v887 = vmax.f32 %v855, %v871
  %v888 = vmax.f32 %v856, %v872
  %v889 = vmax.f32 %v857, %v873
  %v890 = vmax.f32 %v858, %v874
  %v891 = vmax.f32 %v859, %v875
  %v892 = vmax.f32 %v860, %v876
  %v893 = vmax.f32 %v861, %v877
  %v894 = vmax.f32 %v862, %v878
  %v895 = vmax.f32 %v863, %v879
  %v896 = vmax.f32 %v864, %v880
  %v897 = vld [vmem:[%s2] sm:$0x1]
  %v899 = vlaneseq
  %v900 = vshrl.u32 %v899, 7
  %v901 = vsub.s32 0, %v900
  %v902 = vrot.slane %v897, %v901
  %v904 = vadd.f32 %v881, %v902
  %v905 = vadd.f32 %v882, %v902
  %v906 = vadd.f32 %v883, %v902
  %v907 = vadd.f32 %v884, %v902
  %v908 = vadd.f32 %v885, %v902
  %v909 = vadd.f32 %v886, %v902
  %v910 = vadd.f32 %v887, %v902
  %v911 = vadd.f32 %v888, %v902
  %v912 = vadd.f32 %v889, %v902
  %v913 = vadd.f32 %v890, %v902
  %v914 = vadd.f32 %v891, %v902
  %v915 = vadd.f32 %v892, %v902
  %v916 = vadd.f32 %v893, %v902
  %v917 = vadd.f32 %v894, %v902
  %v918 = vadd.f32 %v895, %v902
  %v919 = vadd.f32 %v896, %v902
  %v920 = vmax.f32 %v904, 0.0
  %v921 = vmax.f32 %v905, 0.0
  %v922 = vmax.f32 %v906, 0.0
  %v923 = vmax.f32 %v907, 0.0
  %v924 = vmax.f32 %v908, 0.0
  %v925 = vmax.f32 %v909, 0.0
  %v926 = vmax.f32 %v910, 0.0
  %v927 = vmax.f32 %v911, 0.0
  %v928 = vmax.f32 %v912, 0.0
  %v929 = vmax.f32 %v913, 0.0
  %v930 = vmax.f32 %v914, 0.0
  %v931 = vmax.f32 %v915, 0.0
  %v932 = vmax.f32 %v916, 0.0
  %v933 = vmax.f32 %v917, 0.0
  %v934 = vmax.f32 %v918, 0.0
  %v935 = vmax.f32 %v919, 0.0
  %v936 = vpack.c.bf16 %v921, %v920
  %v937 = vpack.c.bf16 %v923, %v922
  %v938 = vpack.c.bf16 %v925, %v924
  %v939 = vpack.c.bf16 %v927, %v926
  %v940 = vpack.c.bf16 %v929, %v928
  %v941 = vpack.c.bf16 %v931, %v930
  %v942 = vpack.c.bf16 %v933, %v932
  %v943 = vpack.c.bf16 %v935, %v934
  %v952 = vunpack.c.l.b16 %v936
  %v953 = vunpack.c.h.b16 %v936
  %v954 = vunpack.c.l.b16 %v937
  %v955 = vunpack.c.h.b16 %v937
  %v956 = vunpack.c.l.b16 %v938
  %v957 = vunpack.c.h.b16 %v938
  %v958 = vunpack.c.l.b16 %v939
  %v959 = vunpack.c.h.b16 %v939
  %v960 = vunpack.c.l.b16 %v940
  %v961 = vunpack.c.h.b16 %v940
  %v962 = vunpack.c.l.b16 %v941
  %v963 = vunpack.c.h.b16 %v941
  %v964 = vunpack.c.l.b16 %v942
  %v965 = vunpack.c.h.b16 %v942
  %v966 = vunpack.c.l.b16 %v943
  %v967 = vunpack.c.h.b16 %v943
  %v968 = vpack.c.b16 %v952, %v952
  %v969 = vpack.c.b16 %v953, %v953
  %v970 = vpack.c.b16 %v954, %v954
  %v971 = vpack.c.b16 %v955, %v955
  %v972 = vpack.c.b16 %v956, %v956
  %v973 = vpack.c.b16 %v957, %v957
  %v974 = vpack.c.b16 %v958, %v958
  %v975 = vpack.c.b16 %v959, %v959
  %v976 = vpack.c.b16 %v960, %v960
  %v977 = vpack.c.b16 %v961, %v961
  %v978 = vpack.c.b16 %v962, %v962
  %v979 = vpack.c.b16 %v963, %v963
  %v980 = vpack.c.b16 %v964, %v964
  %v981 = vpack.c.b16 %v965, %v965
  %v982 = vpack.c.b16 %v966, %v966
  %v983 = vpack.c.b16 %v967, %v967
  %1000 = vst [vmem:[%s3] sm:$0xf] %v968
  %1001 = vst [vmem:[%s3 + $0x4] sm:$0xf] %v969
  %1002 = vst [vmem:[%s3 + $0x8] sm:$0xf] %v970
  %1003 = vst [vmem:[%s3 + $0xc] sm:$0xf] %v971
  %1004 = vst [vmem:[%s3 + $0x10] sm:$0xf] %v972
  %1005 = vst [vmem:[%s3 + $0x14] sm:$0xf] %v973
  %1006 = vst [vmem:[%s3 + $0x18] sm:$0xf] %v974
  %1007 = vst [vmem:[%s3 + $0x1c] sm:$0xf] %v975
  %1008 = vst [vmem:[%s3 + $0x20] sm:$0xf] %v976
  %1009 = vst [vmem:[%s3 + $0x24] sm:$0xf] %v977
  %1010 = vst [vmem:[%s3 + $0x28] sm:$0xf] %v978
  %1011 = vst [vmem:[%s3 + $0x2c] sm:$0xf] %v979
  %1012 = vst [vmem:[%s3 + $0x30] sm:$0xf] %v980
  %1013 = vst [vmem:[%s3 + $0x34] sm:$0xf] %v981
  %1014 = vst [vmem:[%s3 + $0x38] sm:$0xf] %v982
  %1015 = vst [vmem:[%s3 + $0x3c] sm:$0xf] %v983
  // Predicated region
  $region14: #{my_cnn_network_forward.5} parent=0 // pred_check
    _
  $region15: #{my_cnn_network_forward.5} parent=0 // pred_check_branch
    %1017 = sbr.rel (0) target = $region17
  $region16: #{my_cnn_network_forward.5} parent=0 // pred_region
    _
  $region17: #{my_cnn_network_forward.5} parent=0 // pred_fallthru
    _
  // Predicated region
  $region18: #{my_cnn_network_forward.5} parent=0 // pred_check
    _
  $region19: #{my_cnn_network_forward.5} parent=0 // pred_check_branch
    %1019 = sbr.rel (0) target = $region21
  $region20: #{my_cnn_network_forward.5} parent=0 // pred_region
    _
  $region21: #{my_cnn_network_forward.5} parent=0 // pred_fallthru
    _

// kernel: my_cnn_network_forward.7
$region0: #{my_cnn_network_forward.7}
  #allocation0 [shape = 'u32[]', space=smem, size = 0x4, offset = 0x4, fixed_abs, tag = 'smem constant byte address 0x4 - core index']
  #allocation1 [shape = 'u32[144,128]{1,0:T(1,128)}', space=vmem, size = 0x12000, scoped, tag = 'internal scratch']
  %s0 = inlined_call_operand.vmem [shape: bf16[64,120], index: 0, kind: input, shape index: {}]
  %s1 = inlined_call_operand.vmem [shape: bf16[120,64], index: 1, kind: input, shape index: {}]
  %s2 = inlined_call_operand.vmem [shape: f32[1,64], index: 2, kind: input, shape index: {}]
  %s3 = inlined_call_operand.vmem [shape: bf16[64,128], index: 3, kind: input, shape index: {}]
  %s4 = inlined_call_operand.vmem [shape: f32[1,128], index: 4, kind: input, shape index: {}]
  %s5 = inlined_call_operand.vmem [shape: f32[64,128], index: 5, kind: output, shape index: {}]
  %s6 = sld [smem:[#allocation0]]
  $region30: #{my_cnn_network_forward.7} parent=0
    _
  %s8 = ssub.s32 1, %s6
  %s9 = scalar_select 0, %s8, %s6
  // Predicated region
  $region2: #{my_cnn_network_forward.7} parent=0 // pred_check
    _
  $region3: #{my_cnn_network_forward.7} parent=0 // pred_check_branch
    %11 = sbr.rel (0) target = $region5
  $region4: #{my_cnn_network_forward.7} parent=0 // pred_region
    _
  $region5: #{my_cnn_network_forward.7} parent=0 // pred_fallthru
    _
  // Predicated region
  $region6: #{my_cnn_network_forward.7} parent=0 // pred_check
    _
  $region7: #{my_cnn_network_forward.7} parent=0 // pred_check_branch
    %13 = sbr.rel (0) target = $region9
  $region8: #{my_cnn_network_forward.7} parent=0 // pred_region
    _
  $region9: #{my_cnn_network_forward.7} parent=0 // pred_fallthru
    _
  // Predicated region
  $region10: #{my_cnn_network_forward.7} parent=0 // pred_check
    _
  $region11: #{my_cnn_network_forward.7} parent=0 // pred_check_branch
    %15 = sbr.rel (0) target = $region13
  $region12: #{my_cnn_network_forward.7} parent=0 // pred_region
    _
  $region13: #{my_cnn_network_forward.7} parent=0 // pred_fallthru
    _
  // Predicated region
  $region14: #{my_cnn_network_forward.7} parent=0 // pred_check
    _
  $region15: #{my_cnn_network_forward.7} parent=0 // pred_check_branch
    %17 = sbr.rel (0) target = $region17
  $region16: #{my_cnn_network_forward.7} parent=0 // pred_region
    _
  $region17: #{my_cnn_network_forward.7} parent=0 // pred_fallthru
    _
  // Predicated region
  $region18: #{my_cnn_network_forward.7} parent=0 // pred_check
    _
  $region19: #{my_cnn_network_forward.7} parent=0 // pred_check_branch
    %19 = sbr.rel (0) target = $region21
  $region20: #{my_cnn_network_forward.7} parent=0 // pred_region
    _
  $region21: #{my_cnn_network_forward.7} parent=0 // pred_fallthru
    _
  %v21 = vld [vmem:[%s0] sm:$0xf]
  %v22 = vld [vmem:[%s0 + $0x4] sm:$0xf]
  %v23 = vld [vmem:[%s0 + $0x8] sm:$0xf]
  %v24 = vld [vmem:[%s0 + $0xc] sm:$0xf]
  %v25 = vld [vmem:[%s0 + $0x10] sm:$0xf]
  %v26 = vld [vmem:[%s0 + $0x14] sm:$0xf]
  %v27 = vld [vmem:[%s0 + $0x18] sm:$0xf]
  %v28 = vld [vmem:[%s0 + $0x1c] sm:$0xf]
  %v29 = vld [vmem:[%s1] sm:$0xf]
  %v30 = vld [vmem:[%s1 + $0x4] sm:$0xf]
  %v31 = vld [vmem:[%s1 + $0x8] sm:$0xf]
  %v32 = vld [vmem:[%s1 + $0xc] sm:$0xf]
  %v33 = vld [vmem:[%s1 + $0x10] sm:$0xf]
  %v34 = vld [vmem:[%s1 + $0x14] sm:$0xf]
  %v35 = vld [vmem:[%s1 + $0x18] sm:$0xf]
  %v36 = vld [vmem:[%s1 + $0x1c] sm:$0xf]
  %v37 = vld [vmem:[%s1 + $0x20] sm:$0xf]
  %v38 = vld [vmem:[%s1 + $0x24] sm:$0xf]
  %v39 = vld [vmem:[%s1 + $0x28] sm:$0xf]
  %v40 = vld [vmem:[%s1 + $0x2c] sm:$0xf]
  %v41 = vld [vmem:[%s1 + $0x30] sm:$0xf]
  %v42 = vld [vmem:[%s1 + $0x34] sm:$0xf]
  %v43 = vld [vmem:[%s1 + $0x38] sm:$0xf]
  %v44 = vld [vmem:[%s2] sm:$0x1]
  %v46 = vlaneseq
  %v47 = vshrl.u32 %v46, 7
  %v48 = vsub.s32 0, %v47
  %v49 = vrot.slane %v44, %v48
  %v59 = vunpack.c.l.b16 %v21
  %v60 = vunpack.c.l.b16 %v22
  %v61 = vunpack.c.l.b16 %v23
  %v62 = vunpack.c.l.b16 %v24
  %v63 = vunpack.c.l.b16 %v25
  %v64 = vunpack.c.l.b16 %v26
  %v65 = vunpack.c.l.b16 %v27
  %v66 = vunpack.c.l.b16 %v28
  %v67 = vpack.c.b16 %v60, %v59
  %v68 = vpack.c.b16 %v62, %v61
  %v69 = vpack.c.b16 %v64, %v63
  %v70 = vpack.c.b16 %v66, %v65
  %v86 = vunpack.c.l.b16 %v29
  %v87 = vunpack.c.l.b16 %v30
  %v88 = vunpack.c.l.b16 %v31
  %v89 = vunpack.c.l.b16 %v32
  %v90 = vunpack.c.l.b16 %v33
  %v91 = vunpack.c.l.b16 %v34
  %v92 = vunpack.c.l.b16 %v35
  %v93 = vunpack.c.l.b16 %v36
  %v94 = vunpack.c.l.b16 %v37
  %v95 = vunpack.c.l.b16 %v38
  %v96 = vunpack.c.l.b16 %v39
  %v97 = vunpack.c.l.b16 %v40
  %v98 = vunpack.c.l.b16 %v41
  %v99 = vunpack.c.l.b16 %v42
  %v100 = vunpack.c.l.b16 %v43
  %v101 = vpack.c.b16 %v87, %v86
  %v102 = vpack.c.b16 %v89, %v88
  %v103 = vpack.c.b16 %v91, %v90
  %v104 = vpack.c.b16 %v93, %v92
  %v105 = vpack.c.b16 %v95, %v94
  %v106 = vpack.c.b16 %v97, %v96
  %v107 = vpack.c.b16 %v99, %v98
  %v108 = vpack.c.b16 %v100, %v100
  %vm116 = vcmask 982016
  %v118 = vsel %vm116, %v67, 0
  %v121 = vsel %vm116, %v68, 0
  %v124 = vsel %vm116, %v69, 0
  %v127 = vsel %vm116, %v70, 0
  %vm129 = vcmask 1043456
  %v131 = vsel %vm129, %v108, 0
  %133 = vmatprep.subr.bf16.mxu0 0
  %134 = vmatpush1.bf16.msra.mxu0 %v131
  %135 = vmatprep.subr.bf16.mxu0 0
  %136 = vmatpush1.bf16.msra.mxu0 %v107
  %137 = vmatprep.subr.bf16.mxu0 0
  %138 = vmatpush1.bf16.msra.mxu0 %v106
  %139 = vmatprep.subr.bf16.mxu0 0
  %140 = vmatpush1.bf16.msra.mxu0 %v105
  %141 = vmatprep.subr.bf16.mxu0 0
  %142 = vmatpush1.bf16.msra.mxu0 %v104
  %143 = vmatprep.subr.bf16.mxu0 0
  %144 = vmatpush1.bf16.msra.mxu0 %v103
  %145 = vmatprep.subr.bf16.mxu0 0
  %146 = vmatpush1.bf16.msra.mxu0 %v102
  %147 = vmatprep.subr.bf16.mxu0 0
  %148 = vmatpush1.bf16.msra.mxu0 %v101
  %149 = vmatprep.subr.bf16.mxu0 0
  %150 = vmatpush2.bf16.msra.mxu0 0
  %151 = vmatprep.subr.bf16.mxu0 0
  %152 = vmatpush2.bf16.msra.mxu0 0
  %153 = vmatprep.subr.bf16.mxu0 0
  %154 = vmatpush2.bf16.msra.mxu0 0
  %155 = vmatprep.subr.bf16.mxu0 0
  %156 = vmatpush2.bf16.msra.mxu0 0
  %157 = vmatprep.subr.bf16.mxu0 0
  %158 = vmatpush2.bf16.msra.mxu0 0
  %159 = vmatprep.subr.bf16.mxu0 0
  %160 = vmatpush2.bf16.msra.mxu0 0
  %161 = vmatprep.subr.bf16.mxu0 0
  %162 = vmatpush2.bf16.msra.mxu0 0
  %163 = vmatprep.subr.bf16.mxu0 0
  %164 = vmatpush2.bf16.msra.mxu0 0
  %165 = vmatprep.mubr.bf16.mxu0 0
  %166 = vmatmul.mubr.bf16.gmra.mxu0 %v118
  %v167 = vpop.f32.mrf.mxu0
  %v168 = vadd.f32 %v49, %v167
  %v169 = vpop.f32.mrf.mxu0
  %v170 = vpop.f32.mrf.mxu0
  %v171 = vadd.f32 %v49, %v170
  %v172 = vpop.f32.mrf.mxu0
  %173 = vmatprep.mubr.bf16.mxu0 0
  %174 = vmatmul.mubr.bf16.gmra.mxu0 %v121
  %v175 = vpop.f32.mrf.mxu0
  %v176 = vadd.f32 %v49, %v175
  %v177 = vpop.f32.mrf.mxu0
  %v178 = vpop.f32.mrf.mxu0
  %v179 = vadd.f32 %v49, %v178
  %v180 = vpop.f32.mrf.mxu0
  %181 = vmatprep.mubr.bf16.mxu0 0
  %182 = vmatmul.mubr.bf16.gmra.mxu0 %v124
  %v183 = vpop.f32.mrf.mxu0
  %v184 = vadd.f32 %v49, %v183
  %v185 = vpop.f32.mrf.mxu0
  %v186 = vpop.f32.mrf.mxu0
  %v187 = vadd.f32 %v49, %v186
  %v188 = vpop.f32.mrf.mxu0
  %189 = vmatprep.mubr.bf16.mxu0 0
  %190 = vmatmul.mubr.bf16.gmra.mxu0 %v127
  %v191 = vpop.f32.mrf.mxu0
  %v192 = vadd.f32 %v49, %v191
  %v193 = vpop.f32.mrf.mxu0
  %v194 = vpop.f32.mrf.mxu0
  %v195 = vadd.f32 %v49, %v194
  %v196 = vpop.f32.mrf.mxu0
  %197 = vdwg.mxu0
  %v198 = vmax.f32 %v168, 0.0
  %v199 = vmax.f32 %v171, 0.0
  %v200 = vmax.f32 %v176, 0.0
  %v201 = vmax.f32 %v179, 0.0
  %v202 = vmax.f32 %v184, 0.0
  %v203 = vmax.f32 %v187, 0.0
  %v204 = vmax.f32 %v192, 0.0
  %v205 = vmax.f32 %v195, 0.0
  %v206 = vpack.c.bf16 %v199, %v198
  %v207 = vpack.c.bf16 %v201, %v200
  %v208 = vpack.c.bf16 %v203, %v202
  %v209 = vpack.c.bf16 %v205, %v204
  %v210 = vld [vmem:[%s3] sm:$0xf]
  %v211 = vld [vmem:[%s3 + $0x4] sm:$0xf]
  %v212 = vld [vmem:[%s3 + $0x8] sm:$0xf]
  %v213 = vld [vmem:[%s3 + $0xc] sm:$0xf]
  %v214 = vld [vmem:[%s3 + $0x10] sm:$0xf]
  %v215 = vld [vmem:[%s3 + $0x14] sm:$0xf]
  %v216 = vld [vmem:[%s3 + $0x18] sm:$0xf]
  %v217 = vld [vmem:[%s3 + $0x1c] sm:$0xf]
  %v218 = vld [vmem:[%s4] sm:$0x1]
  %v220 = vlaneseq
  %v221 = vshrl.u32 %v220, 7
  %v222 = vsub.s32 0, %v221
  %v223 = vrot.slane %v218, %v222
  %v233 = vunpack.c.l.b16 %v210
  %v234 = vunpack.c.l.b16 %v211
  %v235 = vunpack.c.l.b16 %v212
  %v236 = vunpack.c.l.b16 %v213
  %v237 = vunpack.c.l.b16 %v214
  %v238 = vunpack.c.l.b16 %v215
  %v239 = vunpack.c.l.b16 %v216
  %v240 = vunpack.c.l.b16 %v217
  %v241 = vpack.c.b16 %v234, %v233
  %v242 = vpack.c.b16 %v236, %v235
  %v243 = vpack.c.b16 %v238, %v237
  %v244 = vpack.c.b16 %v240, %v239
  %vm249 = vcmask 523264
  %v251 = vsel %vm249, %v206, 0
  %v254 = vsel %vm249, %v207, 0
  %v257 = vsel %vm249, %v208, 0
  %v260 = vsel %vm249, %v209, 0
  %262 = vmatprep.subr.bf16.mxu0 0
  %263 = vmatpush1.bf16.msra.mxu0 0
  %264 = vmatprep.subr.bf16.mxu0 0
  %265 = vmatpush1.bf16.msra.mxu0 0
  %266 = vmatprep.subr.bf16.mxu0 0
  %267 = vmatpush1.bf16.msra.mxu0 0
  %268 = vmatprep.subr.bf16.mxu0 0
  %269 = vmatpush1.bf16.msra.mxu0 0
  %270 = vmatprep.subr.bf16.mxu0 0
  %271 = vmatpush1.bf16.msra.mxu0 %v244
  %272 = vmatprep.subr.bf16.mxu0 0
  %273 = vmatpush1.bf16.msra.mxu0 %v243
  %274 = vmatprep.subr.bf16.mxu0 0
  %275 = vmatpush1.bf16.msra.mxu0 %v242
  %276 = vmatprep.subr.bf16.mxu0 0
  %277 = vmatpush1.bf16.msra.mxu0 %v241
  %278 = vmatprep.subr.bf16.mxu0 0
  %279 = vmatpush2.bf16.msra.mxu0 0
  %280 = vmatprep.subr.bf16.mxu0 0
  %281 = vmatpush2.bf16.msra.mxu0 0
  %282 = vmatprep.subr.bf16.mxu0 0
  %283 = vmatpush2.bf16.msra.mxu0 0
  %284 = vmatprep.subr.bf16.mxu0 0
  %285 = vmatpush2.bf16.msra.mxu0 0
  %286 = vmatprep.subr.bf16.mxu0 0
  %287 = vmatpush2.bf16.msra.mxu0 0
  %288 = vmatprep.subr.bf16.mxu0 0
  %289 = vmatpush2.bf16.msra.mxu0 0
  %290 = vmatprep.subr.bf16.mxu0 0
  %291 = vmatpush2.bf16.msra.mxu0 0
  %292 = vmatprep.subr.bf16.mxu0 0
  %293 = vmatpush2.bf16.msra.mxu0 0
  %294 = vmatprep.mubr.bf16.mxu0 0
  %295 = vmatmul.mubr.bf16.gmra.mxu0 %v251
  %v296 = vpop.f32.mrf.mxu0
  %v297 = vadd.f32 %v223, %v296
  %v298 = vpop.f32.mrf.mxu0
  %v299 = vpop.f32.mrf.mxu0
  %v300 = vadd.f32 %v223, %v299
  %v301 = vpop.f32.mrf.mxu0
  %302 = vmatprep.mubr.bf16.mxu0 0
  %303 = vmatmul.mubr.bf16.gmra.mxu0 %v254
  %v304 = vpop.f32.mrf.mxu0
  %v305 = vadd.f32 %v223, %v304
  %v306 = vpop.f32.mrf.mxu0
  %v307 = vpop.f32.mrf.mxu0
  %v308 = vadd.f32 %v223, %v307
  %v309 = vpop.f32.mrf.mxu0
  %310 = vmatprep.mubr.bf16.mxu0 0
  %311 = vmatmul.mubr.bf16.gmra.mxu0 %v257
  %v312 = vpop.f32.mrf.mxu0
  %v313 = vadd.f32 %v223, %v312
  %v314 = vpop.f32.mrf.mxu0
  %v315 = vpop.f32.mrf.mxu0
  %v316 = vadd.f32 %v223, %v315
  %v317 = vpop.f32.mrf.mxu0
  %318 = vmatprep.mubr.bf16.mxu0 0
  %319 = vmatmul.mubr.bf16.gmra.mxu0 %v260
  %v320 = vpop.f32.mrf.mxu0
  %v321 = vadd.f32 %v223, %v320
  %v322 = vpop.f32.mrf.mxu0
  %v323 = vpop.f32.mrf.mxu0
  %v324 = vadd.f32 %v223, %v323
  %v325 = vpop.f32.mrf.mxu0
  %326 = vdwg.mxu0
  %327 = vst [vmem:[%s5] sm:$0xff] %v297
  %328 = vst [vmem:[%s5 + $0x8] sm:$0xff] %v300
  %329 = vst [vmem:[%s5 + $0x10] sm:$0xff] %v305
  %330 = vst [vmem:[%s5 + $0x18] sm:$0xff] %v308
  %331 = vst [vmem:[%s5 + $0x20] sm:$0xff] %v313
  %332 = vst [vmem:[%s5 + $0x28] sm:$0xff] %v316
  %333 = vst [vmem:[%s5 + $0x30] sm:$0xff] %v321
  %334 = vst [vmem:[%s5 + $0x38] sm:$0xff] %v324
  // Predicated region
  $region22: #{my_cnn_network_forward.7} parent=0 // pred_check
    _
  $region23: #{my_cnn_network_forward.7} parent=0 // pred_check_branch
    %336 = sbr.rel (0) target = $region25
  $region24: #{my_cnn_network_forward.7} parent=0 // pred_region
    _
  $region25: #{my_cnn_network_forward.7} parent=0 // pred_fallthru
    _
  // Predicated region
  $region26: #{my_cnn_network_forward.7} parent=0 // pred_check
    _
  $region27: #{my_cnn_network_forward.7} parent=0 // pred_check_branch
    %338 = sbr.rel (0) target = $region29
  $region28: #{my_cnn_network_forward.7} parent=0 // pred_region
    _
  $region29: #{my_cnn_network_forward.7} parent=0 // pred_fallthru
    _

// kernel: my_cnn_network_forward.6
$region0: #{my_cnn_network_forward.6}
  #allocation0 [shape = 'u32[]', space=smem, size = 0x4, offset = 0x4, fixed_abs, tag = 'smem constant byte address 0x4 - core index']
  #allocation1 [shape = 'u32[144,128]{1,0:T(1,128)}', space=vmem, size = 0x12000, scoped, tag = 'internal scratch']
  %s0 = inlined_call_operand.vmem [shape: bf16[4,64,360], index: 0, kind: input, shape index: {}]
  %s1 = inlined_call_operand.vmem [shape: bf16[360,128], index: 1, kind: input, shape index: {}]
  %s2 = inlined_call_operand.vmem [shape: f32[1,128], index: 2, kind: input, shape index: {}]
  %s3 = inlined_call_operand.vmem [shape: bf16[64,128], index: 3, kind: output, shape index: {}]
  %s4 = sld [smem:[#allocation0]]
  $region22: #{my_cnn_network_forward.6} parent=0
    _
  %s6 = ssub.s32 1, %s4
  %s7 = scalar_select 0, %s6, %s4
  // Predicated region
  $region2: #{my_cnn_network_forward.6} parent=0 // pred_check
    _
  $region3: #{my_cnn_network_forward.6} parent=0 // pred_check_branch
    %9 = sbr.rel (0) target = $region5
  $region4: #{my_cnn_network_forward.6} parent=0 // pred_region
    _
  $region5: #{my_cnn_network_forward.6} parent=0 // pred_fallthru
    _
  // Predicated region
  $region6: #{my_cnn_network_forward.6} parent=0 // pred_check
    _
  $region7: #{my_cnn_network_forward.6} parent=0 // pred_check_branch
    %11 = sbr.rel (0) target = $region9
  $region8: #{my_cnn_network_forward.6} parent=0 // pred_region
    _
  $region9: #{my_cnn_network_forward.6} parent=0 // pred_fallthru
    _
  // Predicated region
  $region10: #{my_cnn_network_forward.6} parent=0 // pred_check
    _
  $region11: #{my_cnn_network_forward.6} parent=0 // pred_check_branch
    %13 = sbr.rel (0) target = $region13
  $region12: #{my_cnn_network_forward.6} parent=0 // pred_region
    _
  $region13: #{my_cnn_network_forward.6} parent=0 // pred_fallthru
    _
  %v15 = vld [vmem:[%s0] sm:$0xff]
  %v16 = vld [vmem:[%s0 + $0x8] sm:$0xf]
  %v17 = vld [vmem:[%s0 + $0xc] sm:$0xff]
  %v18 = vld [vmem:[%s0 + $0x14] sm:$0xf]
  %v19 = vld [vmem:[%s0 + $0x18] sm:$0xff]
  %v20 = vld [vmem:[%s0 + $0x20] sm:$0xf]
  %v21 = vld [vmem:[%s0 + $0x24] sm:$0xff]
  %v22 = vld [vmem:[%s0 + $0x2c] sm:$0xf]
  %v23 = vld [vmem:[%s0 + $0x30] sm:$0xff]
  %v24 = vld [vmem:[%s0 + $0x38] sm:$0xf]
  %v25 = vld [vmem:[%s0 + $0x3c] sm:$0xff]
  %v26 = vld [vmem:[%s0 + $0x44] sm:$0xf]
  %v27 = vld [vmem:[%s0 + $0x48] sm:$0xff]
  %v28 = vld [vmem:[%s0 + $0x50] sm:$0xf]
  %v29 = vld [vmem:[%s0 + $0x54] sm:$0xff]
  %v30 = vld [vmem:[%s0 + $0x5c] sm:$0xf]
  %v31 = vld [vmem:[%s0 + $0x60] sm:$0xff]
  %v32 = vld [vmem:[%s0 + $0x68] sm:$0xf]
  %v33 = vld [vmem:[%s0 + $0x6c] sm:$0xff]
  %v34 = vld [vmem:[%s0 + $0x74] sm:$0xf]
  %v35 = vld [vmem:[%s0 + $0x78] sm:$0xff]
  %v36 = vld [vmem:[%s0 + $0x80] sm:$0xf]
  %v37 = vld [vmem:[%s0 + $0x84] sm:$0xff]
  %v38 = vld [vmem:[%s0 + $0x8c] sm:$0xf]
  %v39 = vld [vmem:[%s0 + $0x90] sm:$0xff]
  %v40 = vld [vmem:[%s0 + $0x98] sm:$0xf]
  %v41 = vld [vmem:[%s0 + $0x9c] sm:$0xff]
  %v42 = vld [vmem:[%s0 + $0xa4] sm:$0xf]
  %v43 = vld [vmem:[%s0 + $0xa8] sm:$0xff]
  %v44 = vld [vmem:[%s0 + $0xb0] sm:$0xf]
  %v45 = vld [vmem:[%s0 + $0xb4] sm:$0xff]
  %v46 = vld [vmem:[%s0 + $0xbc] sm:$0xf]
  %v47 = vld [vmem:[%s0 + $0xc0] sm:$0xff]
  %v48 = vld [vmem:[%s0 + $0xc8] sm:$0xf]
  %v49 = vld [vmem:[%s0 + $0xcc] sm:$0xff]
  %v50 = vld [vmem:[%s0 + $0xd4] sm:$0xf]
  %v51 = vld [vmem:[%s0 + $0xd8] sm:$0xff]
  %v52 = vld [vmem:[%s0 + $0xe0] sm:$0xf]
  %v53 = vld [vmem:[%s0 + $0xe4] sm:$0xff]
  %v54 = vld [vmem:[%s0 + $0xec] sm:$0xf]
  %v55 = vld [vmem:[%s0 + $0xf0] sm:$0xff]
  %v56 = vld [vmem:[%s0 + $0xf8] sm:$0xf]
  %v57 = vld [vmem:[%s0 + $0xfc] sm:$0xff]
  %v58 = vld [vmem:[%s0 + $0x104] sm:$0xf]
  %v59 = vld [vmem:[%s0 + $0x108] sm:$0xff]
  %v60 = vld [vmem:[%s0 + $0x110] sm:$0xf]
  %v61 = vld [vmem:[%s0 + $0x114] sm:$0xff]
  %v62 = vld [vmem:[%s0 + $0x11c] sm:$0xf]
  %v63 = vld [vmem:[%s0 + $0x120] sm:$0xff]
  %v64 = vld [vmem:[%s0 + $0x128] sm:$0xf]
  %v65 = vld [vmem:[%s0 + $0x12c] sm:$0xff]
  %v66 = vld [vmem:[%s0 + $0x134] sm:$0xf]
  %v67 = vld [vmem:[%s0 + $0x138] sm:$0xff]
  %v68 = vld [vmem:[%s0 + $0x140] sm:$0xf]
  %v69 = vld [vmem:[%s0 + $0x144] sm:$0xff]
  %v70 = vld [vmem:[%s0 + $0x14c] sm:$0xf]
  %v71 = vld [vmem:[%s0 + $0x150] sm:$0xff]
  %v72 = vld [vmem:[%s0 + $0x158] sm:$0xf]
  %v73 = vld [vmem:[%s0 + $0x15c] sm:$0xff]
  %v74 = vld [vmem:[%s0 + $0x164] sm:$0xf]
  %v75 = vld [vmem:[%s0 + $0x168] sm:$0xff]
  %v76 = vld [vmem:[%s0 + $0x170] sm:$0xf]
  %v77 = vld [vmem:[%s0 + $0x174] sm:$0xff]
  %v78 = vld [vmem:[%s0 + $0x17c] sm:$0xf]
  %v79 = vld [vmem:[%s1] sm:$0xf]
  %v80 = vld [vmem:[%s1 + $0x4] sm:$0xf]
  %v81 = vld [vmem:[%s1 + $0x8] sm:$0xf]
  %v82 = vld [vmem:[%s1 + $0xc] sm:$0xf]
  %v83 = vld [vmem:[%s1 + $0x10] sm:$0xf]
  %v84 = vld [vmem:[%s1 + $0x14] sm:$0xf]
  %v85 = vld [vmem:[%s1 + $0x18] sm:$0xf]
  %v86 = vld [vmem:[%s1 + $0x1c] sm:$0xf]
  %v87 = vld [vmem:[%s1 + $0x20] sm:$0xf]
  %v88 = vld [vmem:[%s1 + $0x24] sm:$0xf]
  %v89 = vld [vmem:[%s1 + $0x28] sm:$0xf]
  %v90 = vld [vmem:[%s1 + $0x2c] sm:$0xf]
  %v91 = vld [vmem:[%s1 + $0x30] sm:$0xf]
  %v92 = vld [vmem:[%s1 + $0x34] sm:$0xf]
  %v93 = vld [vmem:[%s1 + $0x38] sm:$0xf]
  %v94 = vld [vmem:[%s1 + $0x3c] sm:$0xf]
  %v95 = vld [vmem:[%s1 + $0x40] sm:$0xf]
  %v96 = vld [vmem:[%s1 + $0x44] sm:$0xf]
  %v97 = vld [vmem:[%s1 + $0x48] sm:$0xf]
  %v98 = vld [vmem:[%s1 + $0x4c] sm:$0xf]
  %v99 = vld [vmem:[%s1 + $0x50] sm:$0xf]
  %v100 = vld [vmem:[%s1 + $0x54] sm:$0xf]
  %v101 = vld [vmem:[%s1 + $0x58] sm:$0xf]
  %v102 = vld [vmem:[%s1 + $0x5c] sm:$0xf]
  %v103 = vld [vmem:[%s1 + $0x60] sm:$0xf]
  %v104 = vld [vmem:[%s1 + $0x64] sm:$0xf]
  %v105 = vld [vmem:[%s1 + $0x68] sm:$0xf]
  %v106 = vld [vmem:[%s1 + $0x6c] sm:$0xf]
  %v107 = vld [vmem:[%s1 + $0x70] sm:$0xf]
  %v108 = vld [vmem:[%s1 + $0x74] sm:$0xf]
  %v109 = vld [vmem:[%s1 + $0x78] sm:$0xf]
  %v110 = vld [vmem:[%s1 + $0x7c] sm:$0xf]
  %v111 = vld [vmem:[%s1 + $0x80] sm:$0xf]
  %v112 = vld [vmem:[%s1 + $0x84] sm:$0xf]
  %v113 = vld [vmem:[%s1 + $0x88] sm:$0xf]
  %v114 = vld [vmem:[%s1 + $0x8c] sm:$0xf]
  %v115 = vld [vmem:[%s1 + $0x90] sm:$0xf]
  %v116 = vld [vmem:[%s1 + $0x94] sm:$0xf]
  %v117 = vld [vmem:[%s1 + $0x98] sm:$0xf]
  %v118 = vld [vmem:[%s1 + $0x9c] sm:$0xf]
  %v119 = vld [vmem:[%s1 + $0xa0] sm:$0xf]
  %v120 = vld [vmem:[%s1 + $0xa4] sm:$0xf]
  %v121 = vld [vmem:[%s1 + $0xa8] sm:$0xf]
  %v122 = vld [vmem:[%s1 + $0xac] sm:$0xf]
  %v123 = vld [vmem:[%s1 + $0xb0] sm:$0xf]
  %v188 = vunpack.c.l.b16 %v15
  %v189 = vunpack.c.h.b16 %v15
  %v190 = vunpack.c.l.b16 %v16
  %v191 = vunpack.c.l.b16 %v17
  %v192 = vunpack.c.h.b16 %v17
  %v193 = vunpack.c.l.b16 %v18
  %v194 = vunpack.c.l.b16 %v19
  %v195 = vunpack.c.h.b16 %v19
  %v196 = vunpack.c.l.b16 %v20
  %v197 = vunpack.c.l.b16 %v21
  %v198 = vunpack.c.h.b16 %v21
  %v199 = vunpack.c.l.b16 %v22
  %v200 = vunpack.c.l.b16 %v23
  %v201 = vunpack.c.h.b16 %v23
  %v202 = vunpack.c.l.b16 %v24
  %v203 = vunpack.c.l.b16 %v25
  %v204 = vunpack.c.h.b16 %v25
  %v205 = vunpack.c.l.b16 %v26
  %v206 = vunpack.c.l.b16 %v27
  %v207 = vunpack.c.h.b16 %v27
  %v208 = vunpack.c.l.b16 %v28
  %v209 = vunpack.c.l.b16 %v29
  %v210 = vunpack.c.h.b16 %v29
  %v211 = vunpack.c.l.b16 %v30
  %v212 = vunpack.c.l.b16 %v31
  %v213 = vunpack.c.h.b16 %v31
  %v214 = vunpack.c.l.b16 %v32
  %v215 = vunpack.c.l.b16 %v33
  %v216 = vunpack.c.h.b16 %v33
  %v217 = vunpack.c.l.b16 %v34
  %v218 = vunpack.c.l.b16 %v35
  %v219 = vunpack.c.h.b16 %v35
  %v220 = vunpack.c.l.b16 %v36
  %v221 = vunpack.c.l.b16 %v37
  %v222 = vunpack.c.h.b16 %v37
  %v223 = vunpack.c.l.b16 %v38
  %v224 = vunpack.c.l.b16 %v39
  %v225 = vunpack.c.h.b16 %v39
  %v226 = vunpack.c.l.b16 %v40
  %v227 = vunpack.c.l.b16 %v41
  %v228 = vunpack.c.h.b16 %v41
  %v229 = vunpack.c.l.b16 %v42
  %v230 = vunpack.c.l.b16 %v43
  %v231 = vunpack.c.h.b16 %v43
  %v232 = vunpack.c.l.b16 %v44
  %v233 = vunpack.c.l.b16 %v45
  %v234 = vunpack.c.h.b16 %v45
  %v235 = vunpack.c.l.b16 %v46
  %v236 = vunpack.c.l.b16 %v47
  %v237 = vunpack.c.h.b16 %v47
  %v238 = vunpack.c.l.b16 %v48
  %v239 = vunpack.c.l.b16 %v49
  %v240 = vunpack.c.h.b16 %v49
  %v241 = vunpack.c.l.b16 %v50
  %v242 = vunpack.c.l.b16 %v51
  %v243 = vunpack.c.h.b16 %v51
  %v244 = vunpack.c.l.b16 %v52
  %v245 = vunpack.c.l.b16 %v53
  %v246 = vunpack.c.h.b16 %v53
  %v247 = vunpack.c.l.b16 %v54
  %v248 = vunpack.c.l.b16 %v55
  %v249 = vunpack.c.h.b16 %v55
  %v250 = vunpack.c.l.b16 %v56
  %v251 = vunpack.c.l.b16 %v57
  %v252 = vunpack.c.h.b16 %v57
  %v253 = vunpack.c.l.b16 %v58
  %v254 = vunpack.c.l.b16 %v59
  %v255 = vunpack.c.h.b16 %v59
  %v256 = vunpack.c.l.b16 %v60
  %v257 = vunpack.c.l.b16 %v61
  %v258 = vunpack.c.h.b16 %v61
  %v259 = vunpack.c.l.b16 %v62
  %v260 = vunpack.c.l.b16 %v63
  %v261 = vunpack.c.h.b16 %v63
  %v262 = vunpack.c.l.b16 %v64
  %v263 = vunpack.c.l.b16 %v65
  %v264 = vunpack.c.h.b16 %v65
  %v265 = vunpack.c.l.b16 %v66
  %v266 = vunpack.c.l.b16 %v67
  %v267 = vunpack.c.h.b16 %v67
  %v268 = vunpack.c.l.b16 %v68
  %v269 = vunpack.c.l.b16 %v69
  %v270 = vunpack.c.h.b16 %v69
  %v271 = vunpack.c.l.b16 %v70
  %v272 = vunpack.c.l.b16 %v71
  %v273 = vunpack.c.h.b16 %v71
  %v274 = vunpack.c.l.b16 %v72
  %v275 = vunpack.c.l.b16 %v73
  %v276 = vunpack.c.h.b16 %v73
  %v277 = vunpack.c.l.b16 %v74
  %v278 = vunpack.c.l.b16 %v75
  %v279 = vunpack.c.h.b16 %v75
  %v280 = vunpack.c.l.b16 %v76
  %v281 = vunpack.c.l.b16 %v77
  %v282 = vunpack.c.h.b16 %v77
  %v283 = vunpack.c.l.b16 %v78
  %v284 = vpack.c.b16 %v191, %v188
  %v285 = vpack.c.b16 %v192, %v189
  %v286 = vpack.c.b16 %v193, %v190
  %v287 = vpack.c.b16 %v197, %v194
  %v288 = vpack.c.b16 %v198, %v195
  %v289 = vpack.c.b16 %v199, %v196
  %v290 = vpack.c.b16 %v203, %v200
  %v291 = vpack.c.b16 %v204, %v201
  %v292 = vpack.c.b16 %v205, %v202
  %v293 = vpack.c.b16 %v209, %v206
  %v294 = vpack.c.b16 %v210, %v207
  %v295 = vpack.c.b16 %v211, %v208
  %v296 = vpack.c.b16 %v215, %v212
  %v297 = vpack.c.b16 %v216, %v213
  %v298 = vpack.c.b16 %v217, %v214
  %v299 = vpack.c.b16 %v221, %v218
  %v300 = vpack.c.b16 %v222, %v219
  %v301 = vpack.c.b16 %v223, %v220
  %v302 = vpack.c.b16 %v227, %v224
  %v303 = vpack.c.b16 %v228, %v225
  %v304 = vpack.c.b16 %v229, %v226
  %v305 = vpack.c.b16 %v233, %v230
  %v306 = vpack.c.b16 %v234, %v231
  %v307 = vpack.c.b16 %v235, %v232
  %v308 = vpack.c.b16 %v239, %v236
  %v309 = vpack.c.b16 %v240, %v237
  %v310 = vpack.c.b16 %v241, %v238
  %v311 = vpack.c.b16 %v245, %v242
  %v312 = vpack.c.b16 %v246, %v243
  %v313 = vpack.c.b16 %v247, %v244
  %v314 = vpack.c.b16 %v251, %v248
  %v315 = vpack.c.b16 %v252, %v249
  %v316 = vpack.c.b16 %v253, %v250
  %v317 = vpack.c.b16 %v257, %v254
  %v318 = vpack.c.b16 %v258, %v255
  %v319 = vpack.c.b16 %v259, %v256
  %v320 = vpack.c.b16 %v263, %v260
  %v321 = vpack.c.b16 %v264, %v261
  %v322 = vpack.c.b16 %v265, %v262
  %v323 = vpack.c.b16 %v269, %v266
  %v324 = vpack.c.b16 %v270, %v267
  %v325 = vpack.c.b16 %v271, %v268
  %v326 = vpack.c.b16 %v275, %v272
  %v327 = vpack.c.b16 %v276, %v273
  %v328 = vpack.c.b16 %v277, %v274
  %v329 = vpack.c.b16 %v281, %v278
  %v330 = vpack.c.b16 %v282, %v279
  %v331 = vpack.c.b16 %v283, %v280
  %v409 = vunpack.c.l.b16 %v79
  %v410 = vunpack.c.l.b16 %v80
  %v411 = vunpack.c.l.b16 %v81
  %v412 = vunpack.c.l.b16 %v82
  %v413 = vunpack.c.l.b16 %v83
  %v414 = vunpack.c.l.b16 %v84
  %v415 = vunpack.c.l.b16 %v85
  %v416 = vunpack.c.l.b16 %v86
  %v417 = vunpack.c.l.b16 %v87
  %v418 = vunpack.c.l.b16 %v88
  %v419 = vunpack.c.l.b16 %v89
  %v420 = vunpack.c.l.b16 %v90
  %v421 = vunpack.c.l.b16 %v91
  %v422 = vunpack.c.l.b16 %v92
  %v423 = vunpack.c.l.b16 %v93
  %v424 = vunpack.c.l.b16 %v94
  %v425 = vunpack.c.l.b16 %v95
  %v426 = vunpack.c.l.b16 %v96
  %v427 = vunpack.c.l.b16 %v97
  %v428 = vunpack.c.l.b16 %v98
  %v429 = vunpack.c.l.b16 %v99
  %v430 = vunpack.c.l.b16 %v100
  %v431 = vunpack.c.l.b16 %v101
  %v432 = vunpack.c.l.b16 %v102
  %v433 = vunpack.c.l.b16 %v103
  %v434 = vunpack.c.l.b16 %v104
  %v435 = vunpack.c.l.b16 %v105
  %v436 = vunpack.c.l.b16 %v106
  %v437 = vunpack.c.l.b16 %v107
  %v438 = vunpack.c.l.b16 %v108
  %v439 = vunpack.c.l.b16 %v109
  %v440 = vunpack.c.l.b16 %v110
  %v441 = vunpack.c.l.b16 %v111
  %v442 = vunpack.c.l.b16 %v112
  %v443 = vunpack.c.l.b16 %v113
  %v444 = vunpack.c.l.b16 %v114
  %v445 = vunpack.c.l.b16 %v115
  %v446 = vunpack.c.l.b16 %v116
  %v447 = vunpack.c.l.b16 %v117
  %v448 = vunpack.c.l.b16 %v118
  %v449 = vunpack.c.l.b16 %v119
  %v450 = vunpack.c.l.b16 %v120
  %v451 = vunpack.c.l.b16 %v121
  %v452 = vunpack.c.l.b16 %v122
  %v453 = vunpack.c.l.b16 %v123
  %v454 = vpack.c.b16 %v410, %v409
  %v455 = vpack.c.b16 %v412, %v411
  %v456 = vpack.c.b16 %v414, %v413
  %v457 = vpack.c.b16 %v416, %v415
  %v458 = vpack.c.b16 %v418, %v417
  %v459 = vpack.c.b16 %v420, %v419
  %v460 = vpack.c.b16 %v422, %v421
  %v461 = vpack.c.b16 %v424, %v423
  %v462 = vpack.c.b16 %v426, %v425
  %v463 = vpack.c.b16 %v428, %v427
  %v464 = vpack.c.b16 %v430, %v429
  %v465 = vpack.c.b16 %v432, %v431
  %v466 = vpack.c.b16 %v434, %v433
  %v467 = vpack.c.b16 %v436, %v435
  %v468 = vpack.c.b16 %v438, %v437
  %v469 = vpack.c.b16 %v440, %v439
  %v470 = vpack.c.b16 %v442, %v441
  %v471 = vpack.c.b16 %v444, %v443
  %v472 = vpack.c.b16 %v446, %v445
  %v473 = vpack.c.b16 %v448, %v447
  %v474 = vpack.c.b16 %v450, %v449
  %v475 = vpack.c.b16 %v452, %v451
  %v476 = vpack.c.b16 %v453, %v453
  %vm499 = vcmask 850944
  %v501 = vsel %vm499, %v286, 0
  %v504 = vsel %vm499, %v289, 0
  %v507 = vsel %vm499, %v292, 0
  %v510 = vsel %vm499, %v295, 0
  %v513 = vsel %vm499, %v298, 0
  %v516 = vsel %vm499, %v301, 0
  %v519 = vsel %vm499, %v304, 0
  %v522 = vsel %vm499, %v307, 0
  %v525 = vsel %vm499, %v310, 0
  %v528 = vsel %vm499, %v313, 0
  %v531 = vsel %vm499, %v316, 0
  %v534 = vsel %vm499, %v319, 0
  %v537 = vsel %vm499, %v322, 0
  %v540 = vsel %vm499, %v325, 0
  %v543 = vsel %vm499, %v328, 0
  %v546 = vsel %vm499, %v331, 0
  %vm548 = vcmask 1043456
  %v550 = vsel %vm548, %v476, 0
  %552 = vmatprep.subr.bf16.mxu0 0
  %553 = vmatpush1.bf16.msra.mxu0 %v461
  %554 = vmatprep.subr.bf16.mxu0 0
  %555 = vmatpush1.bf16.msra.mxu0 %v460
  %556 = vmatprep.subr.bf16.mxu0 0
  %557 = vmatpush1.bf16.msra.mxu0 %v459
  %558 = vmatprep.subr.bf16.mxu0 0
  %559 = vmatpush1.bf16.msra.mxu0 %v458
  %560 = vmatprep.subr.bf16.mxu0 0
  %561 = vmatpush1.bf16.msra.mxu0 %v457
  %562 = vmatprep.subr.bf16.mxu0 0
  %563 = vmatpush1.bf16.msra.mxu0 %v456
  %564 = vmatprep.subr.bf16.mxu0 0
  %565 = vmatpush1.bf16.msra.mxu0 %v455
  %566 = vmatprep.subr.bf16.mxu0 0
  %567 = vmatpush1.bf16.msra.mxu0 %v454
  %568 = vmatprep.subr.bf16.mxu0 0
  %569 = vmatpush2.bf16.msra.mxu0 %v469
  %570 = vmatprep.subr.bf16.mxu0 0
  %571 = vmatpush2.bf16.msra.mxu0 %v468
  %572 = vmatprep.subr.bf16.mxu0 0
  %573 = vmatpush2.bf16.msra.mxu0 %v467
  %574 = vmatprep.subr.bf16.mxu0 0
  %575 = vmatpush2.bf16.msra.mxu0 %v466
  %576 = vmatprep.subr.bf16.mxu0 0
  %577 = vmatpush2.bf16.msra.mxu0 %v465
  %578 = vmatprep.subr.bf16.mxu0 0
  %579 = vmatpush2.bf16.msra.mxu0 %v464
  %580 = vmatprep.subr.bf16.mxu0 0
  %581 = vmatpush2.bf16.msra.mxu0 %v463
  %582 = vmatprep.subr.bf16.mxu0 0
  %583 = vmatpush2.bf16.msra.mxu0 %v462
  %584 = vmatprep.mubr.bf16.mxu0 %v285
  %585 = vmatmul.mubr.bf16.gmra.mxu0 %v284
  %v586 = vpop.f32.mrf.mxu0
  %v587 = vadd.f32 0.0, %v586
  %v588 = vpop.f32.mrf.mxu0
  %v589 = vpop.f32.mrf.mxu0
  %v590 = vadd.f32 0.0, %v589
  %v591 = vpop.f32.mrf.mxu0
  %592 = vmatprep.mubr.bf16.mxu0 %v288
  %593 = vmatmul.mubr.bf16.gmra.mxu0 %v287
  %v594 = vpop.f32.mrf.mxu0
  %v595 = vadd.f32 0.0, %v594
  %v596 = vpop.f32.mrf.mxu0
  %v597 = vpop.f32.mrf.mxu0
  %v598 = vadd.f32 0.0, %v597
  %v599 = vpop.f32.mrf.mxu0
  %600 = vmatprep.mubr.bf16.mxu0 %v291
  %601 = vmatmul.mubr.bf16.gmra.mxu0 %v290
  %v602 = vpop.f32.mrf.mxu0
  %v603 = vadd.f32 0.0, %v602
  %v604 = vpop.f32.mrf.mxu0
  %v605 = vpop.f32.mrf.mxu0
  %v606 = vadd.f32 0.0, %v605
  %v607 = vpop.f32.mrf.mxu0
  %608 = vmatprep.mubr.bf16.mxu0 %v294
  %609 = vmatmul.mubr.bf16.gmra.mxu0 %v293
  %v610 = vpop.f32.mrf.mxu0
  %v611 = vadd.f32 0.0, %v610
  %v612 = vpop.f32.mrf.mxu0
  %v613 = vpop.f32.mrf.mxu0
  %v614 = vadd.f32 0.0, %v613
  %v615 = vpop.f32.mrf.mxu0
  %616 = vmatprep.mubr.bf16.mxu0 %v297
  %617 = vmatmul.mubr.bf16.gmra.mxu0 %v296
  %v618 = vpop.f32.mrf.mxu0
  %v619 = vadd.f32 0.0, %v618
  %v620 = vpop.f32.mrf.mxu0
  %v621 = vpop.f32.mrf.mxu0
  %v622 = vadd.f32 0.0, %v621
  %v623 = vpop.f32.mrf.mxu0
  %624 = vmatprep.mubr.bf16.mxu0 %v300
  %625 = vmatmul.mubr.bf16.gmra.mxu0 %v299
  %v626 = vpop.f32.mrf.mxu0
  %v627 = vadd.f32 0.0, %v626
  %v628 = vpop.f32.mrf.mxu0
  %v629 = vpop.f32.mrf.mxu0
  %v630 = vadd.f32 0.0, %v629
  %v631 = vpop.f32.mrf.mxu0
  %632 = vmatprep.mubr.bf16.mxu0 %v303
  %633 = vmatmul.mubr.bf16.gmra.mxu0 %v302
  %v634 = vpop.f32.mrf.mxu0
  %v635 = vadd.f32 0.0, %v634
  %v636 = vpop.f32.mrf.mxu0
  %v637 = vpop.f32.mrf.mxu0
  %v638 = vadd.f32 0.0, %v637
  %v639 = vpop.f32.mrf.mxu0
  %640 = vmatprep.mubr.bf16.mxu0 %v306
  %641 = vmatmul.mubr.bf16.gmra.mxu0 %v305
  %v642 = vpop.f32.mrf.mxu0
  %v643 = vadd.f32 0.0, %v642
  %v644 = vpop.f32.mrf.mxu0
  %v645 = vpop.f32.mrf.mxu0
  %v646 = vadd.f32 0.0, %v645
  %v647 = vpop.f32.mrf.mxu0
  %648 = vmatprep.mubr.bf16.mxu0 %v309
  %649 = vmatmul.mubr.bf16.gmra.mxu0 %v308
  %v650 = vpop.f32.mrf.mxu0
  %v651 = vadd.f32 0.0, %v650
  %v652 = vpop.f32.mrf.mxu0
  %v653 = vpop.f32.mrf.mxu0
  %v654 = vadd.f32 0.0, %v653
  %v655 = vpop.f32.mrf.mxu0
  %656 = vmatprep.mubr.bf16.mxu0 %v312
  %657 = vmatmul.mubr.bf16.gmra.mxu0 %v311
  %v658 = vpop.f32.mrf.mxu0
  %v659 = vadd.f32 0.0, %v658
  %v660 = vpop.f32.mrf.mxu0
  %v661 = vpop.f32.mrf.mxu0
  %v662 = vadd.f32 0.0, %v661
  %v663 = vpop.f32.mrf.mxu0
  %664 = vmatprep.mubr.bf16.mxu0 %v315
  %665 = vmatmul.mubr.bf16.gmra.mxu0 %v314
  %v666 = vpop.f32.mrf.mxu0
  %v667 = vadd.f32 0.0, %v666
  %v668 = vpop.f32.mrf.mxu0
  %v669 = vpop.f32.mrf.mxu0
  %v670 = vadd.f32 0.0, %v669
  %v671 = vpop.f32.mrf.mxu0
  %672 = vmatprep.mubr.bf16.mxu0 %v318
  %673 = vmatmul.mubr.bf16.gmra.mxu0 %v317
  %v674 = vpop.f32.mrf.mxu0
  %v675 = vadd.f32 0.0, %v674
  %v676 = vpop.f32.mrf.mxu0
  %v677 = vpop.f32.mrf.mxu0
  %v678 = vadd.f32 0.0, %v677
  %v679 = vpop.f32.mrf.mxu0
  %680 = vmatprep.mubr.bf16.mxu0 %v321
  %681 = vmatmul.mubr.bf16.gmra.mxu0 %v320
  %v682 = vpop.f32.mrf.mxu0
  %v683 = vadd.f32 0.0, %v682
  %v684 = vpop.f32.mrf.mxu0
  %v685 = vpop.f32.mrf.mxu0
  %v686 = vadd.f32 0.0, %v685
  %v687 = vpop.f32.mrf.mxu0
  %688 = vmatprep.mubr.bf16.mxu0 %v324
  %689 = vmatmul.mubr.bf16.gmra.mxu0 %v323
  %v690 = vpop.f32.mrf.mxu0
  %v691 = vadd.f32 0.0, %v690
  %v692 = vpop.f32.mrf.mxu0
  %v693 = vpop.f32.mrf.mxu0
  %v694 = vadd.f32 0.0, %v693
  %v695 = vpop.f32.mrf.mxu0
  %696 = vmatprep.mubr.bf16.mxu0 %v327
  %697 = vmatmul.mubr.bf16.gmra.mxu0 %v326
  %v698 = vpop.f32.mrf.mxu0
  %v699 = vadd.f32 0.0, %v698
  %v700 = vpop.f32.mrf.mxu0
  %v701 = vpop.f32.mrf.mxu0
  %v702 = vadd.f32 0.0, %v701
  %v703 = vpop.f32.mrf.mxu0
  %704 = vmatprep.mubr.bf16.mxu0 %v330
  %705 = vmatmul.mubr.bf16.gmra.mxu0 %v329
  %v706 = vpop.f32.mrf.mxu0
  %v707 = vadd.f32 0.0, %v706
  %v708 = vpop.f32.mrf.mxu0
  %v709 = vpop.f32.mrf.mxu0
  %v710 = vadd.f32 0.0, %v709
  %v711 = vpop.f32.mrf.mxu0
  %712 = vdwg.mxu0
  %713 = vmatprep.subr.bf16.mxu0 0
  %714 = vmatpush1.bf16.msra.mxu0 0
  %715 = vmatprep.subr.bf16.mxu0 0
  %716 = vmatpush1.bf16.msra.mxu0 %v550
  %717 = vmatprep.subr.bf16.mxu0 0
  %718 = vmatpush1.bf16.msra.mxu0 %v475
  %719 = vmatprep.subr.bf16.mxu0 0
  %720 = vmatpush1.bf16.msra.mxu0 %v474
  %721 = vmatprep.subr.bf16.mxu0 0
  %722 = vmatpush1.bf16.msra.mxu0 %v473
  %723 = vmatprep.subr.bf16.mxu0 0
  %724 = vmatpush1.bf16.msra.mxu0 %v472
  %725 = vmatprep.subr.bf16.mxu0 0
  %726 = vmatpush1.bf16.msra.mxu0 %v471
  %727 = vmatprep.subr.bf16.mxu0 0
  %728 = vmatpush1.bf16.msra.mxu0 %v470
  %729 = vmatprep.subr.bf16.mxu0 0
  %730 = vmatpush2.bf16.msra.mxu0 0
  %731 = vmatprep.subr.bf16.mxu0 0
  %732 = vmatpush2.bf16.msra.mxu0 0
  %733 = vmatprep.subr.bf16.mxu0 0
  %734 = vmatpush2.bf16.msra.mxu0 0
  %735 = vmatprep.subr.bf16.mxu0 0
  %736 = vmatpush2.bf16.msra.mxu0 0
  %737 = vmatprep.subr.bf16.mxu0 0
  %738 = vmatpush2.bf16.msra.mxu0 0
  %739 = vmatprep.subr.bf16.mxu0 0
  %740 = vmatpush2.bf16.msra.mxu0 0
  %741 = vmatprep.subr.bf16.mxu0 0
  %742 = vmatpush2.bf16.msra.mxu0 0
  %743 = vmatprep.subr.bf16.mxu0 0
  %744 = vmatpush2.bf16.msra.mxu0 0
  %745 = vmatprep.mubr.bf16.mxu0 0
  %746 = vmatmul.mubr.bf16.gmra.mxu0 %v501
  %v747 = vpop.f32.mrf.mxu0
  %v748 = vadd.f32 %v587, %v747
  %v749 = vpop.f32.mrf.mxu0
  %v750 = vpop.f32.mrf.mxu0
  %v751 = vadd.f32 %v590, %v750
  %v752 = vpop.f32.mrf.mxu0
  %753 = vmatprep.mubr.bf16.mxu0 0
  %754 = vmatmul.mubr.bf16.gmra.mxu0 %v504
  %v755 = vpop.f32.mrf.mxu0
  %v756 = vadd.f32 %v595, %v755
  %v757 = vpop.f32.mrf.mxu0
  %v758 = vpop.f32.mrf.mxu0
  %v759 = vadd.f32 %v598, %v758
  %v760 = vpop.f32.mrf.mxu0
  %761 = vmatprep.mubr.bf16.mxu0 0
  %762 = vmatmul.mubr.bf16.gmra.mxu0 %v507
  %v763 = vpop.f32.mrf.mxu0
  %v764 = vadd.f32 %v603, %v763
  %v765 = vpop.f32.mrf.mxu0
  %v766 = vpop.f32.mrf.mxu0
  %v767 = vadd.f32 %v606, %v766
  %v768 = vpop.f32.mrf.mxu0
  %769 = vmatprep.mubr.bf16.mxu0 0
  %770 = vmatmul.mubr.bf16.gmra.mxu0 %v510
  %v771 = vpop.f32.mrf.mxu0
  %v772 = vadd.f32 %v611, %v771
  %v773 = vpop.f32.mrf.mxu0
  %v774 = vpop.f32.mrf.mxu0
  %v775 = vadd.f32 %v614, %v774
  %v776 = vpop.f32.mrf.mxu0
  %777 = vmatprep.mubr.bf16.mxu0 0
  %778 = vmatmul.mubr.bf16.gmra.mxu0 %v513
  %v779 = vpop.f32.mrf.mxu0
  %v780 = vadd.f32 %v619, %v779
  %v781 = vpop.f32.mrf.mxu0
  %v782 = vpop.f32.mrf.mxu0
  %v783 = vadd.f32 %v622, %v782
  %v784 = vpop.f32.mrf.mxu0
  %785 = vmatprep.mubr.bf16.mxu0 0
  %786 = vmatmul.mubr.bf16.gmra.mxu0 %v516
  %v787 = vpop.f32.mrf.mxu0
  %v788 = vadd.f32 %v627, %v787
  %v789 = vpop.f32.mrf.mxu0
  %v790 = vpop.f32.mrf.mxu0
  %v791 = vadd.f32 %v630, %v790
  %v792 = vpop.f32.mrf.mxu0
  %793 = vmatprep.mubr.bf16.mxu0 0
  %794 = vmatmul.mubr.bf16.gmra.mxu0 %v519
  %v795 = vpop.f32.mrf.mxu0
  %v796 = vadd.f32 %v635, %v795
  %v797 = vpop.f32.mrf.mxu0
  %v798 = vpop.f32.mrf.mxu0
  %v799 = vadd.f32 %v638, %v798
  %v800 = vpop.f32.mrf.mxu0
  %801 = vmatprep.mubr.bf16.mxu0 0
  %802 = vmatmul.mubr.bf16.gmra.mxu0 %v522
  %v803 = vpop.f32.mrf.mxu0
  %v804 = vadd.f32 %v643, %v803
  %v805 = vpop.f32.mrf.mxu0
  %v806 = vpop.f32.mrf.mxu0
  %v807 = vadd.f32 %v646, %v806
  %v808 = vpop.f32.mrf.mxu0
  %809 = vmatprep.mubr.bf16.mxu0 0
  %810 = vmatmul.mubr.bf16.gmra.mxu0 %v525
  %v811 = vpop.f32.mrf.mxu0
  %v812 = vadd.f32 %v651, %v811
  %v813 = vpop.f32.mrf.mxu0
  %v814 = vpop.f32.mrf.mxu0
  %v815 = vadd.f32 %v654, %v814
  %v816 = vpop.f32.mrf.mxu0
  %817 = vmatprep.mubr.bf16.mxu0 0
  %818 = vmatmul.mubr.bf16.gmra.mxu0 %v528
  %v819 = vpop.f32.mrf.mxu0
  %v820 = vadd.f32 %v659, %v819
  %v821 = vpop.f32.mrf.mxu0
  %v822 = vpop.f32.mrf.mxu0
  %v823 = vadd.f32 %v662, %v822
  %v824 = vpop.f32.mrf.mxu0
  %825 = vmatprep.mubr.bf16.mxu0 0
  %826 = vmatmul.mubr.bf16.gmra.mxu0 %v531
  %v827 = vpop.f32.mrf.mxu0
  %v828 = vadd.f32 %v667, %v827
  %v829 = vpop.f32.mrf.mxu0
  %v830 = vpop.f32.mrf.mxu0
  %v831 = vadd.f32 %v670, %v830
  %v832 = vpop.f32.mrf.mxu0
  %833 = vmatprep.mubr.bf16.mxu0 0
  %834 = vmatmul.mubr.bf16.gmra.mxu0 %v534
  %v835 = vpop.f32.mrf.mxu0
  %v836 = vadd.f32 %v675, %v835
  %v837 = vpop.f32.mrf.mxu0
  %v838 = vpop.f32.mrf.mxu0
  %v839 = vadd.f32 %v678, %v838
  %v840 = vpop.f32.mrf.mxu0
  %841 = vmatprep.mubr.bf16.mxu0 0
  %842 = vmatmul.mubr.bf16.gmra.mxu0 %v537
  %v843 = vpop.f32.mrf.mxu0
  %v844 = vadd.f32 %v683, %v843
  %v845 = vpop.f32.mrf.mxu0
  %v846 = vpop.f32.mrf.mxu0
  %v847 = vadd.f32 %v686, %v846
  %v848 = vpop.f32.mrf.mxu0
  %849 = vmatprep.mubr.bf16.mxu0 0
  %850 = vmatmul.mubr.bf16.gmra.mxu0 %v540
  %v851 = vpop.f32.mrf.mxu0
  %v852 = vadd.f32 %v691, %v851
  %v853 = vpop.f32.mrf.mxu0
  %v854 = vpop.f32.mrf.mxu0
  %v855 = vadd.f32 %v694, %v854
  %v856 = vpop.f32.mrf.mxu0
  %857 = vmatprep.mubr.bf16.mxu0 0
  %858 = vmatmul.mubr.bf16.gmra.mxu0 %v543
  %v859 = vpop.f32.mrf.mxu0
  %v860 = vadd.f32 %v699, %v859
  %v861 = vpop.f32.mrf.mxu0
  %v862 = vpop.f32.mrf.mxu0
  %v863 = vadd.f32 %v702, %v862
  %v864 = vpop.f32.mrf.mxu0
  %865 = vmatprep.mubr.bf16.mxu0 0
  %866 = vmatmul.mubr.bf16.gmra.mxu0 %v546
  %v867 = vpop.f32.mrf.mxu0
  %v868 = vadd.f32 %v707, %v867
  %v869 = vpop.f32.mrf.mxu0
  %v870 = vpop.f32.mrf.mxu0
  %v871 = vadd.f32 %v710, %v870
  %v872 = vpop.f32.mrf.mxu0
  %873 = vdwg.mxu0
  %v874 = vmax.f32 %v748, %v780
  %v875 = vmax.f32 %v751, %v783
  %v876 = vmax.f32 %v756, %v788
  %v877 = vmax.f32 %v759, %v791
  %v878 = vmax.f32 %v764, %v796
  %v879 = vmax.f32 %v767, %v799
  %v880 = vmax.f32 %v772, %v804
  %v881 = vmax.f32 %v775, %v807
  %v882 = vmax.f32 %v812, %v844
  %v883 = vmax.f32 %v815, %v847
  %v884 = vmax.f32 %v820, %v852
  %v885 = vmax.f32 %v823, %v855
  %v886 = vmax.f32 %v828, %v860
  %v887 = vmax.f32 %v831, %v863
  %v888 = vmax.f32 %v836, %v868
  %v889 = vmax.f32 %v839, %v871
  %v890 = vmax.f32 %v874, %v882
  %v891 = vmax.f32 %v875, %v883
  %v892 = vmax.f32 %v876, %v884
  %v893 = vmax.f32 %v877, %v885
  %v894 = vmax.f32 %v878, %v886
  %v895 = vmax.f32 %v879, %v887
  %v896 = vmax.f32 %v880, %v888
  %v897 = vmax.f32 %v881, %v889
  %v898 = vld [vmem:[%s2] sm:$0x1]
  %v900 = vlaneseq
  %v901 = vshrl.u32 %v900, 7
  %v902 = vsub.s32 0, %v901
  %v903 = vrot.slane %v898, %v902
  %v905 = vadd.f32 %v890, %v903
  %v906 = vadd.f32 %v891, %v903
  %v907 = vadd.f32 %v892, %v903
  %v908 = vadd.f32 %v893, %v903
  %v909 = vadd.f32 %v894, %v903
  %v910 = vadd.f32 %v895, %v903
  %v911 = vadd.f32 %v896, %v903
  %v912 = vadd.f32 %v897, %v903
  %v913 = vmax.f32 %v905, 0.0
  %v914 = vmax.f32 %v906, 0.0
  %v915 = vmax.f32 %v907, 0.0
  %v916 = vmax.f32 %v908, 0.0
  %v917 = vmax.f32 %v909, 0.0
  %v918 = vmax.f32 %v910, 0.0
  %v919 = vmax.f32 %v911, 0.0
  %v920 = vmax.f32 %v912, 0.0
  %v921 = vpack.c.bf16 %v914, %v913
  %v922 = vpack.c.bf16 %v916, %v915
  %v923 = vpack.c.bf16 %v918, %v917
  %v924 = vpack.c.bf16 %v920, %v919
  %v929 = vunpack.c.l.b16 %v921
  %v930 = vunpack.c.h.b16 %v921
  %v931 = vunpack.c.l.b16 %v922
  %v932 = vunpack.c.h.b16 %v922
  %v933 = vunpack.c.l.b16 %v923
  %v934 = vunpack.c.h.b16 %v923
  %v935 = vunpack.c.l.b16 %v924
  %v936 = vunpack.c.h.b16 %v924
  %v937 = vpack.c.b16 %v929, %v929
  %v938 = vpack.c.b16 %v930, %v930
  %v939 = vpack.c.b16 %v931, %v931
  %v940 = vpack.c.b16 %v932, %v932
  %v941 = vpack.c.b16 %v933, %v933
  %v942 = vpack.c.b16 %v934, %v934
  %v943 = vpack.c.b16 %v935, %v935
  %v944 = vpack.c.b16 %v936, %v936
  %953 = vst [vmem:[%s3] sm:$0xf] %v937
  %954 = vst [vmem:[%s3 + $0x4] sm:$0xf] %v938
  %955 = vst [vmem:[%s3 + $0x8] sm:$0xf] %v939
  %956 = vst [vmem:[%s3 + $0xc] sm:$0xf] %v940
  %957 = vst [vmem:[%s3 + $0x10] sm:$0xf] %v941
  %958 = vst [vmem:[%s3 + $0x14] sm:$0xf] %v942
  %959 = vst [vmem:[%s3 + $0x18] sm:$0xf] %v943
  %960 = vst [vmem:[%s3 + $0x1c] sm:$0xf] %v944
  // Predicated region
  $region14: #{my_cnn_network_forward.6} parent=0 // pred_check
    _
  $region15: #{my_cnn_network_forward.6} parent=0 // pred_check_branch
    %962 = sbr.rel (0) target = $region17
  $region16: #{my_cnn_network_forward.6} parent=0 // pred_region
    _
  $region17: #{my_cnn_network_forward.6} parent=0 // pred_fallthru
    _
  // Predicated region
  $region18: #{my_cnn_network_forward.6} parent=0 // pred_check
    _
  $region19: #{my_cnn_network_forward.6} parent=0 // pred_check_branch
    %964 = sbr.rel (0) target = $region21
  $region20: #{my_cnn_network_forward.6} parent=0 // pred_region
    _
  $region21: #{my_cnn_network_forward.6} parent=0 // pred_fallthru
    _

</llo_original>
